<compile_context>
chip_gen: v7x
topology: tpu7x:2x2x1
jax: 0.10.0
libtpu: 0.0.40
codegen_flags: <defaults>
</compile_context>

<pallas_src>
import jax
import jax.numpy as jnp
from jax.experimental import pallas as pl
from jax.experimental.pallas import tpu as pltpu


# ----------------------------- model config ---------------------------------
B = 2          # batch
S = 8          # sequence length (context length)
W = 32         # transformer width
H = 4          # attention heads
L = 2          # transformer layers
E = 16         # text projection (embed) dim
LN_EPS = 1e-5
HEAD_DIM = W // H


def _layernorm(x, g, b, eps=LN_EPS):
    # E[x^2] - mu^2 form: the two cross-lane reductions are independent.
    mu = jnp.mean(x, axis=-1, keepdims=True)
    ex2 = jnp.mean(x * x, axis=-1, keepdims=True)
    var = ex2 - mu * mu
    return (x - mu) * jax.lax.rsqrt(var + eps) * g + b


# ----------------------- fully fused forward kernel --------------------------
def text_encoder_kernel(eot_ref, prompts_ref, pos_ref, mask_ref, hm_ref, bsum_ref,
                        ln1_g_ref, ln1_b_ref,
                        wq_ref, bq_ref, wk_ref, bk_ref, wv_ref, bv_ref,
                        wo_ref, bo_ref,
                        ln2_g_ref, ln2_b_ref,
                        wfc_ref, bfc_ref, wpr_ref, bpr_ref,
                        lnf_g_ref, lnf_b_ref, proj_ref,
                        o_ref):
    batch, seq, width = prompts_ref.shape
    hs = hm_ref.shape[0]                 # H * S
    num_heads = hs // seq
    num_layers = ln1_g_ref.shape[0]
    n = batch * seq

    # ---- constants / broadcasts hoisted out of the layer loop ----
    mask_b = jnp.broadcast_to(mask_ref[...], (batch, seq, hs))     # (B,S,HS) causal, tiled per head
    hm_b = jnp.broadcast_to(hm_ref[...], (batch, hs, width))       # (B,HS,W) head feature mask
    bsum = bsum_ref[...]                                           # (HS,HS) block-diag ones

    # positional embedding add (fused), then flatten batch*seq for the matmuls
    x = (prompts_ref[...].astype(jnp.float32)
         + pos_ref[...][None, :, :]).reshape(n, width)

    for l in range(num_layers):
        # ---- multi-head self-attention (pre-LN), all heads in batched dots ----
        h = _layernorm(x, ln1_g_ref[l], ln1_b_ref[l])
        # 1/sqrt(head_dim) is folded into wq / bq at init time.
        q = jnp.dot(h, wq_ref[l], preferred_element_type=jnp.float32) + bq_ref[l]
        k = jnp.dot(h, wk_ref[l], preferred_element_type=jnp.float32) + bk_ref[l]
        v = jnp.dot(h, wv_ref[l], preferred_element_type=jnp.float32) + bv_ref[l]

        q3 = q.reshape(batch, seq, width)
        k3 = k.reshape(batch, seq, width)
        v3 = v.reshape(batch, seq, width)

        # Head-expanded keys/values: row h*S + k holds key/value k restricted to
        # head h's feature lanes, so a single batched matmul produces every
        # head's scores side by side along the lane axis (no per-head loop,
        # no lane-offset slicing, no 4-D transposes).
        ke = jnp.concatenate([k3] * num_heads, axis=1) * hm_b      # (B,HS,W)
        ve = jnp.concatenate([v3] * num_heads, axis=1) * hm_b      # (B,HS,W)

        s = jnp.einsum('bqw,bmw->bqm', q3, ke,
                       preferred_element_type=jnp.float32) + mask_b  # (B,S,HS)
        # A per-row constant shift is valid for every head-block softmax.
        s = s - jnp.max(s, axis=-1, keepdims=True)
        p = jnp.exp(s).reshape(n, hs)
        # Per-head-block sums, broadcast back to every column via one 2-D dot.
        denom = jnp.dot(p, bsum, preferred_element_type=jnp.float32)  # (n,HS)
        p = (p / denom).reshape(batch, seq, hs)                       # exact division
        o = jnp.einsum('bqm,bmw->bqw', p, ve,
                       preferred_element_type=jnp.float32)            # (B,S,W)
        x = x + jnp.dot(o.reshape(n, width), wo_ref[l],
                        preferred_element_type=jnp.float32) + bo_ref[l]

        # ---- MLP (pre-LN, QuickGELU as in CLIP) ----
        h = _layernorm(x, ln2_g_ref[l], ln2_b_ref[l])
        hfc = jnp.dot(h, wfc_ref[l], preferred_element_type=jnp.float32) + bfc_ref[l]
        hfc = hfc * jax.nn.sigmoid(1.702 * hfc)
        x = x + jnp.dot(hfc, wpr_ref[l],
                        preferred_element_type=jnp.float32) + bpr_ref[l]

    # ---- EOT gather via one-hot select matmul (no scratch, no dynamic loads) ----
    eot = eot_ref[...]                                              # (B,1) int32
    rows = jax.lax.broadcasted_iota(jnp.int32, (batch, n), 0)
    cols = jax.lax.broadcasted_iota(jnp.int32, (batch, n), 1)
    sel = (cols == rows * seq + eot).astype(jnp.float32)            # (B,n) one-hot
    x_eot = jnp.dot(sel, x, preferred_element_type=jnp.float32)     # (B,W)

    hf = _layernorm(x_eot, lnf_g_ref[...], lnf_b_ref[...])
    o_ref[...] = jnp.dot(hf, proj_ref[...],
                         preferred_element_type=jnp.float32).astype(o_ref.dtype)


# ------------------------------ full forward ---------------------------------
def text_encoder_forward(prompts, tokenized_prompts, params):
    b, s, w = prompts.shape
    hd = w // H
    hs = H * s

    # tiny scalar glue: EOT position = argmax over token ids
    eot = jnp.argmax(tokenized_prompts, axis=-1).astype(jnp.int32).reshape(b, 1)

    # architecture constants (constant-folded under jit)
    causal = jnp.triu(jnp.full((s, s), -1e9, jnp.float32), k=1)
    mask_tiled = jnp.tile(causal, (1, H))                                   # (S, H*S)
    head_of_row = jnp.arange(hs, dtype=jnp.int32) // s                      # (HS,)
    head_of_col = jnp.arange(w, dtype=jnp.int32) // hd                      # (W,)
    headmask = (head_of_row[:, None] == head_of_col[None, :]).astype(jnp.float32)  # (HS, W)
    blocksum = (head_of_row[:, None] == head_of_row[None, :]).astype(jnp.float32)  # (HS, HS)

    n_inputs = 25
    in_specs = [pl.BlockSpec(memory_space=pltpu.MemorySpace.VMEM)] * n_inputs

    return pl.pallas_call(
        text_encoder_kernel,
        out_shape=jax.ShapeDtypeStruct((b, E), jnp.float32),
        in_specs=in_specs,
        out_specs=pl.BlockSpec(memory_space=pltpu.MemorySpace.VMEM),
    )(eot, prompts, params["pos_emb"], mask_tiled, headmask, blocksum,
      params["ln1_g"], params["ln1_b"],
      params["wq_t"], params["bq"], params["wk_t"], params["bk"],
      params["wv_t"], params["bv"], params["wo_t"], params["bo"],
      params["ln2_g"], params["ln2_b"],
      params["wfc_t"], params["bfc"], params["wpr_t"], params["bpr"],
      params["lnf_g"], params["lnf_b"], params["text_proj"])


# ------------------------- pure-JAX reference ---------------------------------
def text_encoder_reference(prompts, tokenized_prompts, params):
    def ln(x, g, b):
        mu = x.mean(-1, keepdims=True)
        var = ((x - mu) ** 2).mean(-1, keepdims=True)
        return (x - mu) * jax.lax.rsqrt(var + LN_EPS) * g + b

    b_sz, s_len, w = prompts.shape
    mask = jnp.triu(jnp.full((s_len, s_len), -1e9, jnp.float32), k=1)
    x = prompts + params["pos_emb"][None]
    for l in range(L):
        h = ln(x, params["ln1_g"][l], params["ln1_b"][l])
        q = h @ params["wq_t"][l] + params["bq"][l]     # scale already folded
        k = h @ params["wk_t"][l] + params["bk"][l]
        v = h @ params["wv_t"][l] + params["bv"][l]
        q = q.reshape(b_sz, s_len, H, HEAD_DIM).transpose(0, 2, 1, 3)
        k = k.reshape(b_sz, s_len, H, HEAD_DIM).transpose(0, 2, 1, 3)
        v = v.reshape(b_sz, s_len, H, HEAD_DIM).transpose(0, 2, 1, 3)
        sc = jnp.einsum('bhqd,bhkd->bhqk', q, k) + mask[None, None]
        p = jax.nn.softmax(sc, axis=-1)
        o = jnp.einsum('bhqk,bhkd->bhqd', p, v).transpose(0, 2, 1, 3).reshape(b_sz, s_len, w)
        x = x + o @ params["wo_t"][l] + params["bo"][l]
        h = ln(x, params["ln2_g"][l], params["ln2_b"][l])
        hfc = h @ params["wfc_t"][l] + params["bfc"][l]
        hfc = hfc * jax.nn.sigmoid(1.702 * hfc)
        x = x + hfc @ params["wpr_t"][l] + params["bpr"][l]
    eot = jnp.argmax(tokenized_prompts, axis=-1)
    x_eot = x[jnp.arange(b_sz), eot]
    return ln(x_eot, params["lnf_g"], params["lnf_b"]) @ params["text_proj"]


# --------------------------- parameter creation -------------------------------
def init_params(key):
    def nrm(k, shape, std=0.02):
        return std * jax.random.normal(k, shape, dtype=jnp.float32)

    keys = jax.random.split(key, 2 + 12 * L)
    scale = HEAD_DIM ** -0.5   # folded into the q projection (weight AND bias)

    wq_t, wk_t, wv_t, bq, bk, bv = [], [], [], [], [], []
    wo_t, bo, wfc_t, bfc, wpr_t, bpr = [], [], [], [], [], []
    for l in range(L):
        ks = keys[2 + 12 * l: 2 + 12 * (l + 1)]
        wq_t.append(nrm(ks[0], (W, W)) * scale)
        wk_t.append(nrm(ks[1], (W, W)))
        wv_t.append(nrm(ks[2], (W, W)))
        bq.append(nrm(ks[3], (1, W), 0.01) * scale)
        bk.append(nrm(ks[4], (1, W), 0.01))
        bv.append(nrm(ks[5], (1, W), 0.01))
        wo_t.append(nrm(ks[6], (W, W)))
        bo.append(nrm(ks[7], (1, W), 0.01))
        wfc_t.append(nrm(ks[8], (W, 4 * W)))
        bfc.append(nrm(ks[9], (1, 4 * W), 0.01))
        wpr_t.append(nrm(ks[10], (4 * W, W)))
        bpr.append(nrm(ks[11], (1, W), 0.01))

    return {
        "pos_emb": nrm(keys[0], (S, W), 0.01),
        "text_proj": nrm(keys[1], (W, E), W ** -0.5),
        "lnf_g": jnp.ones((1, W), jnp.float32),
        "lnf_b": jnp.zeros((1, W), jnp.float32),
        "ln1_g": jnp.ones((L, 1, W), jnp.float32),
        "ln1_b": jnp.zeros((L, 1, W), jnp.float32),
        "ln2_g": jnp.ones((L, 1, W), jnp.float32),
        "ln2_b": jnp.zeros((L, 1, W), jnp.float32),
        "wq_t": jnp.stack(wq_t), "bq": jnp.stack(bq),
        "wk_t": jnp.stack(wk_t), "bk": jnp.stack(bk),
        "wv_t": jnp.stack(wv_t), "bv": jnp.stack(bv),
        "wo_t": jnp.stack(wo_t), "bo": jnp.stack(bo),
        "wfc_t": jnp.stack(wfc_t), "bfc": jnp.stack(bfc),
        "wpr_t": jnp.stack(wpr_t), "bpr": jnp.stack(bpr),
    }


if __name__ == "__main__":
    key = jax.random.PRNGKey(0)
    kp, kx, kt = jax.random.split(key, 3)

    params = init_params(kp)
    prompts = 0.02 * jax.random.normal(kx, (B, S, W), dtype=jnp.float32)
    tokenized_prompts = jax.random.randint(kt, (B, S), 1, 1000, dtype=jnp.int32)

    out = jax.jit(text_encoder_forward)(prompts, tokenized_prompts, params)
    out = jax.block_until_ready(out)

    assert out.shape == (B, E) and out.dtype == jnp.float32
    assert bool(jnp.all(jnp.isfinite(out)))

    ref = text_encoder_reference(prompts, tokenized_prompts, params)
    assert bool(jnp.allclose(out, ref, rtol=1e-3, atol=1e-3)), (
        f"max abs err {float(jnp.max(jnp.abs(out - ref)))}")

    print("KERNEL_OK")
</pallas_src>

<mosaic_0001>
module attributes {stable_mosaic.version = 11 : i64} {
  func.func @text_encoder_kernel(%arg0: memref<2x1xi32, #tpu.memory_space<vmem>>, %arg1: memref<2x8x32xf32, #tpu.memory_space<vmem>>, %arg2: memref<8x32xf32, #tpu.memory_space<vmem>>, %arg3: memref<8x32xf32, #tpu.memory_space<vmem>>, %arg4: memref<32x32xf32, #tpu.memory_space<vmem>>, %arg5: memref<32x32xf32, #tpu.memory_space<vmem>>, %arg6: memref<2x1x32xf32, #tpu.memory_space<vmem>>, %arg7: memref<2x1x32xf32, #tpu.memory_space<vmem>>, %arg8: memref<2x32x32xf32, #tpu.memory_space<vmem>>, %arg9: memref<2x1x32xf32, #tpu.memory_space<vmem>>, %arg10: memref<2x32x32xf32, #tpu.memory_space<vmem>>, %arg11: memref<2x1x32xf32, #tpu.memory_space<vmem>>, %arg12: memref<2x32x32xf32, #tpu.memory_space<vmem>>, %arg13: memref<2x1x32xf32, #tpu.memory_space<vmem>>, %arg14: memref<2x32x32xf32, #tpu.memory_space<vmem>>, %arg15: memref<2x1x32xf32, #tpu.memory_space<vmem>>, %arg16: memref<2x1x32xf32, #tpu.memory_space<vmem>>, %arg17: memref<2x1x32xf32, #tpu.memory_space<vmem>>, %arg18: memref<2x32x128xf32, #tpu.memory_space<vmem>>, %arg19: memref<2x1x128xf32, #tpu.memory_space<vmem>>, %arg20: memref<2x128x32xf32, #tpu.memory_space<vmem>>, %arg21: memref<2x1x32xf32, #tpu.memory_space<vmem>>, %arg22: memref<1x32xf32, #tpu.memory_space<vmem>>, %arg23: memref<1x32xf32, #tpu.memory_space<vmem>>, %arg24: memref<32x16xf32, #tpu.memory_space<vmem>>, %arg25: memref<2x16xf32, #tpu.memory_space<vmem>>) attributes {dimension_semantics = [], scalar_prefetch = 0 : i64, scratch_operands = 0 : i64, tpu.core_type = #tpu.core_type<tc>} {
    %c0 = arith.constant 0 : index
    %c0_0 = arith.constant 0 : index
    %0 = vector.load %arg3[%c0, %c0_0] : memref<8x32xf32, #tpu.memory_space<vmem>>, vector<8x32xf32>
    %1 = vector.shape_cast %0 : vector<8x32xf32> to vector<1x8x32xf32>
    %2 = vector.broadcast %1 : vector<1x8x32xf32> to vector<2x8x32xf32>
    %c0_1 = arith.constant 0 : index
    %c0_2 = arith.constant 0 : index
    %3 = vector.load %arg4[%c0_1, %c0_2] : memref<32x32xf32, #tpu.memory_space<vmem>>, vector<32x32xf32>
    %4 = vector.shape_cast %3 : vector<32x32xf32> to vector<1x32x32xf32>
    %5 = vector.broadcast %4 : vector<1x32x32xf32> to vector<2x32x32xf32>
    %c0_3 = arith.constant 0 : index
    %c0_4 = arith.constant 0 : index
    %6 = vector.load %arg5[%c0_3, %c0_4] : memref<32x32xf32, #tpu.memory_space<vmem>>, vector<32x32xf32>
    %c0_5 = arith.constant 0 : index
    %c0_6 = arith.constant 0 : index
    %c0_7 = arith.constant 0 : index
    %7 = vector.load %arg1[%c0_5, %c0_6, %c0_7] : memref<2x8x32xf32, #tpu.memory_space<vmem>>, vector<2x8x32xf32>
    %c0_8 = arith.constant 0 : index
    %c0_9 = arith.constant 0 : index
    %8 = vector.load %arg2[%c0_8, %c0_9] : memref<8x32xf32, #tpu.memory_space<vmem>>, vector<8x32xf32>
    %9 = vector.shape_cast %8 : vector<8x32xf32> to vector<1x8x32xf32>
    %10 = vector.broadcast %9 : vector<1x8x32xf32> to vector<2x8x32xf32>
    %11 = arith.addf %7, %10 : vector<2x8x32xf32>
    %12 = vector.shape_cast %11 : vector<2x8x32xf32> to vector<16x32xf32>
    %c0_10 = arith.constant 0 : index
    %c0_11 = arith.constant 0 : index
    %c0_12 = arith.constant 0 : index
    %13 = vector.load %arg6[%c0_10, %c0_11, %c0_12] : memref<2x1x32xf32, #tpu.memory_space<vmem>>, vector<1x1x32xf32>
    %14 = vector.shape_cast %13 : vector<1x1x32xf32> to vector<1x32xf32>
    %c0_13 = arith.constant 0 : index
    %c0_14 = arith.constant 0 : index
    %c0_15 = arith.constant 0 : index
    %15 = vector.load %arg7[%c0_13, %c0_14, %c0_15] : memref<2x1x32xf32, #tpu.memory_space<vmem>>, vector<1x1x32xf32>
    %16 = vector.shape_cast %15 : vector<1x1x32xf32> to vector<1x32xf32>
    %cst = arith.constant dense<0.000000e+00> : vector<16xf32>
    %17 = vector.multi_reduction <add>, %12, %cst [1] : vector<16x32xf32> to vector<16xf32>
    %18 = vector.shape_cast %17 : vector<16xf32> to vector<16x1xf32>
    %cst_16 = arith.constant 3.200000e+01 : f32
    %19 = vector.broadcast %cst_16 : f32 to vector<16x1xf32>
    %20 = arith.divf %18, %19 : vector<16x1xf32>
    %21 = arith.mulf %12, %12 : vector<16x32xf32>
    %cst_17 = arith.constant dense<0.000000e+00> : vector<16xf32>
    %22 = vector.multi_reduction <add>, %21, %cst_17 [1] : vector<16x32xf32> to vector<16xf32>
    %23 = vector.shape_cast %22 : vector<16xf32> to vector<16x1xf32>
    %cst_18 = arith.constant 3.200000e+01 : f32
    %24 = vector.broadcast %cst_18 : f32 to vector<16x1xf32>
    %25 = arith.divf %23, %24 : vector<16x1xf32>
    %26 = arith.mulf %20, %20 : vector<16x1xf32>
    %27 = arith.subf %25, %26 : vector<16x1xf32>
    %28 = vector.broadcast %20 : vector<16x1xf32> to vector<16x32xf32>
    %29 = arith.subf %12, %28 : vector<16x32xf32>
    %cst_19 = arith.constant 9.99999974E-6 : f32
    %30 = vector.broadcast %cst_19 : f32 to vector<16x1xf32>
    %31 = arith.addf %27, %30 : vector<16x1xf32>
    %32 = math.rsqrt %31 : vector<16x1xf32>
    %33 = vector.broadcast %32 : vector<16x1xf32> to vector<16x32xf32>
    %34 = arith.mulf %29, %33 : vector<16x32xf32>
    %35 = vector.broadcast %14 : vector<1x32xf32> to vector<16x32xf32>
    %36 = arith.mulf %34, %35 : vector<16x32xf32>
    %37 = vector.broadcast %16 : vector<1x32xf32> to vector<16x32xf32>
    %38 = arith.addf %36, %37 : vector<16x32xf32>
    %c0_20 = arith.constant 0 : index
    %c0_21 = arith.constant 0 : index
    %c0_22 = arith.constant 0 : index
    %39 = vector.load %arg8[%c0_20, %c0_21, %c0_22] : memref<2x32x32xf32, #tpu.memory_space<vmem>>, vector<1x32x32xf32>
    %40 = vector.shape_cast %39 : vector<1x32x32xf32> to vector<32x32xf32>
    %cst_23 = arith.constant dense<0.000000e+00> : vector<16x32xf32>
    %41 = tpu.matmul %38, %40, %cst_23 {dimension_numbers = #tpu.dot_dimension_numbers<[1], [0], [0], [1], [0, 0, 1, 1], [], []>} : vector<16x32xf32>, vector<32x32xf32>, vector<16x32xf32> -> vector<16x32xf32>
    %c0_24 = arith.constant 0 : index
    %c0_25 = arith.constant 0 : index
    %c0_26 = arith.constant 0 : index
    %42 = vector.load %arg9[%c0_24, %c0_25, %c0_26] : memref<2x1x32xf32, #tpu.memory_space<vmem>>, vector<1x1x32xf32>
    %43 = vector.shape_cast %42 : vector<1x1x32xf32> to vector<1x32xf32>
    %44 = vector.broadcast %43 : vector<1x32xf32> to vector<16x32xf32>
    %45 = arith.addf %41, %44 : vector<16x32xf32>
    %c0_27 = arith.constant 0 : index
    %c0_28 = arith.constant 0 : index
    %c0_29 = arith.constant 0 : index
    %46 = vector.load %arg10[%c0_27, %c0_28, %c0_29] : memref<2x32x32xf32, #tpu.memory_space<vmem>>, vector<1x32x32xf32>
    %47 = vector.shape_cast %46 : vector<1x32x32xf32> to vector<32x32xf32>
    %cst_30 = arith.constant dense<0.000000e+00> : vector<16x32xf32>
    %48 = tpu.matmul %38, %47, %cst_30 {dimension_numbers = #tpu.dot_dimension_numbers<[1], [0], [0], [1], [0, 0, 1, 1], [], []>} : vector<16x32xf32>, vector<32x32xf32>, vector<16x32xf32> -> vector<16x32xf32>
    %c0_31 = arith.constant 0 : index
    %c0_32 = arith.constant 0 : index
    %c0_33 = arith.constant 0 : index
    %49 = vector.load %arg11[%c0_31, %c0_32, %c0_33] : memref<2x1x32xf32, #tpu.memory_space<vmem>>, vector<1x1x32xf32>
    %50 = vector.shape_cast %49 : vector<1x1x32xf32> to vector<1x32xf32>
    %51 = vector.broadcast %50 : vector<1x32xf32> to vector<16x32xf32>
    %52 = arith.addf %48, %51 : vector<16x32xf32>
    %c0_34 = arith.constant 0 : index
    %c0_35 = arith.constant 0 : index
    %c0_36 = arith.constant 0 : index
    %53 = vector.load %arg12[%c0_34, %c0_35, %c0_36] : memref<2x32x32xf32, #tpu.memory_space<vmem>>, vector<1x32x32xf32>
    %54 = vector.shape_cast %53 : vector<1x32x32xf32> to vector<32x32xf32>
    %cst_37 = arith.constant dense<0.000000e+00> : vector<16x32xf32>
    %55 = tpu.matmul %38, %54, %cst_37 {dimension_numbers = #tpu.dot_dimension_numbers<[1], [0], [0], [1], [0, 0, 1, 1], [], []>} : vector<16x32xf32>, vector<32x32xf32>, vector<16x32xf32> -> vector<16x32xf32>
    %c0_38 = arith.constant 0 : index
    %c0_39 = arith.constant 0 : index
    %c0_40 = arith.constant 0 : index
    %56 = vector.load %arg13[%c0_38, %c0_39, %c0_40] : memref<2x1x32xf32, #tpu.memory_space<vmem>>, vector<1x1x32xf32>
    %57 = vector.shape_cast %56 : vector<1x1x32xf32> to vector<1x32xf32>
    %58 = vector.broadcast %57 : vector<1x32xf32> to vector<16x32xf32>
    %59 = arith.addf %55, %58 : vector<16x32xf32>
    %60 = vector.shape_cast %45 : vector<16x32xf32> to vector<2x8x32xf32>
    %61 = vector.shape_cast %52 : vector<16x32xf32> to vector<2x8x32xf32>
    %62 = vector.shape_cast %59 : vector<16x32xf32> to vector<2x8x32xf32>
    %63 = tpu.concatenate %61, %61, %61, %61 in 1 : vector<2x8x32xf32>, vector<2x8x32xf32>, vector<2x8x32xf32>, vector<2x8x32xf32> -> vector<2x32x32xf32>
    %64 = arith.mulf %63, %5 : vector<2x32x32xf32>
    %65 = tpu.concatenate %62, %62, %62, %62 in 1 : vector<2x8x32xf32>, vector<2x8x32xf32>, vector<2x8x32xf32>, vector<2x8x32xf32> -> vector<2x32x32xf32>
    %66 = arith.mulf %65, %5 : vector<2x32x32xf32>
    "tpu.trace_start"() <{level = 10 : i32, message = "bqw,bmw->bqm"}> : () -> ()
    %cst_41 = arith.constant dense<0.000000e+00> : vector<2x8x32xf32>
    %67 = tpu.matmul %60, %64, %cst_41 {dimension_numbers = #tpu.dot_dimension_numbers<[2], [2], [1], [1], [0, 0, 0, 1, 1, 1], [0], [0]>} : vector<2x8x32xf32>, vector<2x32x32xf32>, vector<2x8x32xf32> -> vector<2x8x32xf32>
    "tpu.trace_stop"() : () -> ()
    %68 = arith.addf %67, %2 : vector<2x8x32xf32>
    %cst_42 = arith.constant dense<0xFF800000> : vector<2x8xf32>
    %69 = vector.multi_reduction <maximumf>, %68, %cst_42 [2] : vector<2x8x32xf32> to vector<2x8xf32>
    %70 = vector.shape_cast %69 : vector<2x8xf32> to vector<2x8x1xf32>
    %71 = vector.broadcast %70 : vector<2x8x1xf32> to vector<2x8x32xf32>
    %72 = arith.subf %68, %71 : vector<2x8x32xf32>
    %73 = math.exp %72 : vector<2x8x32xf32>
    %74 = vector.shape_cast %73 : vector<2x8x32xf32> to vector<16x32xf32>
    %cst_43 = arith.constant dense<0.000000e+00> : vector<16x32xf32>
    %75 = tpu.matmul %74, %6, %cst_43 {dimension_numbers = #tpu.dot_dimension_numbers<[1], [0], [0], [1], [0, 0, 1, 1], [], []>} : vector<16x32xf32>, vector<32x32xf32>, vector<16x32xf32> -> vector<16x32xf32>
    %76 = arith.divf %74, %75 : vector<16x32xf32>
    %77 = vector.shape_cast %76 : vector<16x32xf32> to vector<2x8x32xf32>
    "tpu.trace_start"() <{level = 10 : i32, message = "bqm,bmw->bqw"}> : () -> ()
    %cst_44 = arith.constant dense<0.000000e+00> : vector<2x8x32xf32>
    %78 = tpu.matmul %77, %66, %cst_44 {dimension_numbers = #tpu.dot_dimension_numbers<[2], [1], [1], [2], [0, 0, 0, 1, 1, 2], [0], [0]>} : vector<2x8x32xf32>, vector<2x32x32xf32>, vector<2x8x32xf32> -> vector<2x8x32xf32>
    "tpu.trace_stop"() : () -> ()
    %79 = vector.shape_cast %78 : vector<2x8x32xf32> to vector<16x32xf32>
    %c0_45 = arith.constant 0 : index
    %c0_46 = arith.constant 0 : index
    %c0_47 = arith.constant 0 : index
    %80 = vector.load %arg14[%c0_45, %c0_46, %c0_47] : memref<2x32x32xf32, #tpu.memory_space<vmem>>, vector<1x32x32xf32>
    %81 = vector.shape_cast %80 : vector<1x32x32xf32> to vector<32x32xf32>
    %cst_48 = arith.constant dense<0.000000e+00> : vector<16x32xf32>
    %82 = tpu.matmul %79, %81, %cst_48 {dimension_numbers = #tpu.dot_dimension_numbers<[1], [0], [0], [1], [0, 0, 1, 1], [], []>} : vector<16x32xf32>, vector<32x32xf32>, vector<16x32xf32> -> vector<16x32xf32>
    %83 = arith.addf %12, %82 : vector<16x32xf32>
    %c0_49 = arith.constant 0 : index
    %c0_50 = arith.constant 0 : index
    %c0_51 = arith.constant 0 : index
    %84 = vector.load %arg15[%c0_49, %c0_50, %c0_51] : memref<2x1x32xf32, #tpu.memory_space<vmem>>, vector<1x1x32xf32>
    %85 = vector.shape_cast %84 : vector<1x1x32xf32> to vector<1x32xf32>
    %86 = vector.broadcast %85 : vector<1x32xf32> to vector<16x32xf32>
    %87 = arith.addf %83, %86 : vector<16x32xf32>
    %c0_52 = arith.constant 0 : index
    %c0_53 = arith.constant 0 : index
    %c0_54 = arith.constant 0 : index
    %88 = vector.load %arg16[%c0_52, %c0_53, %c0_54] : memref<2x1x32xf32, #tpu.memory_space<vmem>>, vector<1x1x32xf32>
    %89 = vector.shape_cast %88 : vector<1x1x32xf32> to vector<1x32xf32>
    %c0_55 = arith.constant 0 : index
    %c0_56 = arith.constant 0 : index
    %c0_57 = arith.constant 0 : index
    %90 = vector.load %arg17[%c0_55, %c0_56, %c0_57] : memref<2x1x32xf32, #tpu.memory_space<vmem>>, vector<1x1x32xf32>
    %91 = vector.shape_cast %90 : vector<1x1x32xf32> to vector<1x32xf32>
    %cst_58 = arith.constant dense<0.000000e+00> : vector<16xf32>
    %92 = vector.multi_reduction <add>, %87, %cst_58 [1] : vector<16x32xf32> to vector<16xf32>
    %93 = vector.shape_cast %92 : vector<16xf32> to vector<16x1xf32>
    %cst_59 = arith.constant 3.200000e+01 : f32
    %94 = vector.broadcast %cst_59 : f32 to vector<16x1xf32>
    %95 = arith.divf %93, %94 : vector<16x1xf32>
    %96 = arith.mulf %87, %87 : vector<16x32xf32>
    %cst_60 = arith.constant dense<0.000000e+00> : vector<16xf32>
    %97 = vector.multi_reduction <add>, %96, %cst_60 [1] : vector<16x32xf32> to vector<16xf32>
    %98 = vector.shape_cast %97 : vector<16xf32> to vector<16x1xf32>
    %cst_61 = arith.constant 3.200000e+01 : f32
    %99 = vector.broadcast %cst_61 : f32 to vector<16x1xf32>
    %100 = arith.divf %98, %99 : vector<16x1xf32>
    %101 = arith.mulf %95, %95 : vector<16x1xf32>
    %102 = arith.subf %100, %101 : vector<16x1xf32>
    %103 = vector.broadcast %95 : vector<16x1xf32> to vector<16x32xf32>
    %104 = arith.subf %87, %103 : vector<16x32xf32>
    %cst_62 = arith.constant 9.99999974E-6 : f32
    %105 = vector.broadcast %cst_62 : f32 to vector<16x1xf32>
    %106 = arith.addf %102, %105 : vector<16x1xf32>
    %107 = math.rsqrt %106 : vector<16x1xf32>
    %108 = vector.broadcast %107 : vector<16x1xf32> to vector<16x32xf32>
    %109 = arith.mulf %104, %108 : vector<16x32xf32>
    %110 = vector.broadcast %89 : vector<1x32xf32> to vector<16x32xf32>
    %111 = arith.mulf %109, %110 : vector<16x32xf32>
    %112 = vector.broadcast %91 : vector<1x32xf32> to vector<16x32xf32>
    %113 = arith.addf %111, %112 : vector<16x32xf32>
    %c0_63 = arith.constant 0 : index
    %c0_64 = arith.constant 0 : index
    %c0_65 = arith.constant 0 : index
    %114 = vector.load %arg18[%c0_63, %c0_64, %c0_65] : memref<2x32x128xf32, #tpu.memory_space<vmem>>, vector<1x32x128xf32>
    %115 = vector.shape_cast %114 : vector<1x32x128xf32> to vector<32x128xf32>
    %cst_66 = arith.constant dense<0.000000e+00> : vector<16x128xf32>
    %116 = tpu.matmul %113, %115, %cst_66 {dimension_numbers = #tpu.dot_dimension_numbers<[1], [0], [0], [1], [0, 0, 1, 1], [], []>} : vector<16x32xf32>, vector<32x128xf32>, vector<16x128xf32> -> vector<16x128xf32>
    %c0_67 = arith.constant 0 : index
    %c0_68 = arith.constant 0 : index
    %c0_69 = arith.constant 0 : index
    %117 = vector.load %arg19[%c0_67, %c0_68, %c0_69] : memref<2x1x128xf32, #tpu.memory_space<vmem>>, vector<1x1x128xf32>
    %118 = vector.shape_cast %117 : vector<1x1x128xf32> to vector<1x128xf32>
    %119 = vector.broadcast %118 : vector<1x128xf32> to vector<16x128xf32>
    %120 = arith.addf %116, %119 : vector<16x128xf32>
    %cst_70 = arith.constant 1.702000e+00 : f32
    %121 = vector.broadcast %cst_70 : f32 to vector<16x128xf32>
    %122 = arith.mulf %121, %120 : vector<16x128xf32>
    %123 = arith.negf %122 : vector<16x128xf32>
    %124 = math.exp %123 : vector<16x128xf32>
    %cst_71 = arith.constant 1.000000e+00 : f32
    %125 = vector.broadcast %cst_71 : f32 to vector<16x128xf32>
    %126 = arith.addf %125, %124 : vector<16x128xf32>
    %127 = arith.divf %125, %126 : vector<16x128xf32>
    %128 = arith.mulf %120, %127 : vector<16x128xf32>
    %c0_72 = arith.constant 0 : index
    %c0_73 = arith.constant 0 : index
    %c0_74 = arith.constant 0 : index
    %129 = vector.load %arg20[%c0_72, %c0_73, %c0_74] : memref<2x128x32xf32, #tpu.memory_space<vmem>>, vector<1x128x32xf32>
    %130 = vector.shape_cast %129 : vector<1x128x32xf32> to vector<128x32xf32>
    %cst_75 = arith.constant dense<0.000000e+00> : vector<16x32xf32>
    %131 = tpu.matmul %128, %130, %cst_75 {dimension_numbers = #tpu.dot_dimension_numbers<[1], [0], [0], [1], [0, 0, 1, 1], [], []>} : vector<16x128xf32>, vector<128x32xf32>, vector<16x32xf32> -> vector<16x32xf32>
    %132 = arith.addf %87, %131 : vector<16x32xf32>
    %c0_76 = arith.constant 0 : index
    %c0_77 = arith.constant 0 : index
    %c0_78 = arith.constant 0 : index
    %133 = vector.load %arg21[%c0_76, %c0_77, %c0_78] : memref<2x1x32xf32, #tpu.memory_space<vmem>>, vector<1x1x32xf32>
    %134 = vector.shape_cast %133 : vector<1x1x32xf32> to vector<1x32xf32>
    %135 = vector.broadcast %134 : vector<1x32xf32> to vector<16x32xf32>
    %136 = arith.addf %132, %135 : vector<16x32xf32>
    %c1 = arith.constant 1 : index
    %c0_79 = arith.constant 0 : index
    %c0_80 = arith.constant 0 : index
    %137 = vector.load %arg6[%c1, %c0_79, %c0_80] : memref<2x1x32xf32, #tpu.memory_space<vmem>>, vector<1x1x32xf32>
    %138 = vector.shape_cast %137 : vector<1x1x32xf32> to vector<1x32xf32>
    %c1_81 = arith.constant 1 : index
    %c0_82 = arith.constant 0 : index
    %c0_83 = arith.constant 0 : index
    %139 = vector.load %arg7[%c1_81, %c0_82, %c0_83] : memref<2x1x32xf32, #tpu.memory_space<vmem>>, vector<1x1x32xf32>
    %140 = vector.shape_cast %139 : vector<1x1x32xf32> to vector<1x32xf32>
    %cst_84 = arith.constant dense<0.000000e+00> : vector<16xf32>
    %141 = vector.multi_reduction <add>, %136, %cst_84 [1] : vector<16x32xf32> to vector<16xf32>
    %142 = vector.shape_cast %141 : vector<16xf32> to vector<16x1xf32>
    %cst_85 = arith.constant 3.200000e+01 : f32
    %143 = vector.broadcast %cst_85 : f32 to vector<16x1xf32>
    %144 = arith.divf %142, %143 : vector<16x1xf32>
    %145 = arith.mulf %136, %136 : vector<16x32xf32>
    %cst_86 = arith.constant dense<0.000000e+00> : vector<16xf32>
    %146 = vector.multi_reduction <add>, %145, %cst_86 [1] : vector<16x32xf32> to vector<16xf32>
    %147 = vector.shape_cast %146 : vector<16xf32> to vector<16x1xf32>
    %cst_87 = arith.constant 3.200000e+01 : f32
    %148 = vector.broadcast %cst_87 : f32 to vector<16x1xf32>
    %149 = arith.divf %147, %148 : vector<16x1xf32>
    %150 = arith.mulf %144, %144 : vector<16x1xf32>
    %151 = arith.subf %149, %150 : vector<16x1xf32>
    %152 = vector.broadcast %144 : vector<16x1xf32> to vector<16x32xf32>
    %153 = arith.subf %136, %152 : vector<16x32xf32>
    %cst_88 = arith.constant 9.99999974E-6 : f32
    %154 = vector.broadcast %cst_88 : f32 to vector<16x1xf32>
    %155 = arith.addf %151, %154 : vector<16x1xf32>
    %156 = math.rsqrt %155 : vector<16x1xf32>
    %157 = vector.broadcast %156 : vector<16x1xf32> to vector<16x32xf32>
    %158 = arith.mulf %153, %157 : vector<16x32xf32>
    %159 = vector.broadcast %138 : vector<1x32xf32> to vector<16x32xf32>
    %160 = arith.mulf %158, %159 : vector<16x32xf32>
    %161 = vector.broadcast %140 : vector<1x32xf32> to vector<16x32xf32>
    %162 = arith.addf %160, %161 : vector<16x32xf32>
    %c1_89 = arith.constant 1 : index
    %c0_90 = arith.constant 0 : index
    %c0_91 = arith.constant 0 : index
    %163 = vector.load %arg8[%c1_89, %c0_90, %c0_91] : memref<2x32x32xf32, #tpu.memory_space<vmem>>, vector<1x32x32xf32>
    %164 = vector.shape_cast %163 : vector<1x32x32xf32> to vector<32x32xf32>
    %cst_92 = arith.constant dense<0.000000e+00> : vector<16x32xf32>
    %165 = tpu.matmul %162, %164, %cst_92 {dimension_numbers = #tpu.dot_dimension_numbers<[1], [0], [0], [1], [0, 0, 1, 1], [], []>} : vector<16x32xf32>, vector<32x32xf32>, vector<16x32xf32> -> vector<16x32xf32>
    %c1_93 = arith.constant 1 : index
    %c0_94 = arith.constant 0 : index
    %c0_95 = arith.constant 0 : index
    %166 = vector.load %arg9[%c1_93, %c0_94, %c0_95] : memref<2x1x32xf32, #tpu.memory_space<vmem>>, vector<1x1x32xf32>
    %167 = vector.shape_cast %166 : vector<1x1x32xf32> to vector<1x32xf32>
    %168 = vector.broadcast %167 : vector<1x32xf32> to vector<16x32xf32>
    %169 = arith.addf %165, %168 : vector<16x32xf32>
    %c1_96 = arith.constant 1 : index
    %c0_97 = arith.constant 0 : index
    %c0_98 = arith.constant 0 : index
    %170 = vector.load %arg10[%c1_96, %c0_97, %c0_98] : memref<2x32x32xf32, #tpu.memory_space<vmem>>, vector<1x32x32xf32>
    %171 = vector.shape_cast %170 : vector<1x32x32xf32> to vector<32x32xf32>
    %cst_99 = arith.constant dense<0.000000e+00> : vector<16x32xf32>
    %172 = tpu.matmul %162, %171, %cst_99 {dimension_numbers = #tpu.dot_dimension_numbers<[1], [0], [0], [1], [0, 0, 1, 1], [], []>} : vector<16x32xf32>, vector<32x32xf32>, vector<16x32xf32> -> vector<16x32xf32>
    %c1_100 = arith.constant 1 : index
    %c0_101 = arith.constant 0 : index
    %c0_102 = arith.constant 0 : index
    %173 = vector.load %arg11[%c1_100, %c0_101, %c0_102] : memref<2x1x32xf32, #tpu.memory_space<vmem>>, vector<1x1x32xf32>
    %174 = vector.shape_cast %173 : vector<1x1x32xf32> to vector<1x32xf32>
    %175 = vector.broadcast %174 : vector<1x32xf32> to vector<16x32xf32>
    %176 = arith.addf %172, %175 : vector<16x32xf32>
    %c1_103 = arith.constant 1 : index
    %c0_104 = arith.constant 0 : index
    %c0_105 = arith.constant 0 : index
    %177 = vector.load %arg12[%c1_103, %c0_104, %c0_105] : memref<2x32x32xf32, #tpu.memory_space<vmem>>, vector<1x32x32xf32>
    %178 = vector.shape_cast %177 : vector<1x32x32xf32> to vector<32x32xf32>
    %cst_106 = arith.constant dense<0.000000e+00> : vector<16x32xf32>
    %179 = tpu.matmul %162, %178, %cst_106 {dimension_numbers = #tpu.dot_dimension_numbers<[1], [0], [0], [1], [0, 0, 1, 1], [], []>} : vector<16x32xf32>, vector<32x32xf32>, vector<16x32xf32> -> vector<16x32xf32>
    %c1_107 = arith.constant 1 : index
    %c0_108 = arith.constant 0 : index
    %c0_109 = arith.constant 0 : index
    %180 = vector.load %arg13[%c1_107, %c0_108, %c0_109] : memref<2x1x32xf32, #tpu.memory_space<vmem>>, vector<1x1x32xf32>
    %181 = vector.shape_cast %180 : vector<1x1x32xf32> to vector<1x32xf32>
    %182 = vector.broadcast %181 : vector<1x32xf32> to vector<16x32xf32>
    %183 = arith.addf %179, %182 : vector<16x32xf32>
    %184 = vector.shape_cast %169 : vector<16x32xf32> to vector<2x8x32xf32>
    %185 = vector.shape_cast %176 : vector<16x32xf32> to vector<2x8x32xf32>
    %186 = vector.shape_cast %183 : vector<16x32xf32> to vector<2x8x32xf32>
    %187 = tpu.concatenate %185, %185, %185, %185 in 1 : vector<2x8x32xf32>, vector<2x8x32xf32>, vector<2x8x32xf32>, vector<2x8x32xf32> -> vector<2x32x32xf32>
    %188 = arith.mulf %187, %5 : vector<2x32x32xf32>
    %189 = tpu.concatenate %186, %186, %186, %186 in 1 : vector<2x8x32xf32>, vector<2x8x32xf32>, vector<2x8x32xf32>, vector<2x8x32xf32> -> vector<2x32x32xf32>
    %190 = arith.mulf %189, %5 : vector<2x32x32xf32>
    "tpu.trace_start"() <{level = 10 : i32, message = "bqw,bmw->bqm"}> : () -> ()
    %cst_110 = arith.constant dense<0.000000e+00> : vector<2x8x32xf32>
    %191 = tpu.matmul %184, %188, %cst_110 {dimension_numbers = #tpu.dot_dimension_numbers<[2], [2], [1], [1], [0, 0, 0, 1, 1, 1], [0], [0]>} : vector<2x8x32xf32>, vector<2x32x32xf32>, vector<2x8x32xf32> -> vector<2x8x32xf32>
    "tpu.trace_stop"() : () -> ()
    %192 = arith.addf %191, %2 : vector<2x8x32xf32>
    %cst_111 = arith.constant dense<0xFF800000> : vector<2x8xf32>
    %193 = vector.multi_reduction <maximumf>, %192, %cst_111 [2] : vector<2x8x32xf32> to vector<2x8xf32>
    %194 = vector.shape_cast %193 : vector<2x8xf32> to vector<2x8x1xf32>
    %195 = vector.broadcast %194 : vector<2x8x1xf32> to vector<2x8x32xf32>
    %196 = arith.subf %192, %195 : vector<2x8x32xf32>
    %197 = math.exp %196 : vector<2x8x32xf32>
    %198 = vector.shape_cast %197 : vector<2x8x32xf32> to vector<16x32xf32>
    %cst_112 = arith.constant dense<0.000000e+00> : vector<16x32xf32>
    %199 = tpu.matmul %198, %6, %cst_112 {dimension_numbers = #tpu.dot_dimension_numbers<[1], [0], [0], [1], [0, 0, 1, 1], [], []>} : vector<16x32xf32>, vector<32x32xf32>, vector<16x32xf32> -> vector<16x32xf32>
    %200 = arith.divf %198, %199 : vector<16x32xf32>
    %201 = vector.shape_cast %200 : vector<16x32xf32> to vector<2x8x32xf32>
    "tpu.trace_start"() <{level = 10 : i32, message = "bqm,bmw->bqw"}> : () -> ()
    %cst_113 = arith.constant dense<0.000000e+00> : vector<2x8x32xf32>
    %202 = tpu.matmul %201, %190, %cst_113 {dimension_numbers = #tpu.dot_dimension_numbers<[2], [1], [1], [2], [0, 0, 0, 1, 1, 2], [0], [0]>} : vector<2x8x32xf32>, vector<2x32x32xf32>, vector<2x8x32xf32> -> vector<2x8x32xf32>
    "tpu.trace_stop"() : () -> ()
    %203 = vector.shape_cast %202 : vector<2x8x32xf32> to vector<16x32xf32>
    %c1_114 = arith.constant 1 : index
    %c0_115 = arith.constant 0 : index
    %c0_116 = arith.constant 0 : index
    %204 = vector.load %arg14[%c1_114, %c0_115, %c0_116] : memref<2x32x32xf32, #tpu.memory_space<vmem>>, vector<1x32x32xf32>
    %205 = vector.shape_cast %204 : vector<1x32x32xf32> to vector<32x32xf32>
    %cst_117 = arith.constant dense<0.000000e+00> : vector<16x32xf32>
    %206 = tpu.matmul %203, %205, %cst_117 {dimension_numbers = #tpu.dot_dimension_numbers<[1], [0], [0], [1], [0, 0, 1, 1], [], []>} : vector<16x32xf32>, vector<32x32xf32>, vector<16x32xf32> -> vector<16x32xf32>
    %207 = arith.addf %136, %206 : vector<16x32xf32>
    %c1_118 = arith.constant 1 : index
    %c0_119 = arith.constant 0 : index
    %c0_120 = arith.constant 0 : index
    %208 = vector.load %arg15[%c1_118, %c0_119, %c0_120] : memref<2x1x32xf32, #tpu.memory_space<vmem>>, vector<1x1x32xf32>
    %209 = vector.shape_cast %208 : vector<1x1x32xf32> to vector<1x32xf32>
    %210 = vector.broadcast %209 : vector<1x32xf32> to vector<16x32xf32>
    %211 = arith.addf %207, %210 : vector<16x32xf32>
    %c1_121 = arith.constant 1 : index
    %c0_122 = arith.constant 0 : index
    %c0_123 = arith.constant 0 : index
    %212 = vector.load %arg16[%c1_121, %c0_122, %c0_123] : memref<2x1x32xf32, #tpu.memory_space<vmem>>, vector<1x1x32xf32>
    %213 = vector.shape_cast %212 : vector<1x1x32xf32> to vector<1x32xf32>
    %c1_124 = arith.constant 1 : index
    %c0_125 = arith.constant 0 : index
    %c0_126 = arith.constant 0 : index
    %214 = vector.load %arg17[%c1_124, %c0_125, %c0_126] : memref<2x1x32xf32, #tpu.memory_space<vmem>>, vector<1x1x32xf32>
    %215 = vector.shape_cast %214 : vector<1x1x32xf32> to vector<1x32xf32>
    %cst_127 = arith.constant dense<0.000000e+00> : vector<16xf32>
    %216 = vector.multi_reduction <add>, %211, %cst_127 [1] : vector<16x32xf32> to vector<16xf32>
    %217 = vector.shape_cast %216 : vector<16xf32> to vector<16x1xf32>
    %cst_128 = arith.constant 3.200000e+01 : f32
    %218 = vector.broadcast %cst_128 : f32 to vector<16x1xf32>
    %219 = arith.divf %217, %218 : vector<16x1xf32>
    %220 = arith.mulf %211, %211 : vector<16x32xf32>
    %cst_129 = arith.constant dense<0.000000e+00> : vector<16xf32>
    %221 = vector.multi_reduction <add>, %220, %cst_129 [1] : vector<16x32xf32> to vector<16xf32>
    %222 = vector.shape_cast %221 : vector<16xf32> to vector<16x1xf32>
    %cst_130 = arith.constant 3.200000e+01 : f32
    %223 = vector.broadcast %cst_130 : f32 to vector<16x1xf32>
    %224 = arith.divf %222, %223 : vector<16x1xf32>
    %225 = arith.mulf %219, %219 : vector<16x1xf32>
    %226 = arith.subf %224, %225 : vector<16x1xf32>
    %227 = vector.broadcast %219 : vector<16x1xf32> to vector<16x32xf32>
    %228 = arith.subf %211, %227 : vector<16x32xf32>
    %cst_131 = arith.constant 9.99999974E-6 : f32
    %229 = vector.broadcast %cst_131 : f32 to vector<16x1xf32>
    %230 = arith.addf %226, %229 : vector<16x1xf32>
    %231 = math.rsqrt %230 : vector<16x1xf32>
    %232 = vector.broadcast %231 : vector<16x1xf32> to vector<16x32xf32>
    %233 = arith.mulf %228, %232 : vector<16x32xf32>
    %234 = vector.broadcast %213 : vector<1x32xf32> to vector<16x32xf32>
    %235 = arith.mulf %233, %234 : vector<16x32xf32>
    %236 = vector.broadcast %215 : vector<1x32xf32> to vector<16x32xf32>
    %237 = arith.addf %235, %236 : vector<16x32xf32>
    %c1_132 = arith.constant 1 : index
    %c0_133 = arith.constant 0 : index
    %c0_134 = arith.constant 0 : index
    %238 = vector.load %arg18[%c1_132, %c0_133, %c0_134] : memref<2x32x128xf32, #tpu.memory_space<vmem>>, vector<1x32x128xf32>
    %239 = vector.shape_cast %238 : vector<1x32x128xf32> to vector<32x128xf32>
    %cst_135 = arith.constant dense<0.000000e+00> : vector<16x128xf32>
    %240 = tpu.matmul %237, %239, %cst_135 {dimension_numbers = #tpu.dot_dimension_numbers<[1], [0], [0], [1], [0, 0, 1, 1], [], []>} : vector<16x32xf32>, vector<32x128xf32>, vector<16x128xf32> -> vector<16x128xf32>
    %c1_136 = arith.constant 1 : index
    %c0_137 = arith.constant 0 : index
    %c0_138 = arith.constant 0 : index
    %241 = vector.load %arg19[%c1_136, %c0_137, %c0_138] : memref<2x1x128xf32, #tpu.memory_space<vmem>>, vector<1x1x128xf32>
    %242 = vector.shape_cast %241 : vector<1x1x128xf32> to vector<1x128xf32>
    %243 = vector.broadcast %242 : vector<1x128xf32> to vector<16x128xf32>
    %244 = arith.addf %240, %243 : vector<16x128xf32>
    %cst_139 = arith.constant 1.702000e+00 : f32
    %245 = vector.broadcast %cst_139 : f32 to vector<16x128xf32>
    %246 = arith.mulf %245, %244 : vector<16x128xf32>
    %247 = arith.negf %246 : vector<16x128xf32>
    %248 = math.exp %247 : vector<16x128xf32>
    %cst_140 = arith.constant 1.000000e+00 : f32
    %249 = vector.broadcast %cst_140 : f32 to vector<16x128xf32>
    %250 = arith.addf %249, %248 : vector<16x128xf32>
    %251 = arith.divf %249, %250 : vector<16x128xf32>
    %252 = arith.mulf %244, %251 : vector<16x128xf32>
    %c1_141 = arith.constant 1 : index
    %c0_142 = arith.constant 0 : index
    %c0_143 = arith.constant 0 : index
    %253 = vector.load %arg20[%c1_141, %c0_142, %c0_143] : memref<2x128x32xf32, #tpu.memory_space<vmem>>, vector<1x128x32xf32>
    %254 = vector.shape_cast %253 : vector<1x128x32xf32> to vector<128x32xf32>
    %cst_144 = arith.constant dense<0.000000e+00> : vector<16x32xf32>
    %255 = tpu.matmul %252, %254, %cst_144 {dimension_numbers = #tpu.dot_dimension_numbers<[1], [0], [0], [1], [0, 0, 1, 1], [], []>} : vector<16x128xf32>, vector<128x32xf32>, vector<16x32xf32> -> vector<16x32xf32>
    %256 = arith.addf %211, %255 : vector<16x32xf32>
    %c1_145 = arith.constant 1 : index
    %c0_146 = arith.constant 0 : index
    %c0_147 = arith.constant 0 : index
    %257 = vector.load %arg21[%c1_145, %c0_146, %c0_147] : memref<2x1x32xf32, #tpu.memory_space<vmem>>, vector<1x1x32xf32>
    %258 = vector.shape_cast %257 : vector<1x1x32xf32> to vector<1x32xf32>
    %259 = vector.broadcast %258 : vector<1x32xf32> to vector<16x32xf32>
    %260 = arith.addf %256, %259 : vector<16x32xf32>
    %c0_148 = arith.constant 0 : index
    %c0_149 = arith.constant 0 : index
    %261 = vector.load %arg0[%c0_148, %c0_149] : memref<2x1xi32, #tpu.memory_space<vmem>>, vector<2x1xi32>
    %262 = tpu.iota {dimensions = array<i32: 0>} : vector<2x16xi32>
    %263 = tpu.iota {dimensions = array<i32: 1>} : vector<2x16xi32>
    %c8_i32 = arith.constant 8 : i32
    %264 = vector.broadcast %c8_i32 : i32 to vector<2x16xi32>
    %265 = arith.muli %262, %264 : vector<2x16xi32>
    %266 = vector.broadcast %261 : vector<2x1xi32> to vector<2x16xi32>
    %267 = arith.addi %265, %266 : vector<2x16xi32>
    %268 = arith.cmpi eq, %263, %267 : vector<2x16xi32>
    %269 = arith.extui %268 : vector<2x16xi1> to vector<2x16xi32>
    %270 = arith.sitofp %269 : vector<2x16xi32> to vector<2x16xf32>
    %cst_150 = arith.constant dense<0.000000e+00> : vector<2x32xf32>
    %271 = tpu.matmul %270, %260, %cst_150 {dimension_numbers = #tpu.dot_dimension_numbers<[1], [0], [0], [1], [0, 0, 1, 1], [], []>} : vector<2x16xf32>, vector<16x32xf32>, vector<2x32xf32> -> vector<2x32xf32>
    %c0_151 = arith.constant 0 : index
    %c0_152 = arith.constant 0 : index
    %272 = vector.load %arg22[%c0_151, %c0_152] : memref<1x32xf32, #tpu.memory_space<vmem>>, vector<1x32xf32>
    %c0_153 = arith.constant 0 : index
    %c0_154 = arith.constant 0 : index
    %273 = vector.load %arg23[%c0_153, %c0_154] : memref<1x32xf32, #tpu.memory_space<vmem>>, vector<1x32xf32>
    %cst_155 = arith.constant dense<0.000000e+00> : vector<2xf32>
    %274 = vector.multi_reduction <add>, %271, %cst_155 [1] : vector<2x32xf32> to vector<2xf32>
    %275 = vector.shape_cast %274 : vector<2xf32> to vector<2x1xf32>
    %cst_156 = arith.constant 3.200000e+01 : f32
    %276 = vector.broadcast %cst_156 : f32 to vector<2x1xf32>
    %277 = arith.divf %275, %276 : vector<2x1xf32>
    %278 = arith.mulf %271, %271 : vector<2x32xf32>
    %cst_157 = arith.constant dense<0.000000e+00> : vector<2xf32>
    %279 = vector.multi_reduction <add>, %278, %cst_157 [1] : vector<2x32xf32> to vector<2xf32>
    %280 = vector.shape_cast %279 : vector<2xf32> to vector<2x1xf32>
    %cst_158 = arith.constant 3.200000e+01 : f32
    %281 = vector.broadcast %cst_158 : f32 to vector<2x1xf32>
    %282 = arith.divf %280, %281 : vector<2x1xf32>
    %283 = arith.mulf %277, %277 : vector<2x1xf32>
    %284 = arith.subf %282, %283 : vector<2x1xf32>
    %285 = vector.broadcast %277 : vector<2x1xf32> to vector<2x32xf32>
    %286 = arith.subf %271, %285 : vector<2x32xf32>
    %cst_159 = arith.constant 9.99999974E-6 : f32
    %287 = vector.broadcast %cst_159 : f32 to vector<2x1xf32>
    %288 = arith.addf %284, %287 : vector<2x1xf32>
    %289 = math.rsqrt %288 : vector<2x1xf32>
    %290 = vector.broadcast %289 : vector<2x1xf32> to vector<2x32xf32>
    %291 = arith.mulf %286, %290 : vector<2x32xf32>
    %292 = vector.broadcast %272 : vector<1x32xf32> to vector<2x32xf32>
    %293 = arith.mulf %291, %292 : vector<2x32xf32>
    %294 = vector.broadcast %273 : vector<1x32xf32> to vector<2x32xf32>
    %295 = arith.addf %293, %294 : vector<2x32xf32>
    %c0_160 = arith.constant 0 : index
    %c0_161 = arith.constant 0 : index
    %296 = vector.load %arg24[%c0_160, %c0_161] : memref<32x16xf32, #tpu.memory_space<vmem>>, vector<32x16xf32>
    %cst_162 = arith.constant dense<0.000000e+00> : vector<2x16xf32>
    %297 = tpu.matmul %295, %296, %cst_162 {dimension_numbers = #tpu.dot_dimension_numbers<[1], [0], [0], [1], [0, 0, 1, 1], [], []>} : vector<2x32xf32>, vector<32x16xf32>, vector<2x16xf32> -> vector<2x16xf32>
    %c0_163 = arith.constant 0 : index
    %c0_164 = arith.constant 0 : index
    %298 = vector.load %arg25[%c0_163, %c0_164] : memref<2x16xf32, #tpu.memory_space<vmem>>, vector<2x16xf32>
    tpu.vector_store %arg25[%c0_163, %c0_164], %297 {strides = array<i32>} : memref<2x16xf32, #tpu.memory_space<vmem>>, vector<2x16xf32>,
    return
  }
}

</mosaic_0001>

<llo_original>
// kernel: tile.9
$region0: #{tile.9}
  %s0 = inlined_call_operand.vmem [shape: f32[8,4,8], index: 0, kind: input, shape index: {}]
  %s1 = inlined_call_operand.vmem [shape: f32[8,32], index: 1, kind: output, shape index: {}]
  $region1: #{tile.9} parent=0
    #allocation0 [shape = 'u8[32768]{0}', space=vmem, size = 0x8000, scoped, tag = 'scoped mem for input reshape']
    %s3 = sshllo.u32 0, 4
    %s4 = smul.addr 4, 7
    %s5 = scalar_lea.vmem %s0, %s4
    %v6 = vld [vmem:[%s5] sm:%s3]
    %s7 = scalar_lea.vmem [#allocation0], 56
    %8 = vst [vmem:[%s7] sm:%s3] %v6
    %s9 = smul.addr 4, 6
    %s10 = scalar_lea.vmem %s0, %s9
    %v11 = vld [vmem:[%s10] sm:%s3]
    %s12 = scalar_lea.vmem [#allocation0], 48
    %13 = vst [vmem:[%s12] sm:%s3] %v11
    %s14 = smul.addr 4, 5
    %s15 = scalar_lea.vmem %s0, %s14
    %v16 = vld [vmem:[%s15] sm:%s3]
    %s17 = scalar_lea.vmem [#allocation0], 40
    %18 = vst [vmem:[%s17] sm:%s3] %v16
    %s19 = smul.addr 4, 4
    %s20 = scalar_lea.vmem %s0, %s19
    %v21 = vld [vmem:[%s20] sm:%s3]
    %s22 = scalar_lea.vmem [#allocation0], 32
    %23 = vst [vmem:[%s22] sm:%s3] %v21
    %s24 = smul.addr 4, 3
    %s25 = scalar_lea.vmem %s0, %s24
    %v26 = vld [vmem:[%s25] sm:%s3]
    %s27 = scalar_lea.vmem [#allocation0], 24
    %28 = vst [vmem:[%s27] sm:%s3] %v26
    %s29 = smul.addr 4, 2
    %s30 = scalar_lea.vmem %s0, %s29
    %v31 = vld [vmem:[%s30] sm:%s3]
    %s32 = scalar_lea.vmem [#allocation0], 16
    %33 = vst [vmem:[%s32] sm:%s3] %v31
    %s34 = scalar_lea.vmem %s0, 4
    %v35 = vld [vmem:[%s34] sm:%s3]
    %s36 = scalar_lea.vmem [#allocation0], 8
    %37 = vst [vmem:[%s36] sm:%s3] %v35
    %v38 = vld [vmem:[%s0] sm:%s3]
    %39 = vst [vmem:[#allocation0] sm:%s3] %v38
    %v40 = vld [vmem:[#allocation0] ss:$8 sm:$0xf]
    %v41 = vld [vmem:[#allocation0] ss:$8 sm:$0xf0]
    %vm42 = vcmask 1047556
    %v43 = vsel %vm42, %v41, %v40
    %vm44 = vcmask 64512
    %45 = vst.msk [vmem:[%s1] sm:$0xff] %vm44, %v43
    %s46 = scalar_lea.vmem [#allocation0], 3
    %v47 = vld [vmem:[%s46] ss:$8 sm:$0xf]
    %s48 = scalar_lea.vmem [#allocation0], 3
    %v49 = vld [vmem:[%s48] ss:$8 sm:$0xf0]
    %vm50 = vcmask 1047556
    %v51 = vsel %vm50, %v49, %v47
    %52 = vrot.lane.b32.xlu0 %v51, 24
    %v53 = vpop.permute.xlu0 %52
    %vm54 = vcmask 261312
    %55 = vst.msk [vmem:[%s1] sm:$0xff] %vm54, %v53
    %s56 = scalar_lea.vmem [#allocation0], 2
    %v57 = vld [vmem:[%s56] ss:$8 sm:$0xf]
    %s58 = scalar_lea.vmem [#allocation0], 2
    %v59 = vld [vmem:[%s58] ss:$8 sm:$0xf0]
    %vm60 = vcmask 1047556
    %v61 = vsel %vm60, %v59, %v57
    %62 = vrot.lane.b32.xlu0 %v61, 16
    %v63 = vpop.permute.xlu0 %62
    %vm64 = vcmask 195712
    %65 = vst.msk [vmem:[%s1] sm:$0xff] %vm64, %v63
    %s66 = scalar_lea.vmem [#allocation0], 1
    %v67 = vld [vmem:[%s66] ss:$8 sm:$0xf]
    %s68 = scalar_lea.vmem [#allocation0], 1
    %v69 = vld [vmem:[%s68] ss:$8 sm:$0xf0]
    %vm70 = vcmask 1047556
    %v71 = vsel %vm70, %v69, %v67
    %72 = vrot.lane.b32.xlu0 %v71, 8
    %v73 = vpop.permute.xlu0 %72
    %vm74 = vcmask 130112
    %75 = vst.msk [vmem:[%s1] sm:$0xff] %vm74, %v73

// kernel: text_encoder_forward.1
$region0: #{text_encoder_forward.1}
  #allocation0 [shape = 'u32[]', space=smem, size = 0x4, offset = 0x4, fixed_abs, tag = 'smem constant byte address 0x4 - core index']
  #allocation1 [shape = 'u32[144,128]{1,0:T(1,128)}', space=vmem, size = 0x12000, scoped, tag = 'internal scratch']
  %s0 = inlined_call_operand.vmem [shape: s32[2,1], index: 0, kind: input, shape index: {}]
  %s1 = inlined_call_operand.vmem [shape: f32[2,8,32], index: 1, kind: input, shape index: {}]
  %s2 = inlined_call_operand.vmem [shape: f32[8,32], index: 2, kind: input, shape index: {}]
  %s3 = inlined_call_operand.vmem [shape: f32[8,32], index: 3, kind: input, shape index: {}]
  %s4 = inlined_call_operand.vmem [shape: f32[32,32], index: 4, kind: input, shape index: {}, may-alias: {4,5}]
  %s5 = inlined_call_operand.vmem [shape: f32[32,32], index: 5, kind: input, shape index: {}, may-alias: {4,5}]
  %s6 = inlined_call_operand.vmem [shape: f32[2,1,32], index: 6, kind: input, shape index: {}]
  %s7 = inlined_call_operand.vmem [shape: f32[2,1,32], index: 7, kind: input, shape index: {}]
  %s8 = inlined_call_operand.vmem [shape: f32[2,32,32], index: 8, kind: input, shape index: {}]
  %s9 = inlined_call_operand.vmem [shape: f32[2,1,32], index: 9, kind: input, shape index: {}]
  %s10 = inlined_call_operand.vmem [shape: f32[2,32,32], index: 10, kind: input, shape index: {}]
  %s11 = inlined_call_operand.vmem [shape: f32[2,1,32], index: 11, kind: input, shape index: {}]
  %s12 = inlined_call_operand.vmem [shape: f32[2,32,32], index: 12, kind: input, shape index: {}]
  %s13 = inlined_call_operand.vmem [shape: f32[2,1,32], index: 13, kind: input, shape index: {}]
  %s14 = inlined_call_operand.vmem [shape: f32[2,32,32], index: 14, kind: input, shape index: {}]
  %s15 = inlined_call_operand.vmem [shape: f32[2,1,32], index: 15, kind: input, shape index: {}]
  %s16 = inlined_call_operand.vmem [shape: f32[2,1,32], index: 16, kind: input, shape index: {}]
  %s17 = inlined_call_operand.vmem [shape: f32[2,1,32], index: 17, kind: input, shape index: {}]
  %s18 = inlined_call_operand.vmem [shape: f32[2,32,128], index: 18, kind: input, shape index: {}]
  %s19 = inlined_call_operand.vmem [shape: f32[2,1,128], index: 19, kind: input, shape index: {}]
  %s20 = inlined_call_operand.vmem [shape: f32[2,128,32], index: 20, kind: input, shape index: {}]
  %s21 = inlined_call_operand.vmem [shape: f32[2,1,32], index: 21, kind: input, shape index: {}]
  %s22 = inlined_call_operand.vmem [shape: f32[1,32], index: 22, kind: input, shape index: {}]
  %s23 = inlined_call_operand.vmem [shape: f32[1,32], index: 23, kind: input, shape index: {}]
  %s24 = inlined_call_operand.vmem [shape: f32[32,16], index: 24, kind: input, shape index: {}]
  %s25 = inlined_call_operand.hbm [shape: f32[2,16], index: 25, kind: output, shape index: {}]
  %s26 = sld [smem:[#allocation0]]
  $region110: #{text_encoder_forward.1} parent=0
    _
  %s28 = ssub.s32 1, %s26
  %s29 = scalar_select 0, %s28, %s26
  $region1: #{text_encoder_forward.1} parent=0
    #allocation2 [shape = 'u8[1024]{0}', space=vmem, size = 0x400, scoped, tag = 'output window, operand 0, single buffered']
    #allocation3 [shape = 's32[1]{0}', space=sflag, size = 0x4, scoped, tag = 'scoped memory for text_encoder_forward.1']
    %30 = vsyncpa [#allocation3], 0
    // Predicated region
    $region2: #{text_encoder_forward.1} parent=1 // pred_check
      _
    $region3: #{text_encoder_forward.1} parent=1 // pred_check_branch
      %32 = sbr.rel (0) target = $region5
    $region4: #{text_encoder_forward.1} parent=1 // pred_region
      _
    $region5: #{text_encoder_forward.1} parent=1 // pred_fallthru
      _
    // Predicated region
    $region6: #{text_encoder_forward.1} parent=1 // pred_check
      _
    $region7: #{text_encoder_forward.1} parent=1 // pred_check_branch
      %34 = sbr.rel (0) target = $region9
    $region8: #{text_encoder_forward.1} parent=1 // pred_region
      _
    $region9: #{text_encoder_forward.1} parent=1 // pred_fallthru
      _
    // Predicated region
    $region10: #{text_encoder_forward.1} parent=1 // pred_check
      _
    $region11: #{text_encoder_forward.1} parent=1 // pred_check_branch
      %36 = sbr.rel (0) target = $region13
    $region12: #{text_encoder_forward.1} parent=1 // pred_region
      _
    $region13: #{text_encoder_forward.1} parent=1 // pred_fallthru
      _
    // Predicated region
    $region14: #{text_encoder_forward.1} parent=1 // pred_check
      _
    $region15: #{text_encoder_forward.1} parent=1 // pred_check_branch
      %38 = sbr.rel (0) target = $region17
    $region16: #{text_encoder_forward.1} parent=1 // pred_region
      _
    $region17: #{text_encoder_forward.1} parent=1 // pred_fallthru
      _
    // Predicated region
    $region18: #{text_encoder_forward.1} parent=1 // pred_check
      _
    $region19: #{text_encoder_forward.1} parent=1 // pred_check_branch
      %40 = sbr.rel (0) target = $region21
    $region20: #{text_encoder_forward.1} parent=1 // pred_region
      _
    $region21: #{text_encoder_forward.1} parent=1 // pred_fallthru
      _
    // Predicated region
    $region22: #{text_encoder_forward.1} parent=1 // pred_check
      _
    $region23: #{text_encoder_forward.1} parent=1 // pred_check_branch
      %42 = sbr.rel (0) target = $region25
    $region24: #{text_encoder_forward.1} parent=1 // pred_region
      _
    $region25: #{text_encoder_forward.1} parent=1 // pred_fallthru
      _
    // Predicated region
    $region26: #{text_encoder_forward.1} parent=1 // pred_check
      _
    $region27: #{text_encoder_forward.1} parent=1 // pred_check_branch
      %44 = sbr.rel (0) target = $region29
    $region28: #{text_encoder_forward.1} parent=1 // pred_region
      _
    $region29: #{text_encoder_forward.1} parent=1 // pred_fallthru
      _
    // Predicated region
    $region30: #{text_encoder_forward.1} parent=1 // pred_check
      _
    $region31: #{text_encoder_forward.1} parent=1 // pred_check_branch
      %46 = sbr.rel (0) target = $region33
    $region32: #{text_encoder_forward.1} parent=1 // pred_region
      _
    $region33: #{text_encoder_forward.1} parent=1 // pred_fallthru
      _
    // Predicated region
    $region34: #{text_encoder_forward.1} parent=1 // pred_check
      _
    $region35: #{text_encoder_forward.1} parent=1 // pred_check_branch
      %48 = sbr.rel (0) target = $region37
    $region36: #{text_encoder_forward.1} parent=1 // pred_region
      _
    $region37: #{text_encoder_forward.1} parent=1 // pred_fallthru
      _
    // Predicated region
    $region38: #{text_encoder_forward.1} parent=1 // pred_check
      _
    $region39: #{text_encoder_forward.1} parent=1 // pred_check_branch
      %50 = sbr.rel (0) target = $region41
    $region40: #{text_encoder_forward.1} parent=1 // pred_region
      _
    $region41: #{text_encoder_forward.1} parent=1 // pred_fallthru
      _
    // Predicated region
    $region42: #{text_encoder_forward.1} parent=1 // pred_check
      _
    $region43: #{text_encoder_forward.1} parent=1 // pred_check_branch
      %52 = sbr.rel (0) target = $region45
    $region44: #{text_encoder_forward.1} parent=1 // pred_region
      _
    $region45: #{text_encoder_forward.1} parent=1 // pred_fallthru
      _
    // Predicated region
    $region46: #{text_encoder_forward.1} parent=1 // pred_check
      _
    $region47: #{text_encoder_forward.1} parent=1 // pred_check_branch
      %54 = sbr.rel (0) target = $region49
    $region48: #{text_encoder_forward.1} parent=1 // pred_region
      _
    $region49: #{text_encoder_forward.1} parent=1 // pred_fallthru
      _
    // Predicated region
    $region50: #{text_encoder_forward.1} parent=1 // pred_check
      _
    $region51: #{text_encoder_forward.1} parent=1 // pred_check_branch
      %56 = sbr.rel (0) target = $region53
    $region52: #{text_encoder_forward.1} parent=1 // pred_region
      _
    $region53: #{text_encoder_forward.1} parent=1 // pred_fallthru
      _
    // Predicated region
    $region54: #{text_encoder_forward.1} parent=1 // pred_check
      _
    $region55: #{text_encoder_forward.1} parent=1 // pred_check_branch
      %58 = sbr.rel (0) target = $region57
    $region56: #{text_encoder_forward.1} parent=1 // pred_region
      _
    $region57: #{text_encoder_forward.1} parent=1 // pred_fallthru
      _
    // Predicated region
    $region58: #{text_encoder_forward.1} parent=1 // pred_check
      _
    $region59: #{text_encoder_forward.1} parent=1 // pred_check_branch
      %60 = sbr.rel (0) target = $region61
    $region60: #{text_encoder_forward.1} parent=1 // pred_region
      _
    $region61: #{text_encoder_forward.1} parent=1 // pred_fallthru
      _
    // Predicated region
    $region62: #{text_encoder_forward.1} parent=1 // pred_check
      _
    $region63: #{text_encoder_forward.1} parent=1 // pred_check_branch
      %62 = sbr.rel (0) target = $region65
    $region64: #{text_encoder_forward.1} parent=1 // pred_region
      _
    $region65: #{text_encoder_forward.1} parent=1 // pred_fallthru
      _
    // Predicated region
    $region66: #{text_encoder_forward.1} parent=1 // pred_check
      _
    $region67: #{text_encoder_forward.1} parent=1 // pred_check_branch
      %64 = sbr.rel (0) target = $region69
    $region68: #{text_encoder_forward.1} parent=1 // pred_region
      _
    $region69: #{text_encoder_forward.1} parent=1 // pred_fallthru
      _
    // Predicated region
    $region70: #{text_encoder_forward.1} parent=1 // pred_check
      _
    $region71: #{text_encoder_forward.1} parent=1 // pred_check_branch
      %66 = sbr.rel (0) target = $region73
    $region72: #{text_encoder_forward.1} parent=1 // pred_region
      _
    $region73: #{text_encoder_forward.1} parent=1 // pred_fallthru
      _
    // Predicated region
    $region74: #{text_encoder_forward.1} parent=1 // pred_check
      _
    $region75: #{text_encoder_forward.1} parent=1 // pred_check_branch
      %68 = sbr.rel (0) target = $region77
    $region76: #{text_encoder_forward.1} parent=1 // pred_region
      _
    $region77: #{text_encoder_forward.1} parent=1 // pred_fallthru
      _
    // Predicated region
    $region78: #{text_encoder_forward.1} parent=1 // pred_check
      _
    $region79: #{text_encoder_forward.1} parent=1 // pred_check_branch
      %70 = sbr.rel (0) target = $region81
    $region80: #{text_encoder_forward.1} parent=1 // pred_region
      _
    $region81: #{text_encoder_forward.1} parent=1 // pred_fallthru
      _
    // Predicated region
    $region82: #{text_encoder_forward.1} parent=1 // pred_check
      _
    $region83: #{text_encoder_forward.1} parent=1 // pred_check_branch
      %72 = sbr.rel (0) target = $region85
    $region84: #{text_encoder_forward.1} parent=1 // pred_region
      _
    $region85: #{text_encoder_forward.1} parent=1 // pred_fallthru
      _
    // Predicated region
    $region86: #{text_encoder_forward.1} parent=1 // pred_check
      _
    $region87: #{text_encoder_forward.1} parent=1 // pred_check_branch
      %74 = sbr.rel (0) target = $region89
    $region88: #{text_encoder_forward.1} parent=1 // pred_region
      _
    $region89: #{text_encoder_forward.1} parent=1 // pred_fallthru
      _
    // Predicated region
    $region90: #{text_encoder_forward.1} parent=1 // pred_check
      _
    $region91: #{text_encoder_forward.1} parent=1 // pred_check_branch
      %76 = sbr.rel (0) target = $region93
    $region92: #{text_encoder_forward.1} parent=1 // pred_region
      _
    $region93: #{text_encoder_forward.1} parent=1 // pred_fallthru
      _
    // Predicated region
    $region94: #{text_encoder_forward.1} parent=1 // pred_check
      _
    $region95: #{text_encoder_forward.1} parent=1 // pred_check_branch
      %78 = sbr.rel (0) target = $region97
    $region96: #{text_encoder_forward.1} parent=1 // pred_region
      _
    $region97: #{text_encoder_forward.1} parent=1 // pred_fallthru
      _
    // Predicated region
    $region98: #{text_encoder_forward.1} parent=1 // pred_check
      _
    $region99: #{text_encoder_forward.1} parent=1 // pred_check_branch
      %80 = sbr.rel (0) target = $region101
    $region100: #{text_encoder_forward.1} parent=1 // pred_region
      _
    $region101: #{text_encoder_forward.1} parent=1 // pred_fallthru
      _
    %v81 = vld [vmem:[%s3] sm:$0xff]
    %v82 = vld [vmem:[%s4] sm:$0xff]
    %v83 = vld [vmem:[%s4 + $0x8] sm:$0xff]
    %v84 = vld [vmem:[%s4 + $0x10] sm:$0xff]
    %v85 = vld [vmem:[%s4 + $0x18] sm:$0xff]
    %v86 = vld [vmem:[%s5] sm:$0xff]
    %v87 = vld [vmem:[%s5 + $0x8] sm:$0xff]
    %v88 = vld [vmem:[%s5 + $0x10] sm:$0xff]
    %v89 = vld [vmem:[%s5 + $0x18] sm:$0xff]
    %v90 = vld [vmem:[%s1] sm:$0xff]
    %v91 = vld [vmem:[%s1 + $0x8] sm:$0xff]
    %v92 = vld [vmem:[%s2] sm:$0xff]
    %v93 = vadd.f32 %v90, %v92
    %v94 = vadd.f32 %v91, %v92
    %v95 = vld [vmem:[%s6] sm:$0x1]
    %v96 = vld [vmem:[%s7] sm:$0x1]
    %vm97 = vcmask 261120
    %v98 = vsel %vm97, %v93, 0.0
    %99 = vadd.xlane.f32.xlu0 %v98
    %v100 = vpop.xlane.xlu0 %99
    %v101 = vsel %vm97, %v94, 0.0
    %102 = vadd.xlane.f32.xlu0 %v101
    %v103 = vpop.xlane.xlu0 %102
    %v104 = vrcp.pop 32.0
    %v105 = vmul.f32 %v100, %v104
    %v106 = vmul.f32 %v103, %v104
    %v107 = vmul.f32 %v93, %v93
    %v108 = vmul.f32 %v94, %v94
    %v109 = vsel %vm97, %v107, 0.0
    %110 = vadd.xlane.f32.xlu0 %v109
    %v111 = vpop.xlane.xlu0 %110
    %v112 = vsel %vm97, %v108, 0.0
    %113 = vadd.xlane.f32.xlu0 %v112
    %v114 = vpop.xlane.xlu0 %113
    %v115 = vmul.f32 %v111, %v104
    %v116 = vmul.f32 %v114, %v104
    %v117 = vmul.f32 %v105, %v105
    %v118 = vmul.f32 %v106, %v106
    %v119 = vsub.f32 %v115, %v117
    %v120 = vsub.f32 %v116, %v118
    %v121 = vsub.f32 %v93, %v105
    %v122 = vsub.f32 %v94, %v106
    %v123 = vadd.f32 %v119, 1e-05
    %v124 = vadd.f32 %v120, 1e-05
    %v125 = vrsqrt.pop %v123
    %v126 = vrsqrt.pop %v124
    %v127 = vmul.f32 %v121, %v125
    %v128 = vmul.f32 %v122, %v126
    %v130 = vlaneseq
    %v131 = vshrl.u32 %v130, 7
    %v132 = vsub.s32 0, %v131
    %v133 = vrot.slane %v95, %v132
    %v135 = vmul.f32 %v127, %v133
    %v136 = vmul.f32 %v128, %v133
    %v138 = vlaneseq
    %v139 = vshrl.u32 %v138, 7
    %v140 = vsub.s32 0, %v139
    %v141 = vrot.slane %v96, %v140
    %v143 = vadd.f32 %v135, %v141
    %v144 = vadd.f32 %v136, %v141
    %v145 = vld [vmem:[%s8] sm:$0xff]
    %v146 = vld [vmem:[%s8 + $0x8] sm:$0xff]
    %v147 = vld [vmem:[%s8 + $0x10] sm:$0xff]
    %v148 = vld [vmem:[%s8 + $0x18] sm:$0xff]
    %v149 = vld [vmem:[%s9] sm:$0x1]
    %v151 = vlaneseq
    %v152 = vshrl.u32 %v151, 7
    %v153 = vsub.s32 0, %v152
    %v154 = vrot.slane %v149, %v153
    %v157 = vsel %vm97, %v143, 0
    %v160 = vsel %vm97, %v144, 0
    %162 = vmatprep.subr.mxu0 0.0
    %163 = vmatpush1.msra.mxu0 %v145
    %164 = vmatprep.subr.mxu0 0.0
    %165 = vmatpush1.msra.mxu0 %v146
    %166 = vmatprep.subr.mxu0 0.0
    %167 = vmatpush1.msra.mxu0 %v147
    %168 = vmatprep.subr.mxu0 0.0
    %169 = vmatpush1.msra.mxu0 %v148
    %170 = vmatprep.subr.mxu0 0.0
    %171 = vmatpush1.msra.mxu0 0.0
    %172 = vmatprep.subr.mxu0 0.0
    %173 = vmatpush1.msra.mxu0 0.0
    %174 = vmatprep.subr.mxu0 0.0
    %175 = vmatpush1.msra.mxu0 0.0
    %176 = vmatprep.subr.mxu0 0.0
    %177 = vmatpush1.msra.mxu0 0.0
    %178 = vmatprep.subr.mxu0 0.0
    %179 = vmatpush1.msra.mxu0 0.0
    %180 = vmatprep.subr.mxu0 0.0
    %181 = vmatpush1.msra.mxu0 0.0
    %182 = vmatprep.subr.mxu0 0.0
    %183 = vmatpush1.msra.mxu0 0.0
    %184 = vmatprep.subr.mxu0 0.0
    %185 = vmatpush1.msra.mxu0 0.0
    %186 = vmatprep.subr.mxu0 0.0
    %187 = vmatpush1.msra.mxu0 0.0
    %188 = vmatprep.subr.mxu0 0.0
    %189 = vmatpush1.msra.mxu0 0.0
    %190 = vmatprep.subr.mxu0 0.0
    %191 = vmatpush1.msra.mxu0 0.0
    %192 = vmatprep.subr.mxu0 0.0
    %193 = vmatpush1.msra.mxu0 0.0
    %194 = vmatprep.subr.mxu0 0.0
    %195 = vmatpush1.msra.mxu0 0.0
    %196 = vmatprep.subr.mxu0 0.0
    %197 = vmatpush1.msra.mxu0 0.0
    %198 = vmatprep.subr.mxu0 0.0
    %199 = vmatpush1.msra.mxu0 0.0
    %200 = vmatprep.subr.mxu0 0.0
    %201 = vmatpush1.msra.mxu0 0.0
    %202 = vmatprep.subr.mxu0 0.0
    %203 = vmatpush1.msra.mxu0 0.0
    %204 = vmatprep.subr.mxu0 0.0
    %205 = vmatpush1.msra.mxu0 0.0
    %206 = vmatprep.subr.mxu0 0.0
    %207 = vmatpush1.msra.mxu0 0.0
    %208 = vmatprep.subr.mxu0 0.0
    %209 = vmatpush1.msra.mxu0 0.0
    %210 = vmatprep.subr.mxu0 0.0
    %211 = vmatpush1.msra.mxu0 0.0
    %212 = vmatprep.subr.mxu0 0.0
    %213 = vmatpush1.msra.mxu0 0.0
    %214 = vmatprep.subr.mxu0 0.0
    %215 = vmatpush1.msra.mxu0 0.0
    %216 = vmatprep.subr.mxu0 0.0
    %217 = vmatpush1.msra.mxu0 0.0
    %218 = vmatprep.subr.mxu0 0.0
    %219 = vmatpush1.msra.mxu0 0.0
    %220 = vmatprep.subr.mxu0 0.0
    %221 = vmatpush1.msra.mxu0 0.0
    %222 = vmatprep.subr.mxu0 0.0
    %223 = vmatpush1.msra.mxu0 0.0
    %224 = vmatprep.subr.mxu0 0.0
    %225 = vmatpush1.msra.mxu0 0.0
    %226 = vmatprep.mubr.f32.mxu0 0.0
    %227 = vmatmul.mubr.f32.gmra.mrb[0].mxu0 %v157
    %v228 = vpop.f32.mrb[0].mxu0
    %v229 = vadd.f32 %v154, %v228
    %v230 = vpop.f32.mrb[0].mxu0
    %231 = vmatprep.mubr.f32.mxu0 0.0
    %232 = vmatmul.mubr.f32.gmra.mrb[0].mxu0 %v160
    %v233 = vpop.f32.mrb[0].mxu0
    %v234 = vadd.f32 %v154, %v233
    %v235 = vpop.f32.mrb[0].mxu0
    %236 = vdwg.mxu0
    %v237 = vld [vmem:[%s10] sm:$0xff]
    %v238 = vld [vmem:[%s10 + $0x8] sm:$0xff]
    %v239 = vld [vmem:[%s10 + $0x10] sm:$0xff]
    %v240 = vld [vmem:[%s10 + $0x18] sm:$0xff]
    %v241 = vld [vmem:[%s11] sm:$0x1]
    %v243 = vlaneseq
    %v244 = vshrl.u32 %v243, 7
    %v245 = vsub.s32 0, %v244
    %v246 = vrot.slane %v241, %v245
    %248 = vmatprep.subr.mxu0 0.0
    %249 = vmatpush1.msra.mxu0 %v237
    %250 = vmatprep.subr.mxu0 0.0
    %251 = vmatpush1.msra.mxu0 %v238
    %252 = vmatprep.subr.mxu0 0.0
    %253 = vmatpush1.msra.mxu0 %v239
    %254 = vmatprep.subr.mxu0 0.0
    %255 = vmatpush1.msra.mxu0 %v240
    %256 = vmatprep.subr.mxu0 0.0
    %257 = vmatpush1.msra.mxu0 0.0
    %258 = vmatprep.subr.mxu0 0.0
    %259 = vmatpush1.msra.mxu0 0.0
    %260 = vmatprep.subr.mxu0 0.0
    %261 = vmatpush1.msra.mxu0 0.0
    %262 = vmatprep.subr.mxu0 0.0
    %263 = vmatpush1.msra.mxu0 0.0
    %264 = vmatprep.subr.mxu0 0.0
    %265 = vmatpush1.msra.mxu0 0.0
    %266 = vmatprep.subr.mxu0 0.0
    %267 = vmatpush1.msra.mxu0 0.0
    %268 = vmatprep.subr.mxu0 0.0
    %269 = vmatpush1.msra.mxu0 0.0
    %270 = vmatprep.subr.mxu0 0.0
    %271 = vmatpush1.msra.mxu0 0.0
    %272 = vmatprep.subr.mxu0 0.0
    %273 = vmatpush1.msra.mxu0 0.0
    %274 = vmatprep.subr.mxu0 0.0
    %275 = vmatpush1.msra.mxu0 0.0
    %276 = vmatprep.subr.mxu0 0.0
    %277 = vmatpush1.msra.mxu0 0.0
    %278 = vmatprep.subr.mxu0 0.0
    %279 = vmatpush1.msra.mxu0 0.0
    %280 = vmatprep.subr.mxu0 0.0
    %281 = vmatpush1.msra.mxu0 0.0
    %282 = vmatprep.subr.mxu0 0.0
    %283 = vmatpush1.msra.mxu0 0.0
    %284 = vmatprep.subr.mxu0 0.0
    %285 = vmatpush1.msra.mxu0 0.0
    %286 = vmatprep.subr.mxu0 0.0
    %287 = vmatpush1.msra.mxu0 0.0
    %288 = vmatprep.subr.mxu0 0.0
    %289 = vmatpush1.msra.mxu0 0.0
    %290 = vmatprep.subr.mxu0 0.0
    %291 = vmatpush1.msra.mxu0 0.0
    %292 = vmatprep.subr.mxu0 0.0
    %293 = vmatpush1.msra.mxu0 0.0
    %294 = vmatprep.subr.mxu0 0.0
    %295 = vmatpush1.msra.mxu0 0.0
    %296 = vmatprep.subr.mxu0 0.0
    %297 = vmatpush1.msra.mxu0 0.0
    %298 = vmatprep.subr.mxu0 0.0
    %299 = vmatpush1.msra.mxu0 0.0
    %300 = vmatprep.subr.mxu0 0.0
    %301 = vmatpush1.msra.mxu0 0.0
    %302 = vmatprep.subr.mxu0 0.0
    %303 = vmatpush1.msra.mxu0 0.0
    %304 = vmatprep.subr.mxu0 0.0
    %305 = vmatpush1.msra.mxu0 0.0
    %306 = vmatprep.subr.mxu0 0.0
    %307 = vmatpush1.msra.mxu0 0.0
    %308 = vmatprep.subr.mxu0 0.0
    %309 = vmatpush1.msra.mxu0 0.0
    %310 = vmatprep.subr.mxu0 0.0
    %311 = vmatpush1.msra.mxu0 0.0
    %312 = vmatprep.mubr.f32.mxu0 0.0
    %313 = vmatmul.mubr.f32.gmra.mrb[0].mxu0 %v157
    %v314 = vpop.f32.mrb[0].mxu0
    %v315 = vadd.f32 %v246, %v314
    %v316 = vpop.f32.mrb[0].mxu0
    %317 = vmatprep.mubr.f32.mxu0 0.0
    %318 = vmatmul.mubr.f32.gmra.mrb[0].mxu0 %v160
    %v319 = vpop.f32.mrb[0].mxu0
    %v320 = vadd.f32 %v246, %v319
    %v321 = vpop.f32.mrb[0].mxu0
    %322 = vdwg.mxu0
    %v323 = vld [vmem:[%s12] sm:$0xff]
    %v324 = vld [vmem:[%s12 + $0x8] sm:$0xff]
    %v325 = vld [vmem:[%s12 + $0x10] sm:$0xff]
    %v326 = vld [vmem:[%s12 + $0x18] sm:$0xff]
    %v327 = vld [vmem:[%s13] sm:$0x1]
    %v329 = vlaneseq
    %v330 = vshrl.u32 %v329, 7
    %v331 = vsub.s32 0, %v330
    %v332 = vrot.slane %v327, %v331
    %334 = vmatprep.subr.mxu0 0.0
    %335 = vmatpush1.msra.mxu0 %v323
    %336 = vmatprep.subr.mxu0 0.0
    %337 = vmatpush1.msra.mxu0 %v324
    %338 = vmatprep.subr.mxu0 0.0
    %339 = vmatpush1.msra.mxu0 %v325
    %340 = vmatprep.subr.mxu0 0.0
    %341 = vmatpush1.msra.mxu0 %v326
    %342 = vmatprep.subr.mxu0 0.0
    %343 = vmatpush1.msra.mxu0 0.0
    %344 = vmatprep.subr.mxu0 0.0
    %345 = vmatpush1.msra.mxu0 0.0
    %346 = vmatprep.subr.mxu0 0.0
    %347 = vmatpush1.msra.mxu0 0.0
    %348 = vmatprep.subr.mxu0 0.0
    %349 = vmatpush1.msra.mxu0 0.0
    %350 = vmatprep.subr.mxu0 0.0
    %351 = vmatpush1.msra.mxu0 0.0
    %352 = vmatprep.subr.mxu0 0.0
    %353 = vmatpush1.msra.mxu0 0.0
    %354 = vmatprep.subr.mxu0 0.0
    %355 = vmatpush1.msra.mxu0 0.0
    %356 = vmatprep.subr.mxu0 0.0
    %357 = vmatpush1.msra.mxu0 0.0
    %358 = vmatprep.subr.mxu0 0.0
    %359 = vmatpush1.msra.mxu0 0.0
    %360 = vmatprep.subr.mxu0 0.0
    %361 = vmatpush1.msra.mxu0 0.0
    %362 = vmatprep.subr.mxu0 0.0
    %363 = vmatpush1.msra.mxu0 0.0
    %364 = vmatprep.subr.mxu0 0.0
    %365 = vmatpush1.msra.mxu0 0.0
    %366 = vmatprep.subr.mxu0 0.0
    %367 = vmatpush1.msra.mxu0 0.0
    %368 = vmatprep.subr.mxu0 0.0
    %369 = vmatpush1.msra.mxu0 0.0
    %370 = vmatprep.subr.mxu0 0.0
    %371 = vmatpush1.msra.mxu0 0.0
    %372 = vmatprep.subr.mxu0 0.0
    %373 = vmatpush1.msra.mxu0 0.0
    %374 = vmatprep.subr.mxu0 0.0
    %375 = vmatpush1.msra.mxu0 0.0
    %376 = vmatprep.subr.mxu0 0.0
    %377 = vmatpush1.msra.mxu0 0.0
    %378 = vmatprep.subr.mxu0 0.0
    %379 = vmatpush1.msra.mxu0 0.0
    %380 = vmatprep.subr.mxu0 0.0
    %381 = vmatpush1.msra.mxu0 0.0
    %382 = vmatprep.subr.mxu0 0.0
    %383 = vmatpush1.msra.mxu0 0.0
    %384 = vmatprep.subr.mxu0 0.0
    %385 = vmatpush1.msra.mxu0 0.0
    %386 = vmatprep.subr.mxu0 0.0
    %387 = vmatpush1.msra.mxu0 0.0
    %388 = vmatprep.subr.mxu0 0.0
    %389 = vmatpush1.msra.mxu0 0.0
    %390 = vmatprep.subr.mxu0 0.0
    %391 = vmatpush1.msra.mxu0 0.0
    %392 = vmatprep.subr.mxu0 0.0
    %393 = vmatpush1.msra.mxu0 0.0
    %394 = vmatprep.subr.mxu0 0.0
    %395 = vmatpush1.msra.mxu0 0.0
    %396 = vmatprep.subr.mxu0 0.0
    %397 = vmatpush1.msra.mxu0 0.0
    %398 = vmatprep.mubr.f32.mxu0 0.0
    %399 = vmatmul.mubr.f32.gmra.mrb[0].mxu0 %v157
    %v400 = vpop.f32.mrb[0].mxu0
    %v401 = vadd.f32 %v332, %v400
    %v402 = vpop.f32.mrb[0].mxu0
    %403 = vmatprep.mubr.f32.mxu0 0.0
    %404 = vmatmul.mubr.f32.gmra.mrb[0].mxu0 %v160
    %v405 = vpop.f32.mrb[0].mxu0
    %v406 = vadd.f32 %v332, %v405
    %v407 = vpop.f32.mrb[0].mxu0
    %408 = vdwg.mxu0
    %v409 = vmul.f32 %v315, %v82
    %v410 = vmul.f32 %v315, %v83
    %v411 = vmul.f32 %v315, %v84
    %v412 = vmul.f32 %v315, %v85
    %v413 = vmul.f32 %v320, %v82
    %v414 = vmul.f32 %v320, %v83
    %v415 = vmul.f32 %v320, %v84
    %v416 = vmul.f32 %v320, %v85
    %v417 = vmul.f32 %v401, %v82
    %v418 = vmul.f32 %v401, %v83
    %v419 = vmul.f32 %v401, %v84
    %v420 = vmul.f32 %v401, %v85
    %v421 = vmul.f32 %v406, %v82
    %v422 = vmul.f32 %v406, %v83
    %v423 = vmul.f32 %v406, %v84
    %v424 = vmul.f32 %v406, %v85
    %v426 = vsel %vm97, %v229, 0
    %v429 = vsel %vm97, %v409, 0
    %v432 = vsel %vm97, %v410, 0
    %v435 = vsel %vm97, %v411, 0
    %v438 = vsel %vm97, %v412, 0
    %440 = vmatprep.subr.mxu0 0.0
    %441 = vmatpush1.xpose.msra.mxu0 %v429
    %442 = vmatprep.subr.mxu0 0.0
    %443 = vmatpush1.xpose.msra.mxu0 %v432
    %444 = vmatprep.subr.mxu0 0.0
    %445 = vmatpush1.xpose.msra.mxu0 %v435
    %446 = vmatprep.subr.mxu0 0.0
    %447 = vmatpush1.xpose.msra.mxu0 %v438
    %448 = vmatprep.subr.mxu0 0.0
    %449 = vmatpush1.xpose.msra.mxu0 0.0
    %450 = vmatprep.subr.mxu0 0.0
    %451 = vmatpush1.xpose.msra.mxu0 0.0
    %452 = vmatprep.subr.mxu0 0.0
    %453 = vmatpush1.xpose.msra.mxu0 0.0
    %454 = vmatprep.subr.mxu0 0.0
    %455 = vmatpush1.xpose.msra.mxu0 0.0
    %456 = vmatprep.subr.mxu0 0.0
    %457 = vmatpush1.xpose.msra.mxu0 0.0
    %458 = vmatprep.subr.mxu0 0.0
    %459 = vmatpush1.xpose.msra.mxu0 0.0
    %460 = vmatprep.subr.mxu0 0.0
    %461 = vmatpush1.xpose.msra.mxu0 0.0
    %462 = vmatprep.subr.mxu0 0.0
    %463 = vmatpush1.xpose.msra.mxu0 0.0
    %464 = vmatprep.subr.mxu0 0.0
    %465 = vmatpush1.xpose.msra.mxu0 0.0
    %466 = vmatprep.subr.mxu0 0.0
    %467 = vmatpush1.xpose.msra.mxu0 0.0
    %468 = vmatprep.subr.mxu0 0.0
    %469 = vmatpush1.xpose.msra.mxu0 0.0
    %470 = vmatprep.subr.mxu0 0.0
    %471 = vmatpush1.xpose.msra.mxu0 0.0
    %472 = vmatprep.subr.mxu0 0.0
    %473 = vmatpush1.xpose.msra.mxu0 0.0
    %474 = vmatprep.subr.mxu0 0.0
    %475 = vmatpush1.xpose.msra.mxu0 0.0
    %476 = vmatprep.subr.mxu0 0.0
    %477 = vmatpush1.xpose.msra.mxu0 0.0
    %478 = vmatprep.subr.mxu0 0.0
    %479 = vmatpush1.xpose.msra.mxu0 0.0
    %480 = vmatprep.subr.mxu0 0.0
    %481 = vmatpush1.xpose.msra.mxu0 0.0
    %482 = vmatprep.subr.mxu0 0.0
    %483 = vmatpush1.xpose.msra.mxu0 0.0
    %484 = vmatprep.subr.mxu0 0.0
    %485 = vmatpush1.xpose.msra.mxu0 0.0
    %486 = vmatprep.subr.mxu0 0.0
    %487 = vmatpush1.xpose.msra.mxu0 0.0
    %488 = vmatprep.subr.mxu0 0.0
    %489 = vmatpush1.xpose.msra.mxu0 0.0
    %490 = vmatprep.subr.mxu0 0.0
    %491 = vmatpush1.xpose.msra.mxu0 0.0
    %492 = vmatprep.subr.mxu0 0.0
    %493 = vmatpush1.xpose.msra.mxu0 0.0
    %494 = vmatprep.subr.mxu0 0.0
    %495 = vmatpush1.xpose.msra.mxu0 0.0
    %496 = vmatprep.subr.mxu0 0.0
    %497 = vmatpush1.xpose.msra.mxu0 0.0
    %498 = vmatprep.subr.mxu0 0.0
    %499 = vmatpush1.xpose.msra.mxu0 0.0
    %500 = vmatprep.subr.mxu0 0.0
    %501 = vmatpush1.xpose.msra.mxu0 0.0
    %502 = vmatprep.subr.mxu0 0.0
    %503 = vmatpush1.xpose.msra.mxu0 0.0
    %504 = vmatprep.mubr.f32.mxu0 0.0
    %505 = vmatmul.mubr.f32.gmra.mrb[0].mxu0 %v426
    %v506 = vpop.f32.mrb[0].mxu0
    %v507 = vadd.f32 %v81, %v506
    %v508 = vpop.f32.mrb[0].mxu0
    %509 = vdwg.mxu0
    %v511 = vsel %vm97, %v234, 0
    %v514 = vsel %vm97, %v413, 0
    %v517 = vsel %vm97, %v414, 0
    %v520 = vsel %vm97, %v415, 0
    %v523 = vsel %vm97, %v416, 0
    %525 = vmatprep.subr.mxu0 0.0
    %526 = vmatpush1.xpose.msra.mxu0 %v514
    %527 = vmatprep.subr.mxu0 0.0
    %528 = vmatpush1.xpose.msra.mxu0 %v517
    %529 = vmatprep.subr.mxu0 0.0
    %530 = vmatpush1.xpose.msra.mxu0 %v520
    %531 = vmatprep.subr.mxu0 0.0
    %532 = vmatpush1.xpose.msra.mxu0 %v523
    %533 = vmatprep.subr.mxu0 0.0
    %534 = vmatpush1.xpose.msra.mxu0 0.0
    %535 = vmatprep.subr.mxu0 0.0
    %536 = vmatpush1.xpose.msra.mxu0 0.0
    %537 = vmatprep.subr.mxu0 0.0
    %538 = vmatpush1.xpose.msra.mxu0 0.0
    %539 = vmatprep.subr.mxu0 0.0
    %540 = vmatpush1.xpose.msra.mxu0 0.0
    %541 = vmatprep.subr.mxu0 0.0
    %542 = vmatpush1.xpose.msra.mxu0 0.0
    %543 = vmatprep.subr.mxu0 0.0
    %544 = vmatpush1.xpose.msra.mxu0 0.0
    %545 = vmatprep.subr.mxu0 0.0
    %546 = vmatpush1.xpose.msra.mxu0 0.0
    %547 = vmatprep.subr.mxu0 0.0
    %548 = vmatpush1.xpose.msra.mxu0 0.0
    %549 = vmatprep.subr.mxu0 0.0
    %550 = vmatpush1.xpose.msra.mxu0 0.0
    %551 = vmatprep.subr.mxu0 0.0
    %552 = vmatpush1.xpose.msra.mxu0 0.0
    %553 = vmatprep.subr.mxu0 0.0
    %554 = vmatpush1.xpose.msra.mxu0 0.0
    %555 = vmatprep.subr.mxu0 0.0
    %556 = vmatpush1.xpose.msra.mxu0 0.0
    %557 = vmatprep.subr.mxu0 0.0
    %558 = vmatpush1.xpose.msra.mxu0 0.0
    %559 = vmatprep.subr.mxu0 0.0
    %560 = vmatpush1.xpose.msra.mxu0 0.0
    %561 = vmatprep.subr.mxu0 0.0
    %562 = vmatpush1.xpose.msra.mxu0 0.0
    %563 = vmatprep.subr.mxu0 0.0
    %564 = vmatpush1.xpose.msra.mxu0 0.0
    %565 = vmatprep.subr.mxu0 0.0
    %566 = vmatpush1.xpose.msra.mxu0 0.0
    %567 = vmatprep.subr.mxu0 0.0
    %568 = vmatpush1.xpose.msra.mxu0 0.0
    %569 = vmatprep.subr.mxu0 0.0
    %570 = vmatpush1.xpose.msra.mxu0 0.0
    %571 = vmatprep.subr.mxu0 0.0
    %572 = vmatpush1.xpose.msra.mxu0 0.0
    %573 = vmatprep.subr.mxu0 0.0
    %574 = vmatpush1.xpose.msra.mxu0 0.0
    %575 = vmatprep.subr.mxu0 0.0
    %576 = vmatpush1.xpose.msra.mxu0 0.0
    %577 = vmatprep.subr.mxu0 0.0
    %578 = vmatpush1.xpose.msra.mxu0 0.0
    %579 = vmatprep.subr.mxu0 0.0
    %580 = vmatpush1.xpose.msra.mxu0 0.0
    %581 = vmatprep.subr.mxu0 0.0
    %582 = vmatpush1.xpose.msra.mxu0 0.0
    %583 = vmatprep.subr.mxu0 0.0
    %584 = vmatpush1.xpose.msra.mxu0 0.0
    %585 = vmatprep.subr.mxu0 0.0
    %586 = vmatpush1.xpose.msra.mxu0 0.0
    %587 = vmatprep.subr.mxu0 0.0
    %588 = vmatpush1.xpose.msra.mxu0 0.0
    %589 = vmatprep.mubr.f32.mxu0 0.0
    %590 = vmatmul.mubr.f32.gmra.mrb[0].mxu0 %v511
    %v591 = vpop.f32.mrb[0].mxu0
    %v592 = vadd.f32 %v81, %v591
    %v593 = vpop.f32.mrb[0].mxu0
    %594 = vdwg.mxu0
    %v595 = vsel %vm97, %v507, -inf
    %596 = vmax.xlane.f32.xlu0 %v595
    %v597 = vpop.xlane.xlu0 %596
    %v598 = vsel %vm97, %v592, -inf
    %599 = vmax.xlane.f32.xlu0 %v598
    %v600 = vpop.xlane.xlu0 %599
    %v601 = vsub.f32 %v507, %v597
    %v602 = vsub.f32 %v592, %v600
    %v603 = vmul.f32 %v601, 1.442695
    %v604 = vpow.pop %v603
    %v605 = vmul.f32 %v602, 1.442695
    %v606 = vpow.pop %v605
    %v608 = vsel %vm97, %v604, 0
    %v611 = vsel %vm97, %v606, 0
    %613 = vmatprep.subr.mxu0 0.0
    %614 = vmatpush1.msra.mxu0 %v86
    %615 = vmatprep.subr.mxu0 0.0
    %616 = vmatpush1.msra.mxu0 %v87
    %617 = vmatprep.subr.mxu0 0.0
    %618 = vmatpush1.msra.mxu0 %v88
    %619 = vmatprep.subr.mxu0 0.0
    %620 = vmatpush1.msra.mxu0 %v89
    %621 = vmatprep.subr.mxu0 0.0
    %622 = vmatpush1.msra.mxu0 0.0
    %623 = vmatprep.subr.mxu0 0.0
    %624 = vmatpush1.msra.mxu0 0.0
    %625 = vmatprep.subr.mxu0 0.0
    %626 = vmatpush1.msra.mxu0 0.0
    %627 = vmatprep.subr.mxu0 0.0
    %628 = vmatpush1.msra.mxu0 0.0
    %629 = vmatprep.subr.mxu0 0.0
    %630 = vmatpush1.msra.mxu0 0.0
    %631 = vmatprep.subr.mxu0 0.0
    %632 = vmatpush1.msra.mxu0 0.0
    %633 = vmatprep.subr.mxu0 0.0
    %634 = vmatpush1.msra.mxu0 0.0
    %635 = vmatprep.subr.mxu0 0.0
    %636 = vmatpush1.msra.mxu0 0.0
    %637 = vmatprep.subr.mxu0 0.0
    %638 = vmatpush1.msra.mxu0 0.0
    %639 = vmatprep.subr.mxu0 0.0
    %640 = vmatpush1.msra.mxu0 0.0
    %641 = vmatprep.subr.mxu0 0.0
    %642 = vmatpush1.msra.mxu0 0.0
    %643 = vmatprep.subr.mxu0 0.0
    %644 = vmatpush1.msra.mxu0 0.0
    %645 = vmatprep.subr.mxu0 0.0
    %646 = vmatpush1.msra.mxu0 0.0
    %647 = vmatprep.subr.mxu0 0.0
    %648 = vmatpush1.msra.mxu0 0.0
    %649 = vmatprep.subr.mxu0 0.0
    %650 = vmatpush1.msra.mxu0 0.0
    %651 = vmatprep.subr.mxu0 0.0
    %652 = vmatpush1.msra.mxu0 0.0
    %653 = vmatprep.subr.mxu0 0.0
    %654 = vmatpush1.msra.mxu0 0.0
    %655 = vmatprep.subr.mxu0 0.0
    %656 = vmatpush1.msra.mxu0 0.0
    %657 = vmatprep.subr.mxu0 0.0
    %658 = vmatpush1.msra.mxu0 0.0
    %659 = vmatprep.subr.mxu0 0.0
    %660 = vmatpush1.msra.mxu0 0.0
    %661 = vmatprep.subr.mxu0 0.0
    %662 = vmatpush1.msra.mxu0 0.0
    %663 = vmatprep.subr.mxu0 0.0
    %664 = vmatpush1.msra.mxu0 0.0
    %665 = vmatprep.subr.mxu0 0.0
    %666 = vmatpush1.msra.mxu0 0.0
    %667 = vmatprep.subr.mxu0 0.0
    %668 = vmatpush1.msra.mxu0 0.0
    %669 = vmatprep.subr.mxu0 0.0
    %670 = vmatpush1.msra.mxu0 0.0
    %671 = vmatprep.subr.mxu0 0.0
    %672 = vmatpush1.msra.mxu0 0.0
    %673 = vmatprep.subr.mxu0 0.0
    %674 = vmatpush1.msra.mxu0 0.0
    %675 = vmatprep.subr.mxu0 0.0
    %676 = vmatpush1.msra.mxu0 0.0
    %677 = vmatprep.mubr.f32.mxu0 0.0
    %678 = vmatmul.mubr.f32.gmra.mrb[0].mxu0 %v608
    %v679 = vpop.f32.mrb[0].mxu0
    %v680 = vadd.f32 0.0, %v679
    %v681 = vpop.f32.mrb[0].mxu0
    %682 = vmatprep.mubr.f32.mxu0 0.0
    %683 = vmatmul.mubr.f32.gmra.mrb[0].mxu0 %v611
    %v684 = vpop.f32.mrb[0].mxu0
    %v685 = vadd.f32 0.0, %v684
    %v686 = vpop.f32.mrb[0].mxu0
    %687 = vdwg.mxu0
    %v688 = vrcp.pop %v680
    %v689 = vmul.f32 %v604, %v688
    %v690 = vrcp.pop %v685
    %v691 = vmul.f32 %v606, %v690
    %v693 = vsel %vm97, %v689, 0
    %695 = vmatprep.subr.mxu0 0.0
    %696 = vmatpush1.msra.mxu0 %v417
    %697 = vmatprep.subr.mxu0 0.0
    %698 = vmatpush1.msra.mxu0 %v418
    %699 = vmatprep.subr.mxu0 0.0
    %700 = vmatpush1.msra.mxu0 %v419
    %701 = vmatprep.subr.mxu0 0.0
    %702 = vmatpush1.msra.mxu0 %v420
    %703 = vmatprep.subr.mxu0 0.0
    %704 = vmatpush1.msra.mxu0 0.0
    %705 = vmatprep.subr.mxu0 0.0
    %706 = vmatpush1.msra.mxu0 0.0
    %707 = vmatprep.subr.mxu0 0.0
    %708 = vmatpush1.msra.mxu0 0.0
    %709 = vmatprep.subr.mxu0 0.0
    %710 = vmatpush1.msra.mxu0 0.0
    %711 = vmatprep.subr.mxu0 0.0
    %712 = vmatpush1.msra.mxu0 0.0
    %713 = vmatprep.subr.mxu0 0.0
    %714 = vmatpush1.msra.mxu0 0.0
    %715 = vmatprep.subr.mxu0 0.0
    %716 = vmatpush1.msra.mxu0 0.0
    %717 = vmatprep.subr.mxu0 0.0
    %718 = vmatpush1.msra.mxu0 0.0
    %719 = vmatprep.subr.mxu0 0.0
    %720 = vmatpush1.msra.mxu0 0.0
    %721 = vmatprep.subr.mxu0 0.0
    %722 = vmatpush1.msra.mxu0 0.0
    %723 = vmatprep.subr.mxu0 0.0
    %724 = vmatpush1.msra.mxu0 0.0
    %725 = vmatprep.subr.mxu0 0.0
    %726 = vmatpush1.msra.mxu0 0.0
    %727 = vmatprep.subr.mxu0 0.0
    %728 = vmatpush1.msra.mxu0 0.0
    %729 = vmatprep.subr.mxu0 0.0
    %730 = vmatpush1.msra.mxu0 0.0
    %731 = vmatprep.subr.mxu0 0.0
    %732 = vmatpush1.msra.mxu0 0.0
    %733 = vmatprep.subr.mxu0 0.0
    %734 = vmatpush1.msra.mxu0 0.0
    %735 = vmatprep.subr.mxu0 0.0
    %736 = vmatpush1.msra.mxu0 0.0
    %737 = vmatprep.subr.mxu0 0.0
    %738 = vmatpush1.msra.mxu0 0.0
    %739 = vmatprep.subr.mxu0 0.0
    %740 = vmatpush1.msra.mxu0 0.0
    %741 = vmatprep.subr.mxu0 0.0
    %742 = vmatpush1.msra.mxu0 0.0
    %743 = vmatprep.subr.mxu0 0.0
    %744 = vmatpush1.msra.mxu0 0.0
    %745 = vmatprep.subr.mxu0 0.0
    %746 = vmatpush1.msra.mxu0 0.0
    %747 = vmatprep.subr.mxu0 0.0
    %748 = vmatpush1.msra.mxu0 0.0
    %749 = vmatprep.subr.mxu0 0.0
    %750 = vmatpush1.msra.mxu0 0.0
    %751 = vmatprep.subr.mxu0 0.0
    %752 = vmatpush1.msra.mxu0 0.0
    %753 = vmatprep.subr.mxu0 0.0
    %754 = vmatpush1.msra.mxu0 0.0
    %755 = vmatprep.subr.mxu0 0.0
    %756 = vmatpush1.msra.mxu0 0.0
    %757 = vmatprep.subr.mxu0 0.0
    %758 = vmatpush1.msra.mxu0 0.0
    %759 = vmatprep.mubr.f32.mxu0 0.0
    %760 = vmatmul.mubr.f32.gmra.mrb[0].mxu0 %v693
    %v761 = vpop.f32.mrb[0].mxu0
    %v762 = vadd.f32 0.0, %v761
    %v763 = vpop.f32.mrb[0].mxu0
    %764 = vdwg.mxu0
    %v766 = vsel %vm97, %v691, 0
    %768 = vmatprep.subr.mxu0 0.0
    %769 = vmatpush1.msra.mxu0 %v421
    %770 = vmatprep.subr.mxu0 0.0
    %771 = vmatpush1.msra.mxu0 %v422
    %772 = vmatprep.subr.mxu0 0.0
    %773 = vmatpush1.msra.mxu0 %v423
    %774 = vmatprep.subr.mxu0 0.0
    %775 = vmatpush1.msra.mxu0 %v424
    %776 = vmatprep.subr.mxu0 0.0
    %777 = vmatpush1.msra.mxu0 0.0
    %778 = vmatprep.subr.mxu0 0.0
    %779 = vmatpush1.msra.mxu0 0.0
    %780 = vmatprep.subr.mxu0 0.0
    %781 = vmatpush1.msra.mxu0 0.0
    %782 = vmatprep.subr.mxu0 0.0
    %783 = vmatpush1.msra.mxu0 0.0
    %784 = vmatprep.subr.mxu0 0.0
    %785 = vmatpush1.msra.mxu0 0.0
    %786 = vmatprep.subr.mxu0 0.0
    %787 = vmatpush1.msra.mxu0 0.0
    %788 = vmatprep.subr.mxu0 0.0
    %789 = vmatpush1.msra.mxu0 0.0
    %790 = vmatprep.subr.mxu0 0.0
    %791 = vmatpush1.msra.mxu0 0.0
    %792 = vmatprep.subr.mxu0 0.0
    %793 = vmatpush1.msra.mxu0 0.0
    %794 = vmatprep.subr.mxu0 0.0
    %795 = vmatpush1.msra.mxu0 0.0
    %796 = vmatprep.subr.mxu0 0.0
    %797 = vmatpush1.msra.mxu0 0.0
    %798 = vmatprep.subr.mxu0 0.0
    %799 = vmatpush1.msra.mxu0 0.0
    %800 = vmatprep.subr.mxu0 0.0
    %801 = vmatpush1.msra.mxu0 0.0
    %802 = vmatprep.subr.mxu0 0.0
    %803 = vmatpush1.msra.mxu0 0.0
    %804 = vmatprep.subr.mxu0 0.0
    %805 = vmatpush1.msra.mxu0 0.0
    %806 = vmatprep.subr.mxu0 0.0
    %807 = vmatpush1.msra.mxu0 0.0
    %808 = vmatprep.subr.mxu0 0.0
    %809 = vmatpush1.msra.mxu0 0.0
    %810 = vmatprep.subr.mxu0 0.0
    %811 = vmatpush1.msra.mxu0 0.0
    %812 = vmatprep.subr.mxu0 0.0
    %813 = vmatpush1.msra.mxu0 0.0
    %814 = vmatprep.subr.mxu0 0.0
    %815 = vmatpush1.msra.mxu0 0.0
    %816 = vmatprep.subr.mxu0 0.0
    %817 = vmatpush1.msra.mxu0 0.0
    %818 = vmatprep.subr.mxu0 0.0
    %819 = vmatpush1.msra.mxu0 0.0
    %820 = vmatprep.subr.mxu0 0.0
    %821 = vmatpush1.msra.mxu0 0.0
    %822 = vmatprep.subr.mxu0 0.0
    %823 = vmatpush1.msra.mxu0 0.0
    %824 = vmatprep.subr.mxu0 0.0
    %825 = vmatpush1.msra.mxu0 0.0
    %826 = vmatprep.subr.mxu0 0.0
    %827 = vmatpush1.msra.mxu0 0.0
    %828 = vmatprep.subr.mxu0 0.0
    %829 = vmatpush1.msra.mxu0 0.0
    %830 = vmatprep.subr.mxu0 0.0
    %831 = vmatpush1.msra.mxu0 0.0
    %832 = vmatprep.mubr.f32.mxu0 0.0
    %833 = vmatmul.mubr.f32.gmra.mrb[0].mxu0 %v766
    %v834 = vpop.f32.mrb[0].mxu0
    %v835 = vadd.f32 0.0, %v834
    %v836 = vpop.f32.mrb[0].mxu0
    %837 = vdwg.mxu0
    %v838 = vld [vmem:[%s14] sm:$0xff]
    %v839 = vld [vmem:[%s14 + $0x8] sm:$0xff]
    %v840 = vld [vmem:[%s14 + $0x10] sm:$0xff]
    %v841 = vld [vmem:[%s14 + $0x18] sm:$0xff]
    %v843 = vsel %vm97, %v762, 0
    %v846 = vsel %vm97, %v835, 0
    %848 = vmatprep.subr.mxu0 0.0
    %849 = vmatpush1.msra.mxu0 %v838
    %850 = vmatprep.subr.mxu0 0.0
    %851 = vmatpush1.msra.mxu0 %v839
    %852 = vmatprep.subr.mxu0 0.0
    %853 = vmatpush1.msra.mxu0 %v840
    %854 = vmatprep.subr.mxu0 0.0
    %855 = vmatpush1.msra.mxu0 %v841
    %856 = vmatprep.subr.mxu0 0.0
    %857 = vmatpush1.msra.mxu0 0.0
    %858 = vmatprep.subr.mxu0 0.0
    %859 = vmatpush1.msra.mxu0 0.0
    %860 = vmatprep.subr.mxu0 0.0
    %861 = vmatpush1.msra.mxu0 0.0
    %862 = vmatprep.subr.mxu0 0.0
    %863 = vmatpush1.msra.mxu0 0.0
    %864 = vmatprep.subr.mxu0 0.0
    %865 = vmatpush1.msra.mxu0 0.0
    %866 = vmatprep.subr.mxu0 0.0
    %867 = vmatpush1.msra.mxu0 0.0
    %868 = vmatprep.subr.mxu0 0.0
    %869 = vmatpush1.msra.mxu0 0.0
    %870 = vmatprep.subr.mxu0 0.0
    %871 = vmatpush1.msra.mxu0 0.0
    %872 = vmatprep.subr.mxu0 0.0
    %873 = vmatpush1.msra.mxu0 0.0
    %874 = vmatprep.subr.mxu0 0.0
    %875 = vmatpush1.msra.mxu0 0.0
    %876 = vmatprep.subr.mxu0 0.0
    %877 = vmatpush1.msra.mxu0 0.0
    %878 = vmatprep.subr.mxu0 0.0
    %879 = vmatpush1.msra.mxu0 0.0
    %880 = vmatprep.subr.mxu0 0.0
    %881 = vmatpush1.msra.mxu0 0.0
    %882 = vmatprep.subr.mxu0 0.0
    %883 = vmatpush1.msra.mxu0 0.0
    %884 = vmatprep.subr.mxu0 0.0
    %885 = vmatpush1.msra.mxu0 0.0
    %886 = vmatprep.subr.mxu0 0.0
    %887 = vmatpush1.msra.mxu0 0.0
    %888 = vmatprep.subr.mxu0 0.0
    %889 = vmatpush1.msra.mxu0 0.0
    %890 = vmatprep.subr.mxu0 0.0
    %891 = vmatpush1.msra.mxu0 0.0
    %892 = vmatprep.subr.mxu0 0.0
    %893 = vmatpush1.msra.mxu0 0.0
    %894 = vmatprep.subr.mxu0 0.0
    %895 = vmatpush1.msra.mxu0 0.0
    %896 = vmatprep.subr.mxu0 0.0
    %897 = vmatpush1.msra.mxu0 0.0
    %898 = vmatprep.subr.mxu0 0.0
    %899 = vmatpush1.msra.mxu0 0.0
    %900 = vmatprep.subr.mxu0 0.0
    %901 = vmatpush1.msra.mxu0 0.0
    %902 = vmatprep.subr.mxu0 0.0
    %903 = vmatpush1.msra.mxu0 0.0
    %904 = vmatprep.subr.mxu0 0.0
    %905 = vmatpush1.msra.mxu0 0.0
    %906 = vmatprep.subr.mxu0 0.0
    %907 = vmatpush1.msra.mxu0 0.0
    %908 = vmatprep.subr.mxu0 0.0
    %909 = vmatpush1.msra.mxu0 0.0
    %910 = vmatprep.subr.mxu0 0.0
    %911 = vmatpush1.msra.mxu0 0.0
    %912 = vmatprep.mubr.f32.mxu0 0.0
    %913 = vmatmul.mubr.f32.gmra.mrb[0].mxu0 %v843
    %v914 = vpop.f32.mrb[0].mxu0
    %v915 = vadd.f32 0.0, %v914
    %v916 = vpop.f32.mrb[0].mxu0
    %917 = vmatprep.mubr.f32.mxu0 0.0
    %918 = vmatmul.mubr.f32.gmra.mrb[0].mxu0 %v846
    %v919 = vpop.f32.mrb[0].mxu0
    %v920 = vadd.f32 0.0, %v919
    %v921 = vpop.f32.mrb[0].mxu0
    %922 = vdwg.mxu0
    %v923 = vadd.f32 %v93, %v915
    %v924 = vadd.f32 %v94, %v920
    %v925 = vld [vmem:[%s15] sm:$0x1]
    %v927 = vlaneseq
    %v928 = vshrl.u32 %v927, 7
    %v929 = vsub.s32 0, %v928
    %v930 = vrot.slane %v925, %v929
    %v932 = vadd.f32 %v923, %v930
    %v933 = vadd.f32 %v924, %v930
    %v934 = vld [vmem:[%s16] sm:$0x1]
    %v935 = vld [vmem:[%s17] sm:$0x1]
    %v936 = vsel %vm97, %v932, 0.0
    %937 = vadd.xlane.f32.xlu0 %v936
    %v938 = vpop.xlane.xlu0 %937
    %v939 = vsel %vm97, %v933, 0.0
    %940 = vadd.xlane.f32.xlu0 %v939
    %v941 = vpop.xlane.xlu0 %940
    %v942 = vmul.f32 %v938, %v104
    %v943 = vmul.f32 %v941, %v104
    %v944 = vmul.f32 %v932, %v932
    %v945 = vmul.f32 %v933, %v933
    %v946 = vsel %vm97, %v944, 0.0
    %947 = vadd.xlane.f32.xlu0 %v946
    %v948 = vpop.xlane.xlu0 %947
    %v949 = vsel %vm97, %v945, 0.0
    %950 = vadd.xlane.f32.xlu0 %v949
    %v951 = vpop.xlane.xlu0 %950
    %v952 = vmul.f32 %v948, %v104
    %v953 = vmul.f32 %v951, %v104
    %v954 = vmul.f32 %v942, %v942
    %v955 = vmul.f32 %v943, %v943
    %v956 = vsub.f32 %v952, %v954
    %v957 = vsub.f32 %v953, %v955
    %v958 = vsub.f32 %v932, %v942
    %v959 = vsub.f32 %v933, %v943
    %v960 = vadd.f32 %v956, 1e-05
    %v961 = vadd.f32 %v957, 1e-05
    %v962 = vrsqrt.pop %v960
    %v963 = vrsqrt.pop %v961
    %v964 = vmul.f32 %v958, %v962
    %v965 = vmul.f32 %v959, %v963
    %v967 = vlaneseq
    %v968 = vshrl.u32 %v967, 7
    %v969 = vsub.s32 0, %v968
    %v970 = vrot.slane %v934, %v969
    %v972 = vmul.f32 %v964, %v970
    %v973 = vmul.f32 %v965, %v970
    %v975 = vlaneseq
    %v976 = vshrl.u32 %v975, 7
    %v977 = vsub.s32 0, %v976
    %v978 = vrot.slane %v935, %v977
    %v980 = vadd.f32 %v972, %v978
    %v981 = vadd.f32 %v973, %v978
    %v982 = vld [vmem:[%s18] sm:$0xff]
    %v983 = vld [vmem:[%s18 + $0x8] sm:$0xff]
    %v984 = vld [vmem:[%s18 + $0x10] sm:$0xff]
    %v985 = vld [vmem:[%s18 + $0x18] sm:$0xff]
    %v986 = vld [vmem:[%s19] sm:$0x1]
    %v988 = vlaneseq
    %v989 = vshrl.u32 %v988, 7
    %v990 = vsub.s32 0, %v989
    %v991 = vrot.slane %v986, %v990
    %v994 = vsel %vm97, %v980, 0
    %v997 = vsel %vm97, %v981, 0
    %999 = vmatprep.subr.mxu0 0.0
    %1000 = vmatpush1.msra.mxu0 %v982
    %1001 = vmatprep.subr.mxu0 0.0
    %1002 = vmatpush1.msra.mxu0 %v983
    %1003 = vmatprep.subr.mxu0 0.0
    %1004 = vmatpush1.msra.mxu0 %v984
    %1005 = vmatprep.subr.mxu0 0.0
    %1006 = vmatpush1.msra.mxu0 %v985
    %1007 = vmatprep.subr.mxu0 0.0
    %1008 = vmatpush1.msra.mxu0 0.0
    %1009 = vmatprep.subr.mxu0 0.0
    %1010 = vmatpush1.msra.mxu0 0.0
    %1011 = vmatprep.subr.mxu0 0.0
    %1012 = vmatpush1.msra.mxu0 0.0
    %1013 = vmatprep.subr.mxu0 0.0
    %1014 = vmatpush1.msra.mxu0 0.0
    %1015 = vmatprep.subr.mxu0 0.0
    %1016 = vmatpush1.msra.mxu0 0.0
    %1017 = vmatprep.subr.mxu0 0.0
    %1018 = vmatpush1.msra.mxu0 0.0
    %1019 = vmatprep.subr.mxu0 0.0
    %1020 = vmatpush1.msra.mxu0 0.0
    %1021 = vmatprep.subr.mxu0 0.0
    %1022 = vmatpush1.msra.mxu0 0.0
    %1023 = vmatprep.subr.mxu0 0.0
    %1024 = vmatpush1.msra.mxu0 0.0
    %1025 = vmatprep.subr.mxu0 0.0
    %1026 = vmatpush1.msra.mxu0 0.0
    %1027 = vmatprep.subr.mxu0 0.0
    %1028 = vmatpush1.msra.mxu0 0.0
    %1029 = vmatprep.subr.mxu0 0.0
    %1030 = vmatpush1.msra.mxu0 0.0
    %1031 = vmatprep.subr.mxu0 0.0
    %1032 = vmatpush1.msra.mxu0 0.0
    %1033 = vmatprep.subr.mxu0 0.0
    %1034 = vmatpush1.msra.mxu0 0.0
    %1035 = vmatprep.subr.mxu0 0.0
    %1036 = vmatpush1.msra.mxu0 0.0
    %1037 = vmatprep.subr.mxu0 0.0
    %1038 = vmatpush1.msra.mxu0 0.0
    %1039 = vmatprep.subr.mxu0 0.0
    %1040 = vmatpush1.msra.mxu0 0.0
    %1041 = vmatprep.subr.mxu0 0.0
    %1042 = vmatpush1.msra.mxu0 0.0
    %1043 = vmatprep.subr.mxu0 0.0
    %1044 = vmatpush1.msra.mxu0 0.0
    %1045 = vmatprep.subr.mxu0 0.0
    %1046 = vmatpush1.msra.mxu0 0.0
    %1047 = vmatprep.subr.mxu0 0.0
    %1048 = vmatpush1.msra.mxu0 0.0
    %1049 = vmatprep.subr.mxu0 0.0
    %1050 = vmatpush1.msra.mxu0 0.0
    %1051 = vmatprep.subr.mxu0 0.0
    %1052 = vmatpush1.msra.mxu0 0.0
    %1053 = vmatprep.subr.mxu0 0.0
    %1054 = vmatpush1.msra.mxu0 0.0
    %1055 = vmatprep.subr.mxu0 0.0
    %1056 = vmatpush1.msra.mxu0 0.0
    %1057 = vmatprep.subr.mxu0 0.0
    %1058 = vmatpush1.msra.mxu0 0.0
    %1059 = vmatprep.subr.mxu0 0.0
    %1060 = vmatpush1.msra.mxu0 0.0
    %1061 = vmatprep.subr.mxu0 0.0
    %1062 = vmatpush1.msra.mxu0 0.0
    %1063 = vmatprep.mubr.f32.mxu0 0.0
    %1064 = vmatmul.mubr.f32.gmra.mrb[0].mxu0 %v994
    %v1065 = vpop.f32.mrb[0].mxu0
    %v1066 = vadd.f32 %v991, %v1065
    %v1067 = vpop.f32.mrb[0].mxu0
    %1068 = vmatprep.mubr.f32.mxu0 0.0
    %1069 = vmatmul.mubr.f32.gmra.mrb[0].mxu0 %v997
    %v1070 = vpop.f32.mrb[0].mxu0
    %v1071 = vadd.f32 %v991, %v1070
    %v1072 = vpop.f32.mrb[0].mxu0
    %1073 = vdwg.mxu0
    %v1074 = vmul.f32 %v1066, 1.702
    %v1075 = vmul.f32 %v1071, 1.702
    %v1076 = vxor.u32 %v1074, 2147483648
    %v1077 = vxor.u32 %v1075, 2147483648
    %v1078 = vmul.f32 %v1076, 1.442695
    %v1079 = vpow.pop %v1078
    %v1080 = vmul.f32 %v1077, 1.442695
    %v1081 = vpow.pop %v1080
    %v1082 = vadd.f32 %v1079, 1.0
    %v1083 = vadd.f32 %v1081, 1.0
    %v1084 = vrcp.pop %v1082
    %v1085 = vmul.f32 1.0, %v1084
    %v1086 = vrcp.pop %v1083
    %v1087 = vmul.f32 1.0, %v1086
    %v1088 = vmul.f32 %v1066, %v1085
    %v1089 = vmul.f32 %v1071, %v1087
    %v1090 = vld [vmem:[%s20] sm:$0xff]
    %v1091 = vld [vmem:[%s20 + $0x8] sm:$0xff]
    %v1092 = vld [vmem:[%s20 + $0x10] sm:$0xff]
    %v1093 = vld [vmem:[%s20 + $0x18] sm:$0xff]
    %v1094 = vld [vmem:[%s20 + $0x20] sm:$0xff]
    %v1095 = vld [vmem:[%s20 + $0x28] sm:$0xff]
    %v1096 = vld [vmem:[%s20 + $0x30] sm:$0xff]
    %v1097 = vld [vmem:[%s20 + $0x38] sm:$0xff]
    %v1098 = vld [vmem:[%s20 + $0x40] sm:$0xff]
    %v1099 = vld [vmem:[%s20 + $0x48] sm:$0xff]
    %v1100 = vld [vmem:[%s20 + $0x50] sm:$0xff]
    %v1101 = vld [vmem:[%s20 + $0x58] sm:$0xff]
    %v1102 = vld [vmem:[%s20 + $0x60] sm:$0xff]
    %v1103 = vld [vmem:[%s20 + $0x68] sm:$0xff]
    %v1104 = vld [vmem:[%s20 + $0x70] sm:$0xff]
    %v1105 = vld [vmem:[%s20 + $0x78] sm:$0xff]
    %1106 = vmatprep.subr.mxu0 0.0
    %1107 = vmatpush1.msra.mxu0 %v1090
    %1108 = vmatprep.subr.mxu0 0.0
    %1109 = vmatpush1.msra.mxu0 %v1091
    %1110 = vmatprep.subr.mxu0 0.0
    %1111 = vmatpush1.msra.mxu0 %v1092
    %1112 = vmatprep.subr.mxu0 0.0
    %1113 = vmatpush1.msra.mxu0 %v1093
    %1114 = vmatprep.subr.mxu0 0.0
    %1115 = vmatpush1.msra.mxu0 %v1094
    %1116 = vmatprep.subr.mxu0 0.0
    %1117 = vmatpush1.msra.mxu0 %v1095
    %1118 = vmatprep.subr.mxu0 0.0
    %1119 = vmatpush1.msra.mxu0 %v1096
    %1120 = vmatprep.subr.mxu0 0.0
    %1121 = vmatpush1.msra.mxu0 %v1097
    %1122 = vmatprep.subr.mxu0 0.0
    %1123 = vmatpush1.msra.mxu0 %v1098
    %1124 = vmatprep.subr.mxu0 0.0
    %1125 = vmatpush1.msra.mxu0 %v1099
    %1126 = vmatprep.subr.mxu0 0.0
    %1127 = vmatpush1.msra.mxu0 %v1100
    %1128 = vmatprep.subr.mxu0 0.0
    %1129 = vmatpush1.msra.mxu0 %v1101
    %1130 = vmatprep.subr.mxu0 0.0
    %1131 = vmatpush1.msra.mxu0 %v1102
    %1132 = vmatprep.subr.mxu0 0.0
    %1133 = vmatpush1.msra.mxu0 %v1103
    %1134 = vmatprep.subr.mxu0 0.0
    %1135 = vmatpush1.msra.mxu0 %v1104
    %1136 = vmatprep.subr.mxu0 0.0
    %1137 = vmatpush1.msra.mxu0 %v1105
    %1138 = vmatprep.subr.mxu0 0.0
    %1139 = vmatpush1.msra.mxu0 0.0
    %1140 = vmatprep.subr.mxu0 0.0
    %1141 = vmatpush1.msra.mxu0 0.0
    %1142 = vmatprep.subr.mxu0 0.0
    %1143 = vmatpush1.msra.mxu0 0.0
    %1144 = vmatprep.subr.mxu0 0.0
    %1145 = vmatpush1.msra.mxu0 0.0
    %1146 = vmatprep.subr.mxu0 0.0
    %1147 = vmatpush1.msra.mxu0 0.0
    %1148 = vmatprep.subr.mxu0 0.0
    %1149 = vmatpush1.msra.mxu0 0.0
    %1150 = vmatprep.subr.mxu0 0.0
    %1151 = vmatpush1.msra.mxu0 0.0
    %1152 = vmatprep.subr.mxu0 0.0
    %1153 = vmatpush1.msra.mxu0 0.0
    %1154 = vmatprep.subr.mxu0 0.0
    %1155 = vmatpush1.msra.mxu0 0.0
    %1156 = vmatprep.subr.mxu0 0.0
    %1157 = vmatpush1.msra.mxu0 0.0
    %1158 = vmatprep.subr.mxu0 0.0
    %1159 = vmatpush1.msra.mxu0 0.0
    %1160 = vmatprep.subr.mxu0 0.0
    %1161 = vmatpush1.msra.mxu0 0.0
    %1162 = vmatprep.subr.mxu0 0.0
    %1163 = vmatpush1.msra.mxu0 0.0
    %1164 = vmatprep.subr.mxu0 0.0
    %1165 = vmatpush1.msra.mxu0 0.0
    %1166 = vmatprep.subr.mxu0 0.0
    %1167 = vmatpush1.msra.mxu0 0.0
    %1168 = vmatprep.subr.mxu0 0.0
    %1169 = vmatpush1.msra.mxu0 0.0
    %1170 = vmatprep.mubr.f32.mxu0 0.0
    %1171 = vmatmul.mubr.f32.gmra.mrb[0].mxu0 %v1088
    %v1172 = vpop.f32.mrb[0].mxu0
    %v1173 = vadd.f32 0.0, %v1172
    %v1174 = vpop.f32.mrb[0].mxu0
    %1175 = vmatprep.mubr.f32.mxu0 0.0
    %1176 = vmatmul.mubr.f32.gmra.mrb[0].mxu0 %v1089
    %v1177 = vpop.f32.mrb[0].mxu0
    %v1178 = vadd.f32 0.0, %v1177
    %v1179 = vpop.f32.mrb[0].mxu0
    %1180 = vdwg.mxu0
    %v1181 = vadd.f32 %v932, %v1173
    %v1182 = vadd.f32 %v933, %v1178
    %v1183 = vld [vmem:[%s21] sm:$0x1]
    %v1185 = vlaneseq
    %v1186 = vshrl.u32 %v1185, 7
    %v1187 = vsub.s32 0, %v1186
    %v1188 = vrot.slane %v1183, %v1187
    %v1190 = vadd.f32 %v1181, %v1188
    %v1191 = vadd.f32 %v1182, %v1188
    %s1192 = scalar_lea.vmem %s6, 1
    %v1193 = vld [vmem:[%s1192] sm:$0x1]
    %s1194 = scalar_lea.vmem %s7, 1
    %v1195 = vld [vmem:[%s1194] sm:$0x1]
    %v1196 = vsel %vm97, %v1190, 0.0
    %1197 = vadd.xlane.f32.xlu0 %v1196
    %v1198 = vpop.xlane.xlu0 %1197
    %v1199 = vsel %vm97, %v1191, 0.0
    %1200 = vadd.xlane.f32.xlu0 %v1199
    %v1201 = vpop.xlane.xlu0 %1200
    %v1202 = vmul.f32 %v1198, %v104
    %v1203 = vmul.f32 %v1201, %v104
    %v1204 = vmul.f32 %v1190, %v1190
    %v1205 = vmul.f32 %v1191, %v1191
    %v1206 = vsel %vm97, %v1204, 0.0
    %1207 = vadd.xlane.f32.xlu0 %v1206
    %v1208 = vpop.xlane.xlu0 %1207
    %v1209 = vsel %vm97, %v1205, 0.0
    %1210 = vadd.xlane.f32.xlu0 %v1209
    %v1211 = vpop.xlane.xlu0 %1210
    %v1212 = vmul.f32 %v1208, %v104
    %v1213 = vmul.f32 %v1211, %v104
    %v1214 = vmul.f32 %v1202, %v1202
    %v1215 = vmul.f32 %v1203, %v1203
    %v1216 = vsub.f32 %v1212, %v1214
    %v1217 = vsub.f32 %v1213, %v1215
    %v1218 = vsub.f32 %v1190, %v1202
    %v1219 = vsub.f32 %v1191, %v1203
    %v1220 = vadd.f32 %v1216, 1e-05
    %v1221 = vadd.f32 %v1217, 1e-05
    %v1222 = vrsqrt.pop %v1220
    %v1223 = vrsqrt.pop %v1221
    %v1224 = vmul.f32 %v1218, %v1222
    %v1225 = vmul.f32 %v1219, %v1223
    %v1227 = vlaneseq
    %v1228 = vshrl.u32 %v1227, 7
    %v1229 = vsub.s32 0, %v1228
    %v1230 = vrot.slane %v1193, %v1229
    %v1232 = vmul.f32 %v1224, %v1230
    %v1233 = vmul.f32 %v1225, %v1230
    %v1235 = vlaneseq
    %v1236 = vshrl.u32 %v1235, 7
    %v1237 = vsub.s32 0, %v1236
    %v1238 = vrot.slane %v1195, %v1237
    %v1240 = vadd.f32 %v1232, %v1238
    %v1241 = vadd.f32 %v1233, %v1238
    %s1242 = scalar_lea.vmem %s8, 32
    %v1243 = vld [vmem:[%s1242] sm:$0xff]
    %v1244 = vld [vmem:[%s1242 + $0x8] sm:$0xff]
    %v1245 = vld [vmem:[%s1242 + $0x10] sm:$0xff]
    %v1246 = vld [vmem:[%s1242 + $0x18] sm:$0xff]
    %s1247 = scalar_lea.vmem %s9, 1
    %v1248 = vld [vmem:[%s1247] sm:$0x1]
    %v1250 = vlaneseq
    %v1251 = vshrl.u32 %v1250, 7
    %v1252 = vsub.s32 0, %v1251
    %v1253 = vrot.slane %v1248, %v1252
    %v1256 = vsel %vm97, %v1240, 0
    %v1259 = vsel %vm97, %v1241, 0
    %1261 = vmatprep.subr.mxu0 0.0
    %1262 = vmatpush1.msra.mxu0 %v1243
    %1263 = vmatprep.subr.mxu0 0.0
    %1264 = vmatpush1.msra.mxu0 %v1244
    %1265 = vmatprep.subr.mxu0 0.0
    %1266 = vmatpush1.msra.mxu0 %v1245
    %1267 = vmatprep.subr.mxu0 0.0
    %1268 = vmatpush1.msra.mxu0 %v1246
    %1269 = vmatprep.subr.mxu0 0.0
    %1270 = vmatpush1.msra.mxu0 0.0
    %1271 = vmatprep.subr.mxu0 0.0
    %1272 = vmatpush1.msra.mxu0 0.0
    %1273 = vmatprep.subr.mxu0 0.0
    %1274 = vmatpush1.msra.mxu0 0.0
    %1275 = vmatprep.subr.mxu0 0.0
    %1276 = vmatpush1.msra.mxu0 0.0
    %1277 = vmatprep.subr.mxu0 0.0
    %1278 = vmatpush1.msra.mxu0 0.0
    %1279 = vmatprep.subr.mxu0 0.0
    %1280 = vmatpush1.msra.mxu0 0.0
    %1281 = vmatprep.subr.mxu0 0.0
    %1282 = vmatpush1.msra.mxu0 0.0
    %1283 = vmatprep.subr.mxu0 0.0
    %1284 = vmatpush1.msra.mxu0 0.0
    %1285 = vmatprep.subr.mxu0 0.0
    %1286 = vmatpush1.msra.mxu0 0.0
    %1287 = vmatprep.subr.mxu0 0.0
    %1288 = vmatpush1.msra.mxu0 0.0
    %1289 = vmatprep.subr.mxu0 0.0
    %1290 = vmatpush1.msra.mxu0 0.0
    %1291 = vmatprep.subr.mxu0 0.0
    %1292 = vmatpush1.msra.mxu0 0.0
    %1293 = vmatprep.subr.mxu0 0.0
    %1294 = vmatpush1.msra.mxu0 0.0
    %1295 = vmatprep.subr.mxu0 0.0
    %1296 = vmatpush1.msra.mxu0 0.0
    %1297 = vmatprep.subr.mxu0 0.0
    %1298 = vmatpush1.msra.mxu0 0.0
    %1299 = vmatprep.subr.mxu0 0.0
    %1300 = vmatpush1.msra.mxu0 0.0
    %1301 = vmatprep.subr.mxu0 0.0
    %1302 = vmatpush1.msra.mxu0 0.0
    %1303 = vmatprep.subr.mxu0 0.0
    %1304 = vmatpush1.msra.mxu0 0.0
    %1305 = vmatprep.subr.mxu0 0.0
    %1306 = vmatpush1.msra.mxu0 0.0
    %1307 = vmatprep.subr.mxu0 0.0
    %1308 = vmatpush1.msra.mxu0 0.0
    %1309 = vmatprep.subr.mxu0 0.0
    %1310 = vmatpush1.msra.mxu0 0.0
    %1311 = vmatprep.subr.mxu0 0.0
    %1312 = vmatpush1.msra.mxu0 0.0
    %1313 = vmatprep.subr.mxu0 0.0
    %1314 = vmatpush1.msra.mxu0 0.0
    %1315 = vmatprep.subr.mxu0 0.0
    %1316 = vmatpush1.msra.mxu0 0.0
    %1317 = vmatprep.subr.mxu0 0.0
    %1318 = vmatpush1.msra.mxu0 0.0
    %1319 = vmatprep.subr.mxu0 0.0
    %1320 = vmatpush1.msra.mxu0 0.0
    %1321 = vmatprep.subr.mxu0 0.0
    %1322 = vmatpush1.msra.mxu0 0.0
    %1323 = vmatprep.subr.mxu0 0.0
    %1324 = vmatpush1.msra.mxu0 0.0
    %1325 = vmatprep.mubr.f32.mxu0 0.0
    %1326 = vmatmul.mubr.f32.gmra.mrb[0].mxu0 %v1256
    %v1327 = vpop.f32.mrb[0].mxu0
    %v1328 = vadd.f32 %v1253, %v1327
    %v1329 = vpop.f32.mrb[0].mxu0
    %1330 = vmatprep.mubr.f32.mxu0 0.0
    %1331 = vmatmul.mubr.f32.gmra.mrb[0].mxu0 %v1259
    %v1332 = vpop.f32.mrb[0].mxu0
    %v1333 = vadd.f32 %v1253, %v1332
    %v1334 = vpop.f32.mrb[0].mxu0
    %1335 = vdwg.mxu0
    %s1336 = scalar_lea.vmem %s10, 32
    %v1337 = vld [vmem:[%s1336] sm:$0xff]
    %v1338 = vld [vmem:[%s1336 + $0x8] sm:$0xff]
    %v1339 = vld [vmem:[%s1336 + $0x10] sm:$0xff]
    %v1340 = vld [vmem:[%s1336 + $0x18] sm:$0xff]
    %s1341 = scalar_lea.vmem %s11, 1
    %v1342 = vld [vmem:[%s1341] sm:$0x1]
    %v1344 = vlaneseq
    %v1345 = vshrl.u32 %v1344, 7
    %v1346 = vsub.s32 0, %v1345
    %v1347 = vrot.slane %v1342, %v1346
    %1349 = vmatprep.subr.mxu0 0.0
    %1350 = vmatpush1.msra.mxu0 %v1337
    %1351 = vmatprep.subr.mxu0 0.0
    %1352 = vmatpush1.msra.mxu0 %v1338
    %1353 = vmatprep.subr.mxu0 0.0
    %1354 = vmatpush1.msra.mxu0 %v1339
    %1355 = vmatprep.subr.mxu0 0.0
    %1356 = vmatpush1.msra.mxu0 %v1340
    %1357 = vmatprep.subr.mxu0 0.0
    %1358 = vmatpush1.msra.mxu0 0.0
    %1359 = vmatprep.subr.mxu0 0.0
    %1360 = vmatpush1.msra.mxu0 0.0
    %1361 = vmatprep.subr.mxu0 0.0
    %1362 = vmatpush1.msra.mxu0 0.0
    %1363 = vmatprep.subr.mxu0 0.0
    %1364 = vmatpush1.msra.mxu0 0.0
    %1365 = vmatprep.subr.mxu0 0.0
    %1366 = vmatpush1.msra.mxu0 0.0
    %1367 = vmatprep.subr.mxu0 0.0
    %1368 = vmatpush1.msra.mxu0 0.0
    %1369 = vmatprep.subr.mxu0 0.0
    %1370 = vmatpush1.msra.mxu0 0.0
    %1371 = vmatprep.subr.mxu0 0.0
    %1372 = vmatpush1.msra.mxu0 0.0
    %1373 = vmatprep.subr.mxu0 0.0
    %1374 = vmatpush1.msra.mxu0 0.0
    %1375 = vmatprep.subr.mxu0 0.0
    %1376 = vmatpush1.msra.mxu0 0.0
    %1377 = vmatprep.subr.mxu0 0.0
    %1378 = vmatpush1.msra.mxu0 0.0
    %1379 = vmatprep.subr.mxu0 0.0
    %1380 = vmatpush1.msra.mxu0 0.0
    %1381 = vmatprep.subr.mxu0 0.0
    %1382 = vmatpush1.msra.mxu0 0.0
    %1383 = vmatprep.subr.mxu0 0.0
    %1384 = vmatpush1.msra.mxu0 0.0
    %1385 = vmatprep.subr.mxu0 0.0
    %1386 = vmatpush1.msra.mxu0 0.0
    %1387 = vmatprep.subr.mxu0 0.0
    %1388 = vmatpush1.msra.mxu0 0.0
    %1389 = vmatprep.subr.mxu0 0.0
    %1390 = vmatpush1.msra.mxu0 0.0
    %1391 = vmatprep.subr.mxu0 0.0
    %1392 = vmatpush1.msra.mxu0 0.0
    %1393 = vmatprep.subr.mxu0 0.0
    %1394 = vmatpush1.msra.mxu0 0.0
    %1395 = vmatprep.subr.mxu0 0.0
    %1396 = vmatpush1.msra.mxu0 0.0
    %1397 = vmatprep.subr.mxu0 0.0
    %1398 = vmatpush1.msra.mxu0 0.0
    %1399 = vmatprep.subr.mxu0 0.0
    %1400 = vmatpush1.msra.mxu0 0.0
    %1401 = vmatprep.subr.mxu0 0.0
    %1402 = vmatpush1.msra.mxu0 0.0
    %1403 = vmatprep.subr.mxu0 0.0
    %1404 = vmatpush1.msra.mxu0 0.0
    %1405 = vmatprep.subr.mxu0 0.0
    %1406 = vmatpush1.msra.mxu0 0.0
    %1407 = vmatprep.subr.mxu0 0.0
    %1408 = vmatpush1.msra.mxu0 0.0
    %1409 = vmatprep.subr.mxu0 0.0
    %1410 = vmatpush1.msra.mxu0 0.0
    %1411 = vmatprep.subr.mxu0 0.0
    %1412 = vmatpush1.msra.mxu0 0.0
    %1413 = vmatprep.mubr.f32.mxu0 0.0
    %1414 = vmatmul.mubr.f32.gmra.mrb[0].mxu0 %v1256
    %v1415 = vpop.f32.mrb[0].mxu0
    %v1416 = vadd.f32 %v1347, %v1415
    %v1417 = vpop.f32.mrb[0].mxu0
    %1418 = vmatprep.mubr.f32.mxu0 0.0
    %1419 = vmatmul.mubr.f32.gmra.mrb[0].mxu0 %v1259
    %v1420 = vpop.f32.mrb[0].mxu0
    %v1421 = vadd.f32 %v1347, %v1420
    %v1422 = vpop.f32.mrb[0].mxu0
    %1423 = vdwg.mxu0
    %s1424 = scalar_lea.vmem %s12, 32
    %v1425 = vld [vmem:[%s1424] sm:$0xff]
    %v1426 = vld [vmem:[%s1424 + $0x8] sm:$0xff]
    %v1427 = vld [vmem:[%s1424 + $0x10] sm:$0xff]
    %v1428 = vld [vmem:[%s1424 + $0x18] sm:$0xff]
    %s1429 = scalar_lea.vmem %s13, 1
    %v1430 = vld [vmem:[%s1429] sm:$0x1]
    %v1432 = vlaneseq
    %v1433 = vshrl.u32 %v1432, 7
    %v1434 = vsub.s32 0, %v1433
    %v1435 = vrot.slane %v1430, %v1434
    %1437 = vmatprep.subr.mxu0 0.0
    %1438 = vmatpush1.msra.mxu0 %v1425
    %1439 = vmatprep.subr.mxu0 0.0
    %1440 = vmatpush1.msra.mxu0 %v1426
    %1441 = vmatprep.subr.mxu0 0.0
    %1442 = vmatpush1.msra.mxu0 %v1427
    %1443 = vmatprep.subr.mxu0 0.0
    %1444 = vmatpush1.msra.mxu0 %v1428
    %1445 = vmatprep.subr.mxu0 0.0
    %1446 = vmatpush1.msra.mxu0 0.0
    %1447 = vmatprep.subr.mxu0 0.0
    %1448 = vmatpush1.msra.mxu0 0.0
    %1449 = vmatprep.subr.mxu0 0.0
    %1450 = vmatpush1.msra.mxu0 0.0
    %1451 = vmatprep.subr.mxu0 0.0
    %1452 = vmatpush1.msra.mxu0 0.0
    %1453 = vmatprep.subr.mxu0 0.0
    %1454 = vmatpush1.msra.mxu0 0.0
    %1455 = vmatprep.subr.mxu0 0.0
    %1456 = vmatpush1.msra.mxu0 0.0
    %1457 = vmatprep.subr.mxu0 0.0
    %1458 = vmatpush1.msra.mxu0 0.0
    %1459 = vmatprep.subr.mxu0 0.0
    %1460 = vmatpush1.msra.mxu0 0.0
    %1461 = vmatprep.subr.mxu0 0.0
    %1462 = vmatpush1.msra.mxu0 0.0
    %1463 = vmatprep.subr.mxu0 0.0
    %1464 = vmatpush1.msra.mxu0 0.0
    %1465 = vmatprep.subr.mxu0 0.0
    %1466 = vmatpush1.msra.mxu0 0.0
    %1467 = vmatprep.subr.mxu0 0.0
    %1468 = vmatpush1.msra.mxu0 0.0
    %1469 = vmatprep.subr.mxu0 0.0
    %1470 = vmatpush1.msra.mxu0 0.0
    %1471 = vmatprep.subr.mxu0 0.0
    %1472 = vmatpush1.msra.mxu0 0.0
    %1473 = vmatprep.subr.mxu0 0.0
    %1474 = vmatpush1.msra.mxu0 0.0
    %1475 = vmatprep.subr.mxu0 0.0
    %1476 = vmatpush1.msra.mxu0 0.0
    %1477 = vmatprep.subr.mxu0 0.0
    %1478 = vmatpush1.msra.mxu0 0.0
    %1479 = vmatprep.subr.mxu0 0.0
    %1480 = vmatpush1.msra.mxu0 0.0
    %1481 = vmatprep.subr.mxu0 0.0
    %1482 = vmatpush1.msra.mxu0 0.0
    %1483 = vmatprep.subr.mxu0 0.0
    %1484 = vmatpush1.msra.mxu0 0.0
    %1485 = vmatprep.subr.mxu0 0.0
    %1486 = vmatpush1.msra.mxu0 0.0
    %1487 = vmatprep.subr.mxu0 0.0
    %1488 = vmatpush1.msra.mxu0 0.0
    %1489 = vmatprep.subr.mxu0 0.0
    %1490 = vmatpush1.msra.mxu0 0.0
    %1491 = vmatprep.subr.mxu0 0.0
    %1492 = vmatpush1.msra.mxu0 0.0
    %1493 = vmatprep.subr.mxu0 0.0
    %1494 = vmatpush1.msra.mxu0 0.0
    %1495 = vmatprep.subr.mxu0 0.0
    %1496 = vmatpush1.msra.mxu0 0.0
    %1497 = vmatprep.subr.mxu0 0.0
    %1498 = vmatpush1.msra.mxu0 0.0
    %1499 = vmatprep.subr.mxu0 0.0
    %1500 = vmatpush1.msra.mxu0 0.0
    %1501 = vmatprep.mubr.f32.mxu0 0.0
    %1502 = vmatmul.mubr.f32.gmra.mrb[0].mxu0 %v1256
    %v1503 = vpop.f32.mrb[0].mxu0
    %v1504 = vadd.f32 %v1435, %v1503
    %v1505 = vpop.f32.mrb[0].mxu0
    %1506 = vmatprep.mubr.f32.mxu0 0.0
    %1507 = vmatmul.mubr.f32.gmra.mrb[0].mxu0 %v1259
    %v1508 = vpop.f32.mrb[0].mxu0
    %v1509 = vadd.f32 %v1435, %v1508
    %v1510 = vpop.f32.mrb[0].mxu0
    %1511 = vdwg.mxu0
    %v1512 = vmul.f32 %v1416, %v82
    %v1513 = vmul.f32 %v1416, %v83
    %v1514 = vmul.f32 %v1416, %v84
    %v1515 = vmul.f32 %v1416, %v85
    %v1516 = vmul.f32 %v1421, %v82
    %v1517 = vmul.f32 %v1421, %v83
    %v1518 = vmul.f32 %v1421, %v84
    %v1519 = vmul.f32 %v1421, %v85
    %v1520 = vmul.f32 %v1504, %v82
    %v1521 = vmul.f32 %v1504, %v83
    %v1522 = vmul.f32 %v1504, %v84
    %v1523 = vmul.f32 %v1504, %v85
    %v1524 = vmul.f32 %v1509, %v82
    %v1525 = vmul.f32 %v1509, %v83
    %v1526 = vmul.f32 %v1509, %v84
    %v1527 = vmul.f32 %v1509, %v85
    %v1529 = vsel %vm97, %v1328, 0
    %v1532 = vsel %vm97, %v1512, 0
    %v1535 = vsel %vm97, %v1513, 0
    %v1538 = vsel %vm97, %v1514, 0
    %v1541 = vsel %vm97, %v1515, 0
    %1543 = vmatprep.subr.mxu0 0.0
    %1544 = vmatpush1.xpose.msra.mxu0 %v1532
    %1545 = vmatprep.subr.mxu0 0.0
    %1546 = vmatpush1.xpose.msra.mxu0 %v1535
    %1547 = vmatprep.subr.mxu0 0.0
    %1548 = vmatpush1.xpose.msra.mxu0 %v1538
    %1549 = vmatprep.subr.mxu0 0.0
    %1550 = vmatpush1.xpose.msra.mxu0 %v1541
    %1551 = vmatprep.subr.mxu0 0.0
    %1552 = vmatpush1.xpose.msra.mxu0 0.0
    %1553 = vmatprep.subr.mxu0 0.0
    %1554 = vmatpush1.xpose.msra.mxu0 0.0
    %1555 = vmatprep.subr.mxu0 0.0
    %1556 = vmatpush1.xpose.msra.mxu0 0.0
    %1557 = vmatprep.subr.mxu0 0.0
    %1558 = vmatpush1.xpose.msra.mxu0 0.0
    %1559 = vmatprep.subr.mxu0 0.0
    %1560 = vmatpush1.xpose.msra.mxu0 0.0
    %1561 = vmatprep.subr.mxu0 0.0
    %1562 = vmatpush1.xpose.msra.mxu0 0.0
    %1563 = vmatprep.subr.mxu0 0.0
    %1564 = vmatpush1.xpose.msra.mxu0 0.0
    %1565 = vmatprep.subr.mxu0 0.0
    %1566 = vmatpush1.xpose.msra.mxu0 0.0
    %1567 = vmatprep.subr.mxu0 0.0
    %1568 = vmatpush1.xpose.msra.mxu0 0.0
    %1569 = vmatprep.subr.mxu0 0.0
    %1570 = vmatpush1.xpose.msra.mxu0 0.0
    %1571 = vmatprep.subr.mxu0 0.0
    %1572 = vmatpush1.xpose.msra.mxu0 0.0
    %1573 = vmatprep.subr.mxu0 0.0
    %1574 = vmatpush1.xpose.msra.mxu0 0.0
    %1575 = vmatprep.subr.mxu0 0.0
    %1576 = vmatpush1.xpose.msra.mxu0 0.0
    %1577 = vmatprep.subr.mxu0 0.0
    %1578 = vmatpush1.xpose.msra.mxu0 0.0
    %1579 = vmatprep.subr.mxu0 0.0
    %1580 = vmatpush1.xpose.msra.mxu0 0.0
    %1581 = vmatprep.subr.mxu0 0.0
    %1582 = vmatpush1.xpose.msra.mxu0 0.0
    %1583 = vmatprep.subr.mxu0 0.0
    %1584 = vmatpush1.xpose.msra.mxu0 0.0
    %1585 = vmatprep.subr.mxu0 0.0
    %1586 = vmatpush1.xpose.msra.mxu0 0.0
    %1587 = vmatprep.subr.mxu0 0.0
    %1588 = vmatpush1.xpose.msra.mxu0 0.0
    %1589 = vmatprep.subr.mxu0 0.0
    %1590 = vmatpush1.xpose.msra.mxu0 0.0
    %1591 = vmatprep.subr.mxu0 0.0
    %1592 = vmatpush1.xpose.msra.mxu0 0.0
    %1593 = vmatprep.subr.mxu0 0.0
    %1594 = vmatpush1.xpose.msra.mxu0 0.0
    %1595 = vmatprep.subr.mxu0 0.0
    %1596 = vmatpush1.xpose.msra.mxu0 0.0
    %1597 = vmatprep.subr.mxu0 0.0
    %1598 = vmatpush1.xpose.msra.mxu0 0.0
    %1599 = vmatprep.subr.mxu0 0.0
    %1600 = vmatpush1.xpose.msra.mxu0 0.0
    %1601 = vmatprep.subr.mxu0 0.0
    %1602 = vmatpush1.xpose.msra.mxu0 0.0
    %1603 = vmatprep.subr.mxu0 0.0
    %1604 = vmatpush1.xpose.msra.mxu0 0.0
    %1605 = vmatprep.subr.mxu0 0.0
    %1606 = vmatpush1.xpose.msra.mxu0 0.0
    %1607 = vmatprep.mubr.f32.mxu0 0.0
    %1608 = vmatmul.mubr.f32.gmra.mrb[0].mxu0 %v1529
    %v1609 = vpop.f32.mrb[0].mxu0
    %v1610 = vadd.f32 %v81, %v1609
    %v1611 = vpop.f32.mrb[0].mxu0
    %1612 = vdwg.mxu0
    %v1614 = vsel %vm97, %v1333, 0
    %v1617 = vsel %vm97, %v1516, 0
    %v1620 = vsel %vm97, %v1517, 0
    %v1623 = vsel %vm97, %v1518, 0
    %v1626 = vsel %vm97, %v1519, 0
    %1628 = vmatprep.subr.mxu0 0.0
    %1629 = vmatpush1.xpose.msra.mxu0 %v1617
    %1630 = vmatprep.subr.mxu0 0.0
    %1631 = vmatpush1.xpose.msra.mxu0 %v1620
    %1632 = vmatprep.subr.mxu0 0.0
    %1633 = vmatpush1.xpose.msra.mxu0 %v1623
    %1634 = vmatprep.subr.mxu0 0.0
    %1635 = vmatpush1.xpose.msra.mxu0 %v1626
    %1636 = vmatprep.subr.mxu0 0.0
    %1637 = vmatpush1.xpose.msra.mxu0 0.0
    %1638 = vmatprep.subr.mxu0 0.0
    %1639 = vmatpush1.xpose.msra.mxu0 0.0
    %1640 = vmatprep.subr.mxu0 0.0
    %1641 = vmatpush1.xpose.msra.mxu0 0.0
    %1642 = vmatprep.subr.mxu0 0.0
    %1643 = vmatpush1.xpose.msra.mxu0 0.0
    %1644 = vmatprep.subr.mxu0 0.0
    %1645 = vmatpush1.xpose.msra.mxu0 0.0
    %1646 = vmatprep.subr.mxu0 0.0
    %1647 = vmatpush1.xpose.msra.mxu0 0.0
    %1648 = vmatprep.subr.mxu0 0.0
    %1649 = vmatpush1.xpose.msra.mxu0 0.0
    %1650 = vmatprep.subr.mxu0 0.0
    %1651 = vmatpush1.xpose.msra.mxu0 0.0
    %1652 = vmatprep.subr.mxu0 0.0
    %1653 = vmatpush1.xpose.msra.mxu0 0.0
    %1654 = vmatprep.subr.mxu0 0.0
    %1655 = vmatpush1.xpose.msra.mxu0 0.0
    %1656 = vmatprep.subr.mxu0 0.0
    %1657 = vmatpush1.xpose.msra.mxu0 0.0
    %1658 = vmatprep.subr.mxu0 0.0
    %1659 = vmatpush1.xpose.msra.mxu0 0.0
    %1660 = vmatprep.subr.mxu0 0.0
    %1661 = vmatpush1.xpose.msra.mxu0 0.0
    %1662 = vmatprep.subr.mxu0 0.0
    %1663 = vmatpush1.xpose.msra.mxu0 0.0
    %1664 = vmatprep.subr.mxu0 0.0
    %1665 = vmatpush1.xpose.msra.mxu0 0.0
    %1666 = vmatprep.subr.mxu0 0.0
    %1667 = vmatpush1.xpose.msra.mxu0 0.0
    %1668 = vmatprep.subr.mxu0 0.0
    %1669 = vmatpush1.xpose.msra.mxu0 0.0
    %1670 = vmatprep.subr.mxu0 0.0
    %1671 = vmatpush1.xpose.msra.mxu0 0.0
    %1672 = vmatprep.subr.mxu0 0.0
    %1673 = vmatpush1.xpose.msra.mxu0 0.0
    %1674 = vmatprep.subr.mxu0 0.0
    %1675 = vmatpush1.xpose.msra.mxu0 0.0
    %1676 = vmatprep.subr.mxu0 0.0
    %1677 = vmatpush1.xpose.msra.mxu0 0.0
    %1678 = vmatprep.subr.mxu0 0.0
    %1679 = vmatpush1.xpose.msra.mxu0 0.0
    %1680 = vmatprep.subr.mxu0 0.0
    %1681 = vmatpush1.xpose.msra.mxu0 0.0
    %1682 = vmatprep.subr.mxu0 0.0
    %1683 = vmatpush1.xpose.msra.mxu0 0.0
    %1684 = vmatprep.subr.mxu0 0.0
    %1685 = vmatpush1.xpose.msra.mxu0 0.0
    %1686 = vmatprep.subr.mxu0 0.0
    %1687 = vmatpush1.xpose.msra.mxu0 0.0
    %1688 = vmatprep.subr.mxu0 0.0
    %1689 = vmatpush1.xpose.msra.mxu0 0.0
    %1690 = vmatprep.subr.mxu0 0.0
    %1691 = vmatpush1.xpose.msra.mxu0 0.0
    %1692 = vmatprep.mubr.f32.mxu0 0.0
    %1693 = vmatmul.mubr.f32.gmra.mrb[0].mxu0 %v1614
    %v1694 = vpop.f32.mrb[0].mxu0
    %v1695 = vadd.f32 %v81, %v1694
    %v1696 = vpop.f32.mrb[0].mxu0
    %1697 = vdwg.mxu0
    %v1698 = vsel %vm97, %v1610, -inf
    %1699 = vmax.xlane.f32.xlu0 %v1698
    %v1700 = vpop.xlane.xlu0 %1699
    %v1701 = vsel %vm97, %v1695, -inf
    %1702 = vmax.xlane.f32.xlu0 %v1701
    %v1703 = vpop.xlane.xlu0 %1702
    %v1704 = vsub.f32 %v1610, %v1700
    %v1705 = vsub.f32 %v1695, %v1703
    %v1706 = vmul.f32 %v1704, 1.442695
    %v1707 = vpow.pop %v1706
    %v1708 = vmul.f32 %v1705, 1.442695
    %v1709 = vpow.pop %v1708
    %v1711 = vsel %vm97, %v1707, 0
    %v1714 = vsel %vm97, %v1709, 0
    %1716 = vmatprep.subr.mxu0 0.0
    %1717 = vmatpush1.msra.mxu0 %v86
    %1718 = vmatprep.subr.mxu0 0.0
    %1719 = vmatpush1.msra.mxu0 %v87
    %1720 = vmatprep.subr.mxu0 0.0
    %1721 = vmatpush1.msra.mxu0 %v88
    %1722 = vmatprep.subr.mxu0 0.0
    %1723 = vmatpush1.msra.mxu0 %v89
    %1724 = vmatprep.subr.mxu0 0.0
    %1725 = vmatpush1.msra.mxu0 0.0
    %1726 = vmatprep.subr.mxu0 0.0
    %1727 = vmatpush1.msra.mxu0 0.0
    %1728 = vmatprep.subr.mxu0 0.0
    %1729 = vmatpush1.msra.mxu0 0.0
    %1730 = vmatprep.subr.mxu0 0.0
    %1731 = vmatpush1.msra.mxu0 0.0
    %1732 = vmatprep.subr.mxu0 0.0
    %1733 = vmatpush1.msra.mxu0 0.0
    %1734 = vmatprep.subr.mxu0 0.0
    %1735 = vmatpush1.msra.mxu0 0.0
    %1736 = vmatprep.subr.mxu0 0.0
    %1737 = vmatpush1.msra.mxu0 0.0
    %1738 = vmatprep.subr.mxu0 0.0
    %1739 = vmatpush1.msra.mxu0 0.0
    %1740 = vmatprep.subr.mxu0 0.0
    %1741 = vmatpush1.msra.mxu0 0.0
    %1742 = vmatprep.subr.mxu0 0.0
    %1743 = vmatpush1.msra.mxu0 0.0
    %1744 = vmatprep.subr.mxu0 0.0
    %1745 = vmatpush1.msra.mxu0 0.0
    %1746 = vmatprep.subr.mxu0 0.0
    %1747 = vmatpush1.msra.mxu0 0.0
    %1748 = vmatprep.subr.mxu0 0.0
    %1749 = vmatpush1.msra.mxu0 0.0
    %1750 = vmatprep.subr.mxu0 0.0
    %1751 = vmatpush1.msra.mxu0 0.0
    %1752 = vmatprep.subr.mxu0 0.0
    %1753 = vmatpush1.msra.mxu0 0.0
    %1754 = vmatprep.subr.mxu0 0.0
    %1755 = vmatpush1.msra.mxu0 0.0
    %1756 = vmatprep.subr.mxu0 0.0
    %1757 = vmatpush1.msra.mxu0 0.0
    %1758 = vmatprep.subr.mxu0 0.0
    %1759 = vmatpush1.msra.mxu0 0.0
    %1760 = vmatprep.subr.mxu0 0.0
    %1761 = vmatpush1.msra.mxu0 0.0
    %1762 = vmatprep.subr.mxu0 0.0
    %1763 = vmatpush1.msra.mxu0 0.0
    %1764 = vmatprep.subr.mxu0 0.0
    %1765 = vmatpush1.msra.mxu0 0.0
    %1766 = vmatprep.subr.mxu0 0.0
    %1767 = vmatpush1.msra.mxu0 0.0
    %1768 = vmatprep.subr.mxu0 0.0
    %1769 = vmatpush1.msra.mxu0 0.0
    %1770 = vmatprep.subr.mxu0 0.0
    %1771 = vmatpush1.msra.mxu0 0.0
    %1772 = vmatprep.subr.mxu0 0.0
    %1773 = vmatpush1.msra.mxu0 0.0
    %1774 = vmatprep.subr.mxu0 0.0
    %1775 = vmatpush1.msra.mxu0 0.0
    %1776 = vmatprep.subr.mxu0 0.0
    %1777 = vmatpush1.msra.mxu0 0.0
    %1778 = vmatprep.subr.mxu0 0.0
    %1779 = vmatpush1.msra.mxu0 0.0
    %1780 = vmatprep.mubr.f32.mxu0 0.0
    %1781 = vmatmul.mubr.f32.gmra.mrb[0].mxu0 %v1711
    %v1782 = vpop.f32.mrb[0].mxu0
    %v1783 = vadd.f32 0.0, %v1782
    %v1784 = vpop.f32.mrb[0].mxu0
    %1785 = vmatprep.mubr.f32.mxu0 0.0
    %1786 = vmatmul.mubr.f32.gmra.mrb[0].mxu0 %v1714
    %v1787 = vpop.f32.mrb[0].mxu0
    %v1788 = vadd.f32 0.0, %v1787
    %v1789 = vpop.f32.mrb[0].mxu0
    %1790 = vdwg.mxu0
    %v1791 = vrcp.pop %v1783
    %v1792 = vmul.f32 %v1707, %v1791
    %v1793 = vrcp.pop %v1788
    %v1794 = vmul.f32 %v1709, %v1793
    %v1796 = vsel %vm97, %v1792, 0
    %1798 = vmatprep.subr.mxu0 0.0
    %1799 = vmatpush1.msra.mxu0 %v1520
    %1800 = vmatprep.subr.mxu0 0.0
    %1801 = vmatpush1.msra.mxu0 %v1521
    %1802 = vmatprep.subr.mxu0 0.0
    %1803 = vmatpush1.msra.mxu0 %v1522
    %1804 = vmatprep.subr.mxu0 0.0
    %1805 = vmatpush1.msra.mxu0 %v1523
    %1806 = vmatprep.subr.mxu0 0.0
    %1807 = vmatpush1.msra.mxu0 0.0
    %1808 = vmatprep.subr.mxu0 0.0
    %1809 = vmatpush1.msra.mxu0 0.0
    %1810 = vmatprep.subr.mxu0 0.0
    %1811 = vmatpush1.msra.mxu0 0.0
    %1812 = vmatprep.subr.mxu0 0.0
    %1813 = vmatpush1.msra.mxu0 0.0
    %1814 = vmatprep.subr.mxu0 0.0
    %1815 = vmatpush1.msra.mxu0 0.0
    %1816 = vmatprep.subr.mxu0 0.0
    %1817 = vmatpush1.msra.mxu0 0.0
    %1818 = vmatprep.subr.mxu0 0.0
    %1819 = vmatpush1.msra.mxu0 0.0
    %1820 = vmatprep.subr.mxu0 0.0
    %1821 = vmatpush1.msra.mxu0 0.0
    %1822 = vmatprep.subr.mxu0 0.0
    %1823 = vmatpush1.msra.mxu0 0.0
    %1824 = vmatprep.subr.mxu0 0.0
    %1825 = vmatpush1.msra.mxu0 0.0
    %1826 = vmatprep.subr.mxu0 0.0
    %1827 = vmatpush1.msra.mxu0 0.0
    %1828 = vmatprep.subr.mxu0 0.0
    %1829 = vmatpush1.msra.mxu0 0.0
    %1830 = vmatprep.subr.mxu0 0.0
    %1831 = vmatpush1.msra.mxu0 0.0
    %1832 = vmatprep.subr.mxu0 0.0
    %1833 = vmatpush1.msra.mxu0 0.0
    %1834 = vmatprep.subr.mxu0 0.0
    %1835 = vmatpush1.msra.mxu0 0.0
    %1836 = vmatprep.subr.mxu0 0.0
    %1837 = vmatpush1.msra.mxu0 0.0
    %1838 = vmatprep.subr.mxu0 0.0
    %1839 = vmatpush1.msra.mxu0 0.0
    %1840 = vmatprep.subr.mxu0 0.0
    %1841 = vmatpush1.msra.mxu0 0.0
    %1842 = vmatprep.subr.mxu0 0.0
    %1843 = vmatpush1.msra.mxu0 0.0
    %1844 = vmatprep.subr.mxu0 0.0
    %1845 = vmatpush1.msra.mxu0 0.0
    %1846 = vmatprep.subr.mxu0 0.0
    %1847 = vmatpush1.msra.mxu0 0.0
    %1848 = vmatprep.subr.mxu0 0.0
    %1849 = vmatpush1.msra.mxu0 0.0
    %1850 = vmatprep.subr.mxu0 0.0
    %1851 = vmatpush1.msra.mxu0 0.0
    %1852 = vmatprep.subr.mxu0 0.0
    %1853 = vmatpush1.msra.mxu0 0.0
    %1854 = vmatprep.subr.mxu0 0.0
    %1855 = vmatpush1.msra.mxu0 0.0
    %1856 = vmatprep.subr.mxu0 0.0
    %1857 = vmatpush1.msra.mxu0 0.0
    %1858 = vmatprep.subr.mxu0 0.0
    %1859 = vmatpush1.msra.mxu0 0.0
    %1860 = vmatprep.subr.mxu0 0.0
    %1861 = vmatpush1.msra.mxu0 0.0
    %1862 = vmatprep.mubr.f32.mxu0 0.0
    %1863 = vmatmul.mubr.f32.gmra.mrb[0].mxu0 %v1796
    %v1864 = vpop.f32.mrb[0].mxu0
    %v1865 = vadd.f32 0.0, %v1864
    %v1866 = vpop.f32.mrb[0].mxu0
    %1867 = vdwg.mxu0
    %v1869 = vsel %vm97, %v1794, 0
    %1871 = vmatprep.subr.mxu0 0.0
    %1872 = vmatpush1.msra.mxu0 %v1524
    %1873 = vmatprep.subr.mxu0 0.0
    %1874 = vmatpush1.msra.mxu0 %v1525
    %1875 = vmatprep.subr.mxu0 0.0
    %1876 = vmatpush1.msra.mxu0 %v1526
    %1877 = vmatprep.subr.mxu0 0.0
    %1878 = vmatpush1.msra.mxu0 %v1527
    %1879 = vmatprep.subr.mxu0 0.0
    %1880 = vmatpush1.msra.mxu0 0.0
    %1881 = vmatprep.subr.mxu0 0.0
    %1882 = vmatpush1.msra.mxu0 0.0
    %1883 = vmatprep.subr.mxu0 0.0
    %1884 = vmatpush1.msra.mxu0 0.0
    %1885 = vmatprep.subr.mxu0 0.0
    %1886 = vmatpush1.msra.mxu0 0.0
    %1887 = vmatprep.subr.mxu0 0.0
    %1888 = vmatpush1.msra.mxu0 0.0
    %1889 = vmatprep.subr.mxu0 0.0
    %1890 = vmatpush1.msra.mxu0 0.0
    %1891 = vmatprep.subr.mxu0 0.0
    %1892 = vmatpush1.msra.mxu0 0.0
    %1893 = vmatprep.subr.mxu0 0.0
    %1894 = vmatpush1.msra.mxu0 0.0
    %1895 = vmatprep.subr.mxu0 0.0
    %1896 = vmatpush1.msra.mxu0 0.0
    %1897 = vmatprep.subr.mxu0 0.0
    %1898 = vmatpush1.msra.mxu0 0.0
    %1899 = vmatprep.subr.mxu0 0.0
    %1900 = vmatpush1.msra.mxu0 0.0
    %1901 = vmatprep.subr.mxu0 0.0
    %1902 = vmatpush1.msra.mxu0 0.0
    %1903 = vmatprep.subr.mxu0 0.0
    %1904 = vmatpush1.msra.mxu0 0.0
    %1905 = vmatprep.subr.mxu0 0.0
    %1906 = vmatpush1.msra.mxu0 0.0
    %1907 = vmatprep.subr.mxu0 0.0
    %1908 = vmatpush1.msra.mxu0 0.0
    %1909 = vmatprep.subr.mxu0 0.0
    %1910 = vmatpush1.msra.mxu0 0.0
    %1911 = vmatprep.subr.mxu0 0.0
    %1912 = vmatpush1.msra.mxu0 0.0
    %1913 = vmatprep.subr.mxu0 0.0
    %1914 = vmatpush1.msra.mxu0 0.0
    %1915 = vmatprep.subr.mxu0 0.0
    %1916 = vmatpush1.msra.mxu0 0.0
    %1917 = vmatprep.subr.mxu0 0.0
    %1918 = vmatpush1.msra.mxu0 0.0
    %1919 = vmatprep.subr.mxu0 0.0
    %1920 = vmatpush1.msra.mxu0 0.0
    %1921 = vmatprep.subr.mxu0 0.0
    %1922 = vmatpush1.msra.mxu0 0.0
    %1923 = vmatprep.subr.mxu0 0.0
    %1924 = vmatpush1.msra.mxu0 0.0
    %1925 = vmatprep.subr.mxu0 0.0
    %1926 = vmatpush1.msra.mxu0 0.0
    %1927 = vmatprep.subr.mxu0 0.0
    %1928 = vmatpush1.msra.mxu0 0.0
    %1929 = vmatprep.subr.mxu0 0.0
    %1930 = vmatpush1.msra.mxu0 0.0
    %1931 = vmatprep.subr.mxu0 0.0
    %1932 = vmatpush1.msra.mxu0 0.0
    %1933 = vmatprep.subr.mxu0 0.0
    %1934 = vmatpush1.msra.mxu0 0.0
    %1935 = vmatprep.mubr.f32.mxu0 0.0
    %1936 = vmatmul.mubr.f32.gmra.mrb[0].mxu0 %v1869
    %v1937 = vpop.f32.mrb[0].mxu0
    %v1938 = vadd.f32 0.0, %v1937
    %v1939 = vpop.f32.mrb[0].mxu0
    %1940 = vdwg.mxu0
    %s1941 = scalar_lea.vmem %s14, 32
    %v1942 = vld [vmem:[%s1941] sm:$0xff]
    %v1943 = vld [vmem:[%s1941 + $0x8] sm:$0xff]
    %v1944 = vld [vmem:[%s1941 + $0x10] sm:$0xff]
    %v1945 = vld [vmem:[%s1941 + $0x18] sm:$0xff]
    %v1947 = vsel %vm97, %v1865, 0
    %v1950 = vsel %vm97, %v1938, 0
    %1952 = vmatprep.subr.mxu0 0.0
    %1953 = vmatpush1.msra.mxu0 %v1942
    %1954 = vmatprep.subr.mxu0 0.0
    %1955 = vmatpush1.msra.mxu0 %v1943
    %1956 = vmatprep.subr.mxu0 0.0
    %1957 = vmatpush1.msra.mxu0 %v1944
    %1958 = vmatprep.subr.mxu0 0.0
    %1959 = vmatpush1.msra.mxu0 %v1945
    %1960 = vmatprep.subr.mxu0 0.0
    %1961 = vmatpush1.msra.mxu0 0.0
    %1962 = vmatprep.subr.mxu0 0.0
    %1963 = vmatpush1.msra.mxu0 0.0
    %1964 = vmatprep.subr.mxu0 0.0
    %1965 = vmatpush1.msra.mxu0 0.0
    %1966 = vmatprep.subr.mxu0 0.0
    %1967 = vmatpush1.msra.mxu0 0.0
    %1968 = vmatprep.subr.mxu0 0.0
    %1969 = vmatpush1.msra.mxu0 0.0
    %1970 = vmatprep.subr.mxu0 0.0
    %1971 = vmatpush1.msra.mxu0 0.0
    %1972 = vmatprep.subr.mxu0 0.0
    %1973 = vmatpush1.msra.mxu0 0.0
    %1974 = vmatprep.subr.mxu0 0.0
    %1975 = vmatpush1.msra.mxu0 0.0
    %1976 = vmatprep.subr.mxu0 0.0
    %1977 = vmatpush1.msra.mxu0 0.0
    %1978 = vmatprep.subr.mxu0 0.0
    %1979 = vmatpush1.msra.mxu0 0.0
    %1980 = vmatprep.subr.mxu0 0.0
    %1981 = vmatpush1.msra.mxu0 0.0
    %1982 = vmatprep.subr.mxu0 0.0
    %1983 = vmatpush1.msra.mxu0 0.0
    %1984 = vmatprep.subr.mxu0 0.0
    %1985 = vmatpush1.msra.mxu0 0.0
    %1986 = vmatprep.subr.mxu0 0.0
    %1987 = vmatpush1.msra.mxu0 0.0
    %1988 = vmatprep.subr.mxu0 0.0
    %1989 = vmatpush1.msra.mxu0 0.0
    %1990 = vmatprep.subr.mxu0 0.0
    %1991 = vmatpush1.msra.mxu0 0.0
    %1992 = vmatprep.subr.mxu0 0.0
    %1993 = vmatpush1.msra.mxu0 0.0
    %1994 = vmatprep.subr.mxu0 0.0
    %1995 = vmatpush1.msra.mxu0 0.0
    %1996 = vmatprep.subr.mxu0 0.0
    %1997 = vmatpush1.msra.mxu0 0.0
    %1998 = vmatprep.subr.mxu0 0.0
    %1999 = vmatpush1.msra.mxu0 0.0
    %2000 = vmatprep.subr.mxu0 0.0
    %2001 = vmatpush1.msra.mxu0 0.0
    %2002 = vmatprep.subr.mxu0 0.0
    %2003 = vmatpush1.msra.mxu0 0.0
    %2004 = vmatprep.subr.mxu0 0.0
    %2005 = vmatpush1.msra.mxu0 0.0
    %2006 = vmatprep.subr.mxu0 0.0
    %2007 = vmatpush1.msra.mxu0 0.0
    %2008 = vmatprep.subr.mxu0 0.0
    %2009 = vmatpush1.msra.mxu0 0.0
    %2010 = vmatprep.subr.mxu0 0.0
    %2011 = vmatpush1.msra.mxu0 0.0
    %2012 = vmatprep.subr.mxu0 0.0
    %2013 = vmatpush1.msra.mxu0 0.0
    %2014 = vmatprep.subr.mxu0 0.0
    %2015 = vmatpush1.msra.mxu0 0.0
    %2016 = vmatprep.mubr.f32.mxu0 0.0
    %2017 = vmatmul.mubr.f32.gmra.mrb[0].mxu0 %v1947
    %v2018 = vpop.f32.mrb[0].mxu0
    %v2019 = vadd.f32 0.0, %v2018
    %v2020 = vpop.f32.mrb[0].mxu0
    %2021 = vmatprep.mubr.f32.mxu0 0.0
    %2022 = vmatmul.mubr.f32.gmra.mrb[0].mxu0 %v1950
    %v2023 = vpop.f32.mrb[0].mxu0
    %v2024 = vadd.f32 0.0, %v2023
    %v2025 = vpop.f32.mrb[0].mxu0
    %2026 = vdwg.mxu0
    %v2027 = vadd.f32 %v1190, %v2019
    %v2028 = vadd.f32 %v1191, %v2024
    %s2029 = scalar_lea.vmem %s15, 1
    %v2030 = vld [vmem:[%s2029] sm:$0x1]
    %v2032 = vlaneseq
    %v2033 = vshrl.u32 %v2032, 7
    %v2034 = vsub.s32 0, %v2033
    %v2035 = vrot.slane %v2030, %v2034
    %v2037 = vadd.f32 %v2027, %v2035
    %v2038 = vadd.f32 %v2028, %v2035
    %s2039 = scalar_lea.vmem %s16, 1
    %v2040 = vld [vmem:[%s2039] sm:$0x1]
    %s2041 = scalar_lea.vmem %s17, 1
    %v2042 = vld [vmem:[%s2041] sm:$0x1]
    %v2043 = vsel %vm97, %v2037, 0.0
    %2044 = vadd.xlane.f32.xlu0 %v2043
    %v2045 = vpop.xlane.xlu0 %2044
    %v2046 = vsel %vm97, %v2038, 0.0
    %2047 = vadd.xlane.f32.xlu0 %v2046
    %v2048 = vpop.xlane.xlu0 %2047
    %v2049 = vmul.f32 %v2045, %v104
    %v2050 = vmul.f32 %v2048, %v104
    %v2051 = vmul.f32 %v2037, %v2037
    %v2052 = vmul.f32 %v2038, %v2038
    %v2053 = vsel %vm97, %v2051, 0.0
    %2054 = vadd.xlane.f32.xlu0 %v2053
    %v2055 = vpop.xlane.xlu0 %2054
    %v2056 = vsel %vm97, %v2052, 0.0
    %2057 = vadd.xlane.f32.xlu0 %v2056
    %v2058 = vpop.xlane.xlu0 %2057
    %v2059 = vmul.f32 %v2055, %v104
    %v2060 = vmul.f32 %v2058, %v104
    %v2061 = vmul.f32 %v2049, %v2049
    %v2062 = vmul.f32 %v2050, %v2050
    %v2063 = vsub.f32 %v2059, %v2061
    %v2064 = vsub.f32 %v2060, %v2062
    %v2065 = vsub.f32 %v2037, %v2049
    %v2066 = vsub.f32 %v2038, %v2050
    %v2067 = vadd.f32 %v2063, 1e-05
    %v2068 = vadd.f32 %v2064, 1e-05
    %v2069 = vrsqrt.pop %v2067
    %v2070 = vrsqrt.pop %v2068
    %v2071 = vmul.f32 %v2065, %v2069
    %v2072 = vmul.f32 %v2066, %v2070
    %v2074 = vlaneseq
    %v2075 = vshrl.u32 %v2074, 7
    %v2076 = vsub.s32 0, %v2075
    %v2077 = vrot.slane %v2040, %v2076
    %v2079 = vmul.f32 %v2071, %v2077
    %v2080 = vmul.f32 %v2072, %v2077
    %v2082 = vlaneseq
    %v2083 = vshrl.u32 %v2082, 7
    %v2084 = vsub.s32 0, %v2083
    %v2085 = vrot.slane %v2042, %v2084
    %v2087 = vadd.f32 %v2079, %v2085
    %v2088 = vadd.f32 %v2080, %v2085
    %s2089 = scalar_lea.vmem %s18, 32
    %v2090 = vld [vmem:[%s2089] sm:$0xff]
    %v2091 = vld [vmem:[%s2089 + $0x8] sm:$0xff]
    %v2092 = vld [vmem:[%s2089 + $0x10] sm:$0xff]
    %v2093 = vld [vmem:[%s2089 + $0x18] sm:$0xff]
    %s2094 = scalar_lea.vmem %s19, 1
    %v2095 = vld [vmem:[%s2094] sm:$0x1]
    %v2097 = vlaneseq
    %v2098 = vshrl.u32 %v2097, 7
    %v2099 = vsub.s32 0, %v2098
    %v2100 = vrot.slane %v2095, %v2099
    %v2103 = vsel %vm97, %v2087, 0
    %v2106 = vsel %vm97, %v2088, 0
    %2108 = vmatprep.subr.mxu0 0.0
    %2109 = vmatpush1.msra.mxu0 %v2090
    %2110 = vmatprep.subr.mxu0 0.0
    %2111 = vmatpush1.msra.mxu0 %v2091
    %2112 = vmatprep.subr.mxu0 0.0
    %2113 = vmatpush1.msra.mxu0 %v2092
    %2114 = vmatprep.subr.mxu0 0.0
    %2115 = vmatpush1.msra.mxu0 %v2093
    %2116 = vmatprep.subr.mxu0 0.0
    %2117 = vmatpush1.msra.mxu0 0.0
    %2118 = vmatprep.subr.mxu0 0.0
    %2119 = vmatpush1.msra.mxu0 0.0
    %2120 = vmatprep.subr.mxu0 0.0
    %2121 = vmatpush1.msra.mxu0 0.0
    %2122 = vmatprep.subr.mxu0 0.0
    %2123 = vmatpush1.msra.mxu0 0.0
    %2124 = vmatprep.subr.mxu0 0.0
    %2125 = vmatpush1.msra.mxu0 0.0
    %2126 = vmatprep.subr.mxu0 0.0
    %2127 = vmatpush1.msra.mxu0 0.0
    %2128 = vmatprep.subr.mxu0 0.0
    %2129 = vmatpush1.msra.mxu0 0.0
    %2130 = vmatprep.subr.mxu0 0.0
    %2131 = vmatpush1.msra.mxu0 0.0
    %2132 = vmatprep.subr.mxu0 0.0
    %2133 = vmatpush1.msra.mxu0 0.0
    %2134 = vmatprep.subr.mxu0 0.0
    %2135 = vmatpush1.msra.mxu0 0.0
    %2136 = vmatprep.subr.mxu0 0.0
    %2137 = vmatpush1.msra.mxu0 0.0
    %2138 = vmatprep.subr.mxu0 0.0
    %2139 = vmatpush1.msra.mxu0 0.0
    %2140 = vmatprep.subr.mxu0 0.0
    %2141 = vmatpush1.msra.mxu0 0.0
    %2142 = vmatprep.subr.mxu0 0.0
    %2143 = vmatpush1.msra.mxu0 0.0
    %2144 = vmatprep.subr.mxu0 0.0
    %2145 = vmatpush1.msra.mxu0 0.0
    %2146 = vmatprep.subr.mxu0 0.0
    %2147 = vmatpush1.msra.mxu0 0.0
    %2148 = vmatprep.subr.mxu0 0.0
    %2149 = vmatpush1.msra.mxu0 0.0
    %2150 = vmatprep.subr.mxu0 0.0
    %2151 = vmatpush1.msra.mxu0 0.0
    %2152 = vmatprep.subr.mxu0 0.0
    %2153 = vmatpush1.msra.mxu0 0.0
    %2154 = vmatprep.subr.mxu0 0.0
    %2155 = vmatpush1.msra.mxu0 0.0
    %2156 = vmatprep.subr.mxu0 0.0
    %2157 = vmatpush1.msra.mxu0 0.0
    %2158 = vmatprep.subr.mxu0 0.0
    %2159 = vmatpush1.msra.mxu0 0.0
    %2160 = vmatprep.subr.mxu0 0.0
    %2161 = vmatpush1.msra.mxu0 0.0
    %2162 = vmatprep.subr.mxu0 0.0
    %2163 = vmatpush1.msra.mxu0 0.0
    %2164 = vmatprep.subr.mxu0 0.0
    %2165 = vmatpush1.msra.mxu0 0.0
    %2166 = vmatprep.subr.mxu0 0.0
    %2167 = vmatpush1.msra.mxu0 0.0
    %2168 = vmatprep.subr.mxu0 0.0
    %2169 = vmatpush1.msra.mxu0 0.0
    %2170 = vmatprep.subr.mxu0 0.0
    %2171 = vmatpush1.msra.mxu0 0.0
    %2172 = vmatprep.mubr.f32.mxu0 0.0
    %2173 = vmatmul.mubr.f32.gmra.mrb[0].mxu0 %v2103
    %v2174 = vpop.f32.mrb[0].mxu0
    %v2175 = vadd.f32 %v2100, %v2174
    %v2176 = vpop.f32.mrb[0].mxu0
    %2177 = vmatprep.mubr.f32.mxu0 0.0
    %2178 = vmatmul.mubr.f32.gmra.mrb[0].mxu0 %v2106
    %v2179 = vpop.f32.mrb[0].mxu0
    %v2180 = vadd.f32 %v2100, %v2179
    %v2181 = vpop.f32.mrb[0].mxu0
    %2182 = vdwg.mxu0
    %v2183 = vmul.f32 %v2175, 1.702
    %v2184 = vmul.f32 %v2180, 1.702
    %v2185 = vxor.u32 %v2183, 2147483648
    %v2186 = vxor.u32 %v2184, 2147483648
    %v2187 = vmul.f32 %v2185, 1.442695
    %v2188 = vpow.pop %v2187
    %v2189 = vmul.f32 %v2186, 1.442695
    %v2190 = vpow.pop %v2189
    %v2191 = vadd.f32 %v2188, 1.0
    %v2192 = vadd.f32 %v2190, 1.0
    %v2193 = vrcp.pop %v2191
    %v2194 = vmul.f32 1.0, %v2193
    %v2195 = vrcp.pop %v2192
    %v2196 = vmul.f32 1.0, %v2195
    %v2197 = vmul.f32 %v2175, %v2194
    %v2198 = vmul.f32 %v2180, %v2196
    %s2199 = scalar_lea.vmem %s20, 128
    %v2200 = vld [vmem:[%s2199] sm:$0xff]
    %v2201 = vld [vmem:[%s2199 + $0x8] sm:$0xff]
    %v2202 = vld [vmem:[%s2199 + $0x10] sm:$0xff]
    %v2203 = vld [vmem:[%s2199 + $0x18] sm:$0xff]
    %v2204 = vld [vmem:[%s2199 + $0x20] sm:$0xff]
    %v2205 = vld [vmem:[%s2199 + $0x28] sm:$0xff]
    %v2206 = vld [vmem:[%s2199 + $0x30] sm:$0xff]
    %v2207 = vld [vmem:[%s2199 + $0x38] sm:$0xff]
    %v2208 = vld [vmem:[%s2199 + $0x40] sm:$0xff]
    %v2209 = vld [vmem:[%s2199 + $0x48] sm:$0xff]
    %v2210 = vld [vmem:[%s2199 + $0x50] sm:$0xff]
    %v2211 = vld [vmem:[%s2199 + $0x58] sm:$0xff]
    %v2212 = vld [vmem:[%s2199 + $0x60] sm:$0xff]
    %v2213 = vld [vmem:[%s2199 + $0x68] sm:$0xff]
    %v2214 = vld [vmem:[%s2199 + $0x70] sm:$0xff]
    %v2215 = vld [vmem:[%s2199 + $0x78] sm:$0xff]
    %2216 = vmatprep.subr.mxu0 0.0
    %2217 = vmatpush1.msra.mxu0 %v2200
    %2218 = vmatprep.subr.mxu0 0.0
    %2219 = vmatpush1.msra.mxu0 %v2201
    %2220 = vmatprep.subr.mxu0 0.0
    %2221 = vmatpush1.msra.mxu0 %v2202
    %2222 = vmatprep.subr.mxu0 0.0
    %2223 = vmatpush1.msra.mxu0 %v2203
    %2224 = vmatprep.subr.mxu0 0.0
    %2225 = vmatpush1.msra.mxu0 %v2204
    %2226 = vmatprep.subr.mxu0 0.0
    %2227 = vmatpush1.msra.mxu0 %v2205
    %2228 = vmatprep.subr.mxu0 0.0
    %2229 = vmatpush1.msra.mxu0 %v2206
    %2230 = vmatprep.subr.mxu0 0.0
    %2231 = vmatpush1.msra.mxu0 %v2207
    %2232 = vmatprep.subr.mxu0 0.0
    %2233 = vmatpush1.msra.mxu0 %v2208
    %2234 = vmatprep.subr.mxu0 0.0
    %2235 = vmatpush1.msra.mxu0 %v2209
    %2236 = vmatprep.subr.mxu0 0.0
    %2237 = vmatpush1.msra.mxu0 %v2210
    %2238 = vmatprep.subr.mxu0 0.0
    %2239 = vmatpush1.msra.mxu0 %v2211
    %2240 = vmatprep.subr.mxu0 0.0
    %2241 = vmatpush1.msra.mxu0 %v2212
    %2242 = vmatprep.subr.mxu0 0.0
    %2243 = vmatpush1.msra.mxu0 %v2213
    %2244 = vmatprep.subr.mxu0 0.0
    %2245 = vmatpush1.msra.mxu0 %v2214
    %2246 = vmatprep.subr.mxu0 0.0
    %2247 = vmatpush1.msra.mxu0 %v2215
    %2248 = vmatprep.subr.mxu0 0.0
    %2249 = vmatpush1.msra.mxu0 0.0
    %2250 = vmatprep.subr.mxu0 0.0
    %2251 = vmatpush1.msra.mxu0 0.0
    %2252 = vmatprep.subr.mxu0 0.0
    %2253 = vmatpush1.msra.mxu0 0.0
    %2254 = vmatprep.subr.mxu0 0.0
    %2255 = vmatpush1.msra.mxu0 0.0
    %2256 = vmatprep.subr.mxu0 0.0
    %2257 = vmatpush1.msra.mxu0 0.0
    %2258 = vmatprep.subr.mxu0 0.0
    %2259 = vmatpush1.msra.mxu0 0.0
    %2260 = vmatprep.subr.mxu0 0.0
    %2261 = vmatpush1.msra.mxu0 0.0
    %2262 = vmatprep.subr.mxu0 0.0
    %2263 = vmatpush1.msra.mxu0 0.0
    %2264 = vmatprep.subr.mxu0 0.0
    %2265 = vmatpush1.msra.mxu0 0.0
    %2266 = vmatprep.subr.mxu0 0.0
    %2267 = vmatpush1.msra.mxu0 0.0
    %2268 = vmatprep.subr.mxu0 0.0
    %2269 = vmatpush1.msra.mxu0 0.0
    %2270 = vmatprep.subr.mxu0 0.0
    %2271 = vmatpush1.msra.mxu0 0.0
    %2272 = vmatprep.subr.mxu0 0.0
    %2273 = vmatpush1.msra.mxu0 0.0
    %2274 = vmatprep.subr.mxu0 0.0
    %2275 = vmatpush1.msra.mxu0 0.0
    %2276 = vmatprep.subr.mxu0 0.0
    %2277 = vmatpush1.msra.mxu0 0.0
    %2278 = vmatprep.subr.mxu0 0.0
    %2279 = vmatpush1.msra.mxu0 0.0
    %2280 = vmatprep.mubr.f32.mxu0 0.0
    %2281 = vmatmul.mubr.f32.gmra.mrb[0].mxu0 %v2197
    %v2282 = vpop.f32.mrb[0].mxu0
    %v2283 = vadd.f32 0.0, %v2282
    %v2284 = vpop.f32.mrb[0].mxu0
    %2285 = vmatprep.mubr.f32.mxu0 0.0
    %2286 = vmatmul.mubr.f32.gmra.mrb[0].mxu0 %v2198
    %v2287 = vpop.f32.mrb[0].mxu0
    %v2288 = vadd.f32 0.0, %v2287
    %v2289 = vpop.f32.mrb[0].mxu0
    %2290 = vdwg.mxu0
    %v2291 = vadd.f32 %v2037, %v2283
    %v2292 = vadd.f32 %v2038, %v2288
    %s2293 = scalar_lea.vmem %s21, 1
    %v2294 = vld [vmem:[%s2293] sm:$0x1]
    %v2296 = vlaneseq
    %v2297 = vshrl.u32 %v2296, 7
    %v2298 = vsub.s32 0, %v2297
    %v2299 = vrot.slane %v2294, %v2298
    %v2301 = vadd.f32 %v2291, %v2299
    %v2302 = vadd.f32 %v2292, %v2299
    %v2303 = vld [vmem:[%s0] sm:$0x3]
    %v2304 = vlaneseq
    %v2305 = vshrl.u32 %v2304, 7
    %v2306 = vlaneseq
    %v2307 = vand.u32 %v2306, 127
    %v2308 = vmul.u32 %v2305, 8
    %2309 = vset.pattern.permute.xlu0 0
    %2310 = vperm.xlu0 %2309, %v2303
    %v2311 = vpop.permute.xlu0 %2310
    %v2312 = vadd.s32 %v2308, %v2311
    %vm2313 = vcmp.eq.s32.totalorder %v2307, %v2312
    %v2314 = vsel %vm2313, 1, 0
    %v2315 = vcvt.s32.f32 %v2314
    %vm2316 = vcmask 130048
    %v2318 = vsel %vm2316, %v2315, 0
    %2320 = vmatprep.subr.mxu0 0.0
    %2321 = vmatpush1.msra.mxu0 %v2301
    %2322 = vmatprep.subr.mxu0 0.0
    %2323 = vmatpush1.msra.mxu0 %v2302
    %2324 = vmatprep.subr.mxu0 0.0
    %2325 = vmatpush1.msra.mxu0 0.0
    %2326 = vmatprep.subr.mxu0 0.0
    %2327 = vmatpush1.msra.mxu0 0.0
    %2328 = vmatprep.subr.mxu0 0.0
    %2329 = vmatpush1.msra.mxu0 0.0
    %2330 = vmatprep.subr.mxu0 0.0
    %2331 = vmatpush1.msra.mxu0 0.0
    %2332 = vmatprep.subr.mxu0 0.0
    %2333 = vmatpush1.msra.mxu0 0.0
    %2334 = vmatprep.subr.mxu0 0.0
    %2335 = vmatpush1.msra.mxu0 0.0
    %2336 = vmatprep.subr.mxu0 0.0
    %2337 = vmatpush1.msra.mxu0 0.0
    %2338 = vmatprep.subr.mxu0 0.0
    %2339 = vmatpush1.msra.mxu0 0.0
    %2340 = vmatprep.subr.mxu0 0.0
    %2341 = vmatpush1.msra.mxu0 0.0
    %2342 = vmatprep.subr.mxu0 0.0
    %2343 = vmatpush1.msra.mxu0 0.0
    %2344 = vmatprep.subr.mxu0 0.0
    %2345 = vmatpush1.msra.mxu0 0.0
    %2346 = vmatprep.subr.mxu0 0.0
    %2347 = vmatpush1.msra.mxu0 0.0
    %2348 = vmatprep.subr.mxu0 0.0
    %2349 = vmatpush1.msra.mxu0 0.0
    %2350 = vmatprep.subr.mxu0 0.0
    %2351 = vmatpush1.msra.mxu0 0.0
    %2352 = vmatprep.subr.mxu0 0.0
    %2353 = vmatpush1.msra.mxu0 0.0
    %2354 = vmatprep.subr.mxu0 0.0
    %2355 = vmatpush1.msra.mxu0 0.0
    %2356 = vmatprep.subr.mxu0 0.0
    %2357 = vmatpush1.msra.mxu0 0.0
    %2358 = vmatprep.subr.mxu0 0.0
    %2359 = vmatpush1.msra.mxu0 0.0
    %2360 = vmatprep.subr.mxu0 0.0
    %2361 = vmatpush1.msra.mxu0 0.0
    %2362 = vmatprep.subr.mxu0 0.0
    %2363 = vmatpush1.msra.mxu0 0.0
    %2364 = vmatprep.subr.mxu0 0.0
    %2365 = vmatpush1.msra.mxu0 0.0
    %2366 = vmatprep.subr.mxu0 0.0
    %2367 = vmatpush1.msra.mxu0 0.0
    %2368 = vmatprep.subr.mxu0 0.0
    %2369 = vmatpush1.msra.mxu0 0.0
    %2370 = vmatprep.subr.mxu0 0.0
    %2371 = vmatpush1.msra.mxu0 0.0
    %2372 = vmatprep.subr.mxu0 0.0
    %2373 = vmatpush1.msra.mxu0 0.0
    %2374 = vmatprep.subr.mxu0 0.0
    %2375 = vmatpush1.msra.mxu0 0.0
    %2376 = vmatprep.subr.mxu0 0.0
    %2377 = vmatpush1.msra.mxu0 0.0
    %2378 = vmatprep.subr.mxu0 0.0
    %2379 = vmatpush1.msra.mxu0 0.0
    %2380 = vmatprep.subr.mxu0 0.0
    %2381 = vmatpush1.msra.mxu0 0.0
    %2382 = vmatprep.subr.mxu0 0.0
    %2383 = vmatpush1.msra.mxu0 0.0
    %2384 = vmatprep.mubr.f32.mxu0 0.0
    %2385 = vmatmul.mubr.f32.gmra.mrb[0].mxu0 %v2318
    %v2386 = vpop.f32.mrb[0].mxu0
    %v2387 = vadd.f32 0.0, %v2386
    %v2388 = vpop.f32.mrb[0].mxu0
    %2389 = vdwg.mxu0
    %v2390 = vld [vmem:[%s22] sm:$0x1]
    %v2391 = vld [vmem:[%s23] sm:$0x1]
    %vm2392 = vcmask 254976
    %v2393 = vsel %vm2392, %v2387, 0.0
    %2394 = vadd.xlane.f32.xlu0 %v2393
    %v2395 = vpop.xlane.xlu0 %2394
    %v2396 = vmul.f32 %v2395, %v104
    %v2397 = vmul.f32 %v2387, %v2387
    %v2398 = vsel %vm2392, %v2397, 0.0
    %2399 = vadd.xlane.f32.xlu0 %v2398
    %v2400 = vpop.xlane.xlu0 %2399
    %v2401 = vmul.f32 %v2400, %v104
    %v2402 = vmul.f32 %v2396, %v2396
    %v2403 = vsub.f32 %v2401, %v2402
    %v2404 = vsub.f32 %v2387, %v2396
    %v2405 = vadd.f32 %v2403, 1e-05
    %v2406 = vrsqrt.pop %v2405
    %v2407 = vmul.f32 %v2404, %v2406
    %v2409 = vlaneseq
    %v2410 = vshrl.u32 %v2409, 7
    %v2411 = vsub.s32 0, %v2410
    %v2412 = vrot.slane %v2390, %v2411
    %v2414 = vmul.f32 %v2407, %v2412
    %v2416 = vlaneseq
    %v2417 = vshrl.u32 %v2416, 7
    %v2418 = vsub.s32 0, %v2417
    %v2419 = vrot.slane %v2391, %v2418
    %v2421 = vadd.f32 %v2414, %v2419
    %v2422 = vld [vmem:[%s24] sm:$0xff]
    %v2423 = vld [vmem:[%s24 + $0x8] sm:$0xff]
    %v2424 = vld [vmem:[%s24 + $0x10] sm:$0xff]
    %v2425 = vld [vmem:[%s24 + $0x18] sm:$0xff]
    %v2427 = vsel %vm97, %v2421, 0
    %2429 = vmatprep.subr.mxu0 0.0
    %2430 = vmatpush1.msra.mxu0 %v2422
    %2431 = vmatprep.subr.mxu0 0.0
    %2432 = vmatpush1.msra.mxu0 %v2423
    %2433 = vmatprep.subr.mxu0 0.0
    %2434 = vmatpush1.msra.mxu0 %v2424
    %2435 = vmatprep.subr.mxu0 0.0
    %2436 = vmatpush1.msra.mxu0 %v2425
    %2437 = vmatprep.subr.mxu0 0.0
    %2438 = vmatpush1.msra.mxu0 0.0
    %2439 = vmatprep.subr.mxu0 0.0
    %2440 = vmatpush1.msra.mxu0 0.0
    %2441 = vmatprep.subr.mxu0 0.0
    %2442 = vmatpush1.msra.mxu0 0.0
    %2443 = vmatprep.subr.mxu0 0.0
    %2444 = vmatpush1.msra.mxu0 0.0
    %2445 = vmatprep.subr.mxu0 0.0
    %2446 = vmatpush1.msra.mxu0 0.0
    %2447 = vmatprep.subr.mxu0 0.0
    %2448 = vmatpush1.msra.mxu0 0.0
    %2449 = vmatprep.subr.mxu0 0.0
    %2450 = vmatpush1.msra.mxu0 0.0
    %2451 = vmatprep.subr.mxu0 0.0
    %2452 = vmatpush1.msra.mxu0 0.0
    %2453 = vmatprep.subr.mxu0 0.0
    %2454 = vmatpush1.msra.mxu0 0.0
    %2455 = vmatprep.subr.mxu0 0.0
    %2456 = vmatpush1.msra.mxu0 0.0
    %2457 = vmatprep.subr.mxu0 0.0
    %2458 = vmatpush1.msra.mxu0 0.0
    %2459 = vmatprep.subr.mxu0 0.0
    %2460 = vmatpush1.msra.mxu0 0.0
    %2461 = vmatprep.subr.mxu0 0.0
    %2462 = vmatpush1.msra.mxu0 0.0
    %2463 = vmatprep.subr.mxu0 0.0
    %2464 = vmatpush1.msra.mxu0 0.0
    %2465 = vmatprep.subr.mxu0 0.0
    %2466 = vmatpush1.msra.mxu0 0.0
    %2467 = vmatprep.subr.mxu0 0.0
    %2468 = vmatpush1.msra.mxu0 0.0
    %2469 = vmatprep.subr.mxu0 0.0
    %2470 = vmatpush1.msra.mxu0 0.0
    %2471 = vmatprep.subr.mxu0 0.0
    %2472 = vmatpush1.msra.mxu0 0.0
    %2473 = vmatprep.subr.mxu0 0.0
    %2474 = vmatpush1.msra.mxu0 0.0
    %2475 = vmatprep.subr.mxu0 0.0
    %2476 = vmatpush1.msra.mxu0 0.0
    %2477 = vmatprep.subr.mxu0 0.0
    %2478 = vmatpush1.msra.mxu0 0.0
    %2479 = vmatprep.subr.mxu0 0.0
    %2480 = vmatpush1.msra.mxu0 0.0
    %2481 = vmatprep.subr.mxu0 0.0
    %2482 = vmatpush1.msra.mxu0 0.0
    %2483 = vmatprep.subr.mxu0 0.0
    %2484 = vmatpush1.msra.mxu0 0.0
    %2485 = vmatprep.subr.mxu0 0.0
    %2486 = vmatpush1.msra.mxu0 0.0
    %2487 = vmatprep.subr.mxu0 0.0
    %2488 = vmatpush1.msra.mxu0 0.0
    %2489 = vmatprep.subr.mxu0 0.0
    %2490 = vmatpush1.msra.mxu0 0.0
    %2491 = vmatprep.subr.mxu0 0.0
    %2492 = vmatpush1.msra.mxu0 0.0
    %2493 = vmatprep.mubr.f32.mxu0 0.0
    %2494 = vmatmul.mubr.f32.gmra.mrb[0].mxu0 %v2427
    %v2495 = vpop.f32.mrb[0].mxu0
    %v2496 = vadd.f32 0.0, %v2495
    %v2497 = vpop.f32.mrb[0].mxu0
    %2498 = vdwg.mxu0
    %vm2499 = vcmask 123904
    %2500 = vst.msk [vmem:[#allocation2] sm:$0x3] %vm2499, %v2496
    // Predicated region
    $region102: #{text_encoder_forward.1} parent=1 // pred_check
      _
    $region103: #{text_encoder_forward.1} parent=1 // pred_check_branch
      %2502 = sbr.rel (0) target = $region105
    $region104: #{text_encoder_forward.1} parent=1 // pred_region
      %s2504 = ssub.s32 32, 32
      %2505 = vsyncadd [#allocation3], %s2504
      %s2507 = sshll.u32 [#allocation2], 4
      %s2508 = int_to_ptr.vmem [resolvable:$true] %s2507
      %2510 = dma.vmem_to_hbm [thread:$0]  %s2508, 32, %s25, [#allocation3]
    $region105: #{text_encoder_forward.1} parent=1 // pred_fallthru
      _
    // Predicated region
    $region106: #{text_encoder_forward.1} parent=1 // pred_check
      _
    $region107: #{text_encoder_forward.1} parent=1 // pred_check_branch
      %2512 = sbr.rel (0) target = $region109
    $region108: #{text_encoder_forward.1} parent=1 // pred_region
      %2513 = dma.done [#allocation3], 32
    $region109: #{text_encoder_forward.1} parent=1 // pred_fallthru
      _
    %2514 = vsyncpa [#allocation3], 1

</llo_original>
